<compile_context>
chip_gen: v5e
topology: v5e:2x2
jax: 0.10.0
libtpu: 0.0.40
codegen_flags: <defaults>
</compile_context>

<pallas_src>
import functools

import jax
import jax.numpy as jnp
from jax.experimental import pallas as pl
from jax.experimental.pallas import tpu as pltpu

EPS = 1e-5  # PyTorch BatchNorm2d default eps


# --------------------------------------------------------------------------
# small helpers
# --------------------------------------------------------------------------
def _round_up(x, m):
    return (x + m - 1) // m * m


def _tile_rows(H, row_bytes, budget=4 << 20):
    """Largest divisor of H that is a multiple of 8 and fits `budget` bytes.

    Keeps (th, W, C) feature-map blocks at a few MB so double-buffered blocks
    stay well under the scoped-VMEM limit on every TPU generation, and forces
    >= 2 tiles for H >= 16 so the DMA pipeline has something to overlap.
    """
    limit = min(max(1, budget // max(row_bytes, 1)), H)
    if H >= 16:
        limit = min(limit, H // 2)
    cands = [d for d in range(8, limit + 1, 8) if H % d == 0]
    return max(cands) if cands else H


def _sigmoid(x):
    # exp + reciprocal both go to the EUP slot (cheap next to VPU work)
    return pl.reciprocal(1.0 + jnp.exp(-x), approx=True)


def _hswish(y):
    return y * jnp.clip(y + 3.0, 0.0, 6.0) * (1.0 / 6.0)


# --------------------------------------------------------------------------
# Pallas kernels
# --------------------------------------------------------------------------
def _bn_relu_kernel(x_ref, scale_ref, shift_ref, o_ref):
    # elementwise BN (folded into scale/shift) + ReLU, one (TM, C) row tile
    o_ref[...] = jnp.maximum(x_ref[...] * scale_ref[...] + shift_ref[...], 0.0)


def _matmul_scale_shift_kernel(x_ref, w_ref, scale_ref, shift_ref, o_ref, *, relu):
    # conv-as-matmul: (im2col row tile, bf16) @ (weights, bf16) -> f32,
    # then per-output-channel scale/shift (conv bias and/or folded BN), ReLU.
    y = jnp.dot(x_ref[...], w_ref[...], preferred_element_type=jnp.float32)
    y = y * scale_ref[...] + shift_ref[...]
    if relu:
        y = jnp.maximum(y, 0.0)
    o_ref[...] = y


# ---- Coordinate Attention: pool -> tiny FC -> apply ----------------------
def _ca_pool_kernel(x_ref, xh_ref, xw_ref, *, inv_w, inv_h):
    # x_ref: (TH, W, C) row tile of one batch element.
    h = pl.program_id(1)
    x = x_ref[...]
    # mean over W for this tile's rows (written per tile)
    xh_ref[...] = jnp.sum(x, axis=1) * inv_w            # (TH, C)

    # accumulate the over-H sum (resident accumulator across h tiles)
    @pl.when(h == 0)
    def _():
        xw_ref[...] = jnp.zeros_like(xw_ref)

    xw_ref[...] += jnp.sum(x, axis=0)                    # (W, C)

    @pl.when(h == pl.num_programs(1) - 1)
    def _():
        xw_ref[...] = xw_ref[...] * inv_h


def _ca_fc_kernel(xh_ref, xw_ref, w1_ref, s1_ref, sh1_ref,
                  w2_ref, b2_ref, w3_ref, b3_ref, ah_ref, aw_ref):
    # tiny per-batch FCs: conv1(+BN folded) + h_swish, then conv2/conv3 + sigmoid
    w1 = w1_ref[...]
    s1 = s1_ref[...]
    sh1 = sh1_ref[...]

    def mid(v):
        y = jnp.dot(v, w1, preferred_element_type=jnp.float32) * s1 + sh1
        return _hswish(y)

    yh = mid(xh_ref[...])                                # (H, mip)
    yw = mid(xw_ref[...])                                # (W, mip)
    ah_ref[...] = _sigmoid(
        jnp.dot(yh, w2_ref[...], preferred_element_type=jnp.float32) + b2_ref[...])
    aw_ref[...] = _sigmoid(
        jnp.dot(yw, w3_ref[...], preferred_element_type=jnp.float32) + b3_ref[...])


def _ca_apply_kernel(x_ref, ah_ref, aw_ref, o_ref):
    a_h = ah_ref[...]                                    # (TH, C)
    a_w = aw_ref[...]                                    # (W, C)
    o_ref[...] = x_ref[...] * a_w[None, :, :] * a_h[:, None, :]


# ---- Squeeze-Excitation on (x + s): pool -> tiny FC -> apply --------------
def _se_pool_kernel(x_ref, s_ref, p_ref, *, inv):
    h = pl.program_id(1)

    @pl.when(h == 0)
    def _():
        p_ref[...] = jnp.zeros_like(p_ref)

    t = x_ref[...] + s_ref[...]                          # (TH, W, C)
    p_ref[...] += jnp.sum(t, axis=(0, 1))[None, :]       # (1, C)

    @pl.when(h == pl.num_programs(1) - 1)
    def _():
        p_ref[...] = p_ref[...] * inv


def _se_fc_kernel(p_ref, w1_ref, w2_ref, a_ref):
    p = p_ref[...][:, 0, :]                              # (N, C)
    hid = jnp.maximum(
        jnp.dot(p, w1_ref[...], preferred_element_type=jnp.float32), 0.0)
    att = _sigmoid(jnp.dot(hid, w2_ref[...], preferred_element_type=jnp.float32))
    a_ref[...] = att[:, None, :]                         # (N, 1, C)


def _se_apply_kernel(x_ref, s_ref, a_ref, o_ref):
    o_ref[...] = (x_ref[...] + s_ref[...]) * a_ref[...]  # (TH,W,C) * (1,C)


# --------------------------------------------------------------------------
# Pallas wrappers
# --------------------------------------------------------------------------
def bn_relu(x2d, scale, shift, *, tm=256):
    M, C = x2d.shape
    tm = min(tm, _round_up(M, 8))
    Mp = _round_up(M, tm)
    if Mp != M:
        x2d = jnp.pad(x2d, ((0, Mp - M), (0, 0)))
    out = pl.pallas_call(
        _bn_relu_kernel,
        out_shape=jax.ShapeDtypeStruct((Mp, C), jnp.float32),
        grid=(Mp // tm,),
        in_specs=[pl.BlockSpec((tm, C), lambda i: (i, 0)),
                  pl.BlockSpec((1, C), lambda i: (0, 0)),
                  pl.BlockSpec((1, C), lambda i: (0, 0))],
        out_specs=pl.BlockSpec((tm, C), lambda i: (i, 0)),
        compiler_params=pltpu.CompilerParams(dimension_semantics=("parallel",)),
    )(x2d, scale, shift)
    return out[:M]


def matmul_scale_shift(x2d, w, scale, shift, *, relu, tm=256):
    """(M,K) @ (K,Cout) with per-channel scale/shift(+ReLU), tiled over M."""
    M, K = x2d.shape
    Cout = w.shape[1]
    tm = min(tm, _round_up(M, 16))
    Mp = _round_up(M, tm)
    if Mp != M:
        x2d = jnp.pad(x2d, ((0, Mp - M), (0, 0)))
    x_bf = x2d.astype(jnp.bfloat16)      # halves HBM traffic + feeds bf16 MXU
    w_bf = w.astype(jnp.bfloat16)
    out = pl.pallas_call(
        functools.partial(_matmul_scale_shift_kernel, relu=relu),
        out_shape=jax.ShapeDtypeStruct((Mp, Cout), jnp.float32),
        grid=(Mp // tm,),
        in_specs=[pl.BlockSpec((tm, K), lambda i: (i, 0)),
                  pl.BlockSpec((K, Cout), lambda i: (0, 0)),
                  pl.BlockSpec((1, Cout), lambda i: (0, 0)),
                  pl.BlockSpec((1, Cout), lambda i: (0, 0))],
        out_specs=pl.BlockSpec((tm, Cout), lambda i: (i, 0)),
        compiler_params=pltpu.CompilerParams(
            dimension_semantics=("parallel",),
            vmem_limit_bytes=48 * 1024 * 1024),
    )(x_bf, w_bf, scale, shift)
    return out[:M]


def ca_block(x, p):
    """Coordinate-Attention block: tiled pool -> per-batch FC -> tiled apply."""
    N, H, W, C = x.shape
    mip = p['w1'].shape[1]
    th = _tile_rows(H, W * C * 4)
    nh = H // th

    # pass 1: pooled means (mean over W per row; mean over H per column)
    xh, xw = pl.pallas_call(
        functools.partial(_ca_pool_kernel, inv_w=1.0 / W, inv_h=1.0 / H),
        out_shape=(jax.ShapeDtypeStruct((N, H, C), jnp.float32),
                   jax.ShapeDtypeStruct((N, W, C), jnp.float32)),
        grid=(N, nh),
        in_specs=[pl.BlockSpec((pl.Squeezed(), th, W, C), lambda n, h: (n, h, 0, 0))],
        out_specs=[pl.BlockSpec((pl.Squeezed(), th, C), lambda n, h: (n, h, 0)),
                   pl.BlockSpec((pl.Squeezed(), W, C), lambda n, h: (n, 0, 0))],
        compiler_params=pltpu.CompilerParams(
            dimension_semantics=("parallel", "arbitrary")),
    )(x)

    # pass 2: tiny FCs -> attention vectors a_h (per row), a_w (per column)
    ah, aw = pl.pallas_call(
        _ca_fc_kernel,
        out_shape=(jax.ShapeDtypeStruct((N, H, C), jnp.float32),
                   jax.ShapeDtypeStruct((N, W, C), jnp.float32)),
        grid=(N,),
        in_specs=[pl.BlockSpec((pl.Squeezed(), H, C), lambda n: (n, 0, 0)),
                  pl.BlockSpec((pl.Squeezed(), W, C), lambda n: (n, 0, 0)),
                  pl.BlockSpec((C, mip), lambda n: (0, 0)),
                  pl.BlockSpec((1, mip), lambda n: (0, 0)),
                  pl.BlockSpec((1, mip), lambda n: (0, 0)),
                  pl.BlockSpec((mip, C), lambda n: (0, 0)),
                  pl.BlockSpec((1, C), lambda n: (0, 0)),
                  pl.BlockSpec((mip, C), lambda n: (0, 0)),
                  pl.BlockSpec((1, C), lambda n: (0, 0))],
        out_specs=[pl.BlockSpec((pl.Squeezed(), H, C), lambda n: (n, 0, 0)),
                   pl.BlockSpec((pl.Squeezed(), W, C), lambda n: (n, 0, 0))],
        compiler_params=pltpu.CompilerParams(dimension_semantics=("parallel",)),
    )(xh, xw, p['w1'], p['s1'], p['sh1'], p['w2'], p['b2'], p['w3'], p['b3'])

    # pass 3: tiled apply  out = x * a_w * a_h
    return pl.pallas_call(
        _ca_apply_kernel,
        out_shape=jax.ShapeDtypeStruct((N, H, W, C), jnp.float32),
        grid=(N, nh),
        in_specs=[pl.BlockSpec((pl.Squeezed(), th, W, C), lambda n, h: (n, h, 0, 0)),
                  pl.BlockSpec((pl.Squeezed(), th, C), lambda n, h: (n, h, 0)),
                  pl.BlockSpec((pl.Squeezed(), W, C), lambda n, h: (n, 0, 0))],
        out_specs=pl.BlockSpec((pl.Squeezed(), th, W, C), lambda n, h: (n, h, 0, 0)),
        compiler_params=pltpu.CompilerParams(
            dimension_semantics=("parallel", "parallel")),
    )(x, ah, aw)


def se_block_residual(x, s, w1, w2):
    """out = (x+s) * SE_attention(x+s), tiled pool -> tiny FC -> tiled apply."""
    N, H, W, C = x.shape
    Ch = w1.shape[1]
    th = _tile_rows(H, W * C * 4)
    nh = H // th

    pooled = pl.pallas_call(
        functools.partial(_se_pool_kernel, inv=1.0 / (H * W)),
        out_shape=jax.ShapeDtypeStruct((N, 1, C), jnp.float32),
        grid=(N, nh),
        in_specs=[pl.BlockSpec((pl.Squeezed(), th, W, C), lambda n, h: (n, h, 0, 0)),
                  pl.BlockSpec((pl.Squeezed(), th, W, C), lambda n, h: (n, h, 0, 0))],
        out_specs=pl.BlockSpec((pl.Squeezed(), 1, C), lambda n, h: (n, 0, 0)),
        compiler_params=pltpu.CompilerParams(
            dimension_semantics=("parallel", "arbitrary")),
    )(x, s)

    attn = pl.pallas_call(
        _se_fc_kernel,
        out_shape=jax.ShapeDtypeStruct((N, 1, C), jnp.float32),
        grid=(1,),
        in_specs=[pl.BlockSpec((N, 1, C), lambda i: (0, 0, 0)),
                  pl.BlockSpec((C, Ch), lambda i: (0, 0)),
                  pl.BlockSpec((Ch, C), lambda i: (0, 0))],
        out_specs=pl.BlockSpec((N, 1, C), lambda i: (0, 0, 0)),
    )(pooled, w1, w2)

    return pl.pallas_call(
        _se_apply_kernel,
        out_shape=jax.ShapeDtypeStruct((N, H, W, C), jnp.float32),
        grid=(N, nh),
        in_specs=[pl.BlockSpec((pl.Squeezed(), th, W, C), lambda n, h: (n, h, 0, 0)),
                  pl.BlockSpec((pl.Squeezed(), th, W, C), lambda n, h: (n, h, 0, 0)),
                  pl.BlockSpec((pl.Squeezed(), 1, C), lambda n, h: (n, 0, 0))],
        out_specs=pl.BlockSpec((pl.Squeezed(), th, W, C), lambda n, h: (n, h, 0, 0)),
        compiler_params=pltpu.CompilerParams(
            dimension_semantics=("parallel", "parallel")),
    )(x, s, attn)


# --------------------------------------------------------------------------
# Plain-JAX glue (im2col, BN folding, parameter init)
# --------------------------------------------------------------------------
def im2col(x, k, stride, pad):
    """x: (N, H, W, C) -> (N*Ho*Wo, k*k*C), patch order (dy, dx, c)."""
    N, H, W, C = x.shape
    if pad:
        x = jnp.pad(x, ((0, 0), (pad, pad), (pad, pad), (0, 0)))
    Ho = (H + 2 * pad - k) // stride + 1
    Wo = (W + 2 * pad - k) // stride + 1
    cols = []
    for dy in range(k):
        for dx in range(k):
            cols.append(x[:, dy:dy + stride * (Ho - 1) + 1:stride,
                          dx:dx + stride * (Wo - 1) + 1:stride, :])
    cols = jnp.concatenate(cols, axis=-1)
    return cols.reshape(N * Ho * Wo, k * k * C), Ho, Wo


def bn_fold(bn):
    scale = bn['gamma'] / jnp.sqrt(bn['var'] + EPS)
    shift = bn['beta'] - bn['mean'] * scale
    return scale[None, :], shift[None, :]


def conv_bn_fold(bias, bn):
    scale = bn['gamma'] / jnp.sqrt(bn['var'] + EPS)
    shift = (bias - bn['mean']) * scale + bn['beta']
    return scale[None, :], shift[None, :]


def _nrm(key, shape, scale=0.1):
    return scale * jax.random.normal(key, shape, jnp.float32)


def _bn_init(key, c):
    k = jax.random.split(key, 4)
    return dict(gamma=1.0 + _nrm(k[0], (c,)), beta=_nrm(k[1], (c,)),
                mean=_nrm(k[2], (c,)), var=1.0 + jnp.abs(_nrm(k[3], (c,))))


def _ca_init(key, c, groups=32):
    mip = max(8, c // groups)
    k = jax.random.split(key, 11)
    w1 = _nrm(k[0], (c, mip))
    b1 = _nrm(k[1], (mip,))
    gamma = 1.0 + _nrm(k[2], (mip,))
    beta = _nrm(k[3], (mip,))
    mean = _nrm(k[4], (mip,))
    var = 1.0 + jnp.abs(_nrm(k[5], (mip,)))
    scale = gamma / jnp.sqrt(var + EPS)
    return dict(
        w1=w1,
        s1=scale[None, :],
        sh1=((b1 - mean) * scale + beta)[None, :],
        w2=_nrm(k[6], (mip, c)), b2=_nrm(k[7], (c,))[None, :],
        w3=_nrm(k[8], (mip, c)), b3=_nrm(k[9], (c,))[None, :],
    )


def init_params(key, in_c, out_c, r=8):
    ks = jax.random.split(key, 12)
    hidden = max(1, out_c // r)
    return dict(
        c1_bn0=_bn_init(ks[0], in_c),
        c1_conv1_w=_nrm(ks[1], (3, 3, in_c, out_c)),   # (kh, kw, Cin, Cout)
        c1_conv1_b=_nrm(ks[2], (out_c,)),
        c1_bn1=_bn_init(ks[3], out_c),
        c1_conv2_w=_nrm(ks[4], (3, 3, out_c, out_c)),
        c1_conv2_b=_nrm(ks[5], (out_c,)),
        ca1=_ca_init(ks[6], out_c),
        c2_conv_w=_nrm(ks[7], (in_c, out_c)),          # 1x1 conv
        c2_conv_b=_nrm(ks[8], (out_c,)),
        c2_bn=_bn_init(ks[9], out_c),
        ca2=_ca_init(ks[10], out_c),
        se_w1=_nrm(ks[11], (out_c, hidden)),
        se_w2=_nrm(jax.random.fold_in(ks[11], 1), (hidden, out_c)),
    )


# --------------------------------------------------------------------------
# Forward pass (mirrors ResNet_Block.forward)
# --------------------------------------------------------------------------
def resnet_block_forward(x_nchw, params, stride=1):
    x = jnp.transpose(x_nchw, (0, 2, 3, 1)).astype(jnp.float32)  # NCHW -> NHWC
    N, H, W, Cin = x.shape
    Cout = params['c1_conv1_w'].shape[-1]

    # ---------------- branch c1: BN -> ReLU -> Conv3x3 -> BN -> ReLU -> Conv3x3 -> CA
    s0, sh0 = bn_fold(params['c1_bn0'])
    x0 = bn_relu(x.reshape(-1, Cin), s0, sh0).reshape(N, H, W, Cin)

    cols, Ho, Wo = im2col(x0, 3, stride, 1)
    s1, sh1 = conv_bn_fold(params['c1_conv1_b'], params['c1_bn1'])
    y = matmul_scale_shift(cols, params['c1_conv1_w'].reshape(-1, Cout),
                           s1, sh1, relu=True)
    y = y.reshape(N, Ho, Wo, Cout)

    cols2, _, _ = im2col(y, 3, 1, 1)
    y = matmul_scale_shift(cols2, params['c1_conv2_w'].reshape(-1, Cout),
                           jnp.ones((1, Cout), jnp.float32),
                           params['c1_conv2_b'][None, :], relu=False)
    y = y.reshape(N, Ho, Wo, Cout)
    y = ca_block(y, params['ca1'])

    # ---------------- branch c2: Conv1x1(stride) -> BN -> CA
    xs = x[:, ::stride, ::stride, :]
    s2, sh2 = conv_bn_fold(params['c2_conv_b'], params['c2_bn'])
    s = matmul_scale_shift(xs.reshape(-1, Cin), params['c2_conv_w'],
                           s2, sh2, relu=False)
    s = s.reshape(N, Ho, Wo, Cout)
    s = ca_block(s, params['ca2'])

    # ---------------- attn: SE(x + s), output = (x+s) * attn
    out = se_block_residual(y, s, params['se_w1'], params['se_w2'])
    return jnp.transpose(out, (0, 3, 1, 2))  # NHWC -> NCHW


# --------------------------------------------------------------------------
if __name__ == "__main__":
    key = jax.random.PRNGKey(0)
    in_c, out_c, stride = 4, 8, 1
    N, H, W = 2, 16, 16

    kx, kp = jax.random.split(key)
    x = jax.random.normal(kx, (N, in_c, H, W), jnp.float32)
    params = init_params(kp, in_c, out_c)

    fwd = jax.jit(functools.partial(resnet_block_forward, stride=stride))
    y = fwd(x, params)
    jax.block_until_ready(y)
    assert y.shape == (N, out_c, H // stride, W // stride), y.shape
    assert jnp.all(jnp.isfinite(y))
    print("KERNEL_OK")
</pallas_src>

<mosaic_0001>
module attributes {stable_mosaic.version = 11 : i64} {
  func.func @_ca_pool_kernel(%arg0: i32, %arg1: i32, %arg2: memref<1x8x16x8xf32, #tpu.memory_space<vmem>>, %arg3: memref<1x8x8xf32, #tpu.memory_space<vmem>>, %arg4: memref<1x16x8xf32, #tpu.memory_space<vmem>>) attributes {dimension_semantics = [#tpu.dimension_semantics<parallel>, #tpu.dimension_semantics<arbitrary>], iteration_bounds = array<i64: 2, 2>, scalar_prefetch = 0 : i64, scratch_operands = 0 : i64, tpu.core_type = #tpu.core_type<tc>, window_params = [{transform_indices = @transform_0, window_bounds = array<i64: 1, 8, 16, 8>}, {transform_indices = @transform_1, window_bounds = array<i64: 1, 8, 8>}, {transform_indices = @transform_2, window_bounds = array<i64: 1, 16, 8>}]} {
    %c0 = arith.constant 0 : index
    %c0_0 = arith.constant 0 : index
    %c0_1 = arith.constant 0 : index
    %c0_2 = arith.constant 0 : index
    %0 = vector.load %arg2[%c0, %c0_0, %c0_1, %c0_2] : memref<1x8x16x8xf32, #tpu.memory_space<vmem>>, vector<1x8x16x8xf32>
    %1 = vector.shape_cast %0 : vector<1x8x16x8xf32> to vector<8x16x8xf32>
    %cst = arith.constant dense<0.000000e+00> : vector<8x8xf32>
    %2 = vector.multi_reduction <add>, %1, %cst [1] : vector<8x16x8xf32> to vector<8x8xf32>
    %cst_3 = arith.constant 6.250000e-02 : f32
    %3 = vector.broadcast %cst_3 : f32 to vector<8x8xf32>
    %4 = arith.mulf %2, %3 : vector<8x8xf32>
    %c0_4 = arith.constant 0 : index
    %c0_5 = arith.constant 0 : index
    %c0_6 = arith.constant 0 : index
    %5 = vector.load %arg3[%c0_4, %c0_5, %c0_6] : memref<1x8x8xf32, #tpu.memory_space<vmem>>, vector<1x8x8xf32>
    %6 = vector.shape_cast %5 : vector<1x8x8xf32> to vector<8x8xf32>
    %7 = vector.shape_cast %4 : vector<8x8xf32> to vector<1x8x8xf32>
    tpu.vector_store %arg3[%c0_4, %c0_5, %c0_6], %7 {strides = array<i32>} : memref<1x8x8xf32, #tpu.memory_space<vmem>>, vector<1x8x8xf32>,
    %c0_i32 = arith.constant 0 : i32
    %8 = arith.cmpi eq, %arg1, %c0_i32 : i32
    %9 = arith.extui %8 : i1 to i32
    %c0_i32_7 = arith.constant 0 : i32
    %10 = arith.cmpi ne, %9, %c0_i32_7 : i32
    scf.if %10 {
      %cst_16 = arith.constant 0.000000e+00 : f32
      %21 = vector.broadcast %cst_16 : f32 to vector<16x8xf32>
      %c0_17 = arith.constant 0 : index
      %c0_18 = arith.constant 0 : index
      %c0_19 = arith.constant 0 : index
      %22 = vector.load %arg4[%c0_17, %c0_18, %c0_19] : memref<1x16x8xf32, #tpu.memory_space<vmem>>, vector<1x16x8xf32>
      %23 = vector.shape_cast %22 : vector<1x16x8xf32> to vector<16x8xf32>
      %24 = vector.shape_cast %21 : vector<16x8xf32> to vector<1x16x8xf32>
      tpu.vector_store %arg4[%c0_17, %c0_18, %c0_19], %24 {strides = array<i32>} : memref<1x16x8xf32, #tpu.memory_space<vmem>>, vector<1x16x8xf32>,
    } else {
    }
    %c0_8 = arith.constant 0 : index
    %c0_9 = arith.constant 0 : index
    %c0_10 = arith.constant 0 : index
    %11 = vector.load %arg4[%c0_8, %c0_9, %c0_10] : memref<1x16x8xf32, #tpu.memory_space<vmem>>, vector<1x16x8xf32>
    %12 = vector.shape_cast %11 : vector<1x16x8xf32> to vector<16x8xf32>
    %cst_11 = arith.constant dense<0.000000e+00> : vector<16x8xf32>
    %13 = vector.multi_reduction <add>, %1, %cst_11 [0] : vector<8x16x8xf32> to vector<16x8xf32>
    %14 = arith.addf %12, %13 : vector<16x8xf32>
    %c0_12 = arith.constant 0 : index
    %c0_13 = arith.constant 0 : index
    %c0_14 = arith.constant 0 : index
    %15 = vector.load %arg4[%c0_12, %c0_13, %c0_14] : memref<1x16x8xf32, #tpu.memory_space<vmem>>, vector<1x16x8xf32>
    %16 = vector.shape_cast %15 : vector<1x16x8xf32> to vector<16x8xf32>
    %17 = vector.shape_cast %14 : vector<16x8xf32> to vector<1x16x8xf32>
    tpu.vector_store %arg4[%c0_12, %c0_13, %c0_14], %17 {strides = array<i32>} : memref<1x16x8xf32, #tpu.memory_space<vmem>>, vector<1x16x8xf32>,
    %c1_i32 = arith.constant 1 : i32
    %18 = arith.cmpi eq, %arg1, %c1_i32 : i32
    %19 = arith.extui %18 : i1 to i32
    %c0_i32_15 = arith.constant 0 : i32
    %20 = arith.cmpi ne, %19, %c0_i32_15 : i32
    scf.if %20 {
      %c0_16 = arith.constant 0 : index
      %c0_17 = arith.constant 0 : index
      %c0_18 = arith.constant 0 : index
      %21 = vector.load %arg4[%c0_16, %c0_17, %c0_18] : memref<1x16x8xf32, #tpu.memory_space<vmem>>, vector<1x16x8xf32>
      %22 = vector.shape_cast %21 : vector<1x16x8xf32> to vector<16x8xf32>
      %cst_19 = arith.constant 6.250000e-02 : f32
      %23 = vector.broadcast %cst_19 : f32 to vector<16x8xf32>
      %24 = arith.mulf %22, %23 : vector<16x8xf32>
      %c0_20 = arith.constant 0 : index
      %c0_21 = arith.constant 0 : index
      %c0_22 = arith.constant 0 : index
      %25 = vector.load %arg4[%c0_20, %c0_21, %c0_22] : memref<1x16x8xf32, #tpu.memory_space<vmem>>, vector<1x16x8xf32>
      %26 = vector.shape_cast %25 : vector<1x16x8xf32> to vector<16x8xf32>
      %27 = vector.shape_cast %24 : vector<16x8xf32> to vector<1x16x8xf32>
      tpu.vector_store %arg4[%c0_20, %c0_21, %c0_22], %27 {strides = array<i32>} : memref<1x16x8xf32, #tpu.memory_space<vmem>>, vector<1x16x8xf32>,
    } else {
    }
    return
  }
  func.func @transform_0(%arg0: i32, %arg1: i32) -> (i32, i32, i32, i32) {
    %c0_i32 = arith.constant 0 : i32
    %c0_i32_0 = arith.constant 0 : i32
    %c0_i32_1 = arith.constant 0 : i32
    return %arg0, %arg1, %c0_i32, %c0_i32_0 : i32, i32, i32, i32
  }
  func.func @transform_1(%arg0: i32, %arg1: i32) -> (i32, i32, i32) {
    %c0_i32 = arith.constant 0 : i32
    %c0_i32_0 = arith.constant 0 : i32
    return %arg0, %arg1, %c0_i32 : i32, i32, i32
  }
  func.func @transform_2(%arg0: i32, %arg1: i32) -> (i32, i32, i32) {
    %c0_i32 = arith.constant 0 : i32
    %c0_i32_0 = arith.constant 0 : i32
    %c0_i32_1 = arith.constant 0 : i32
    return %arg0, %c0_i32, %c0_i32_0 : i32, i32, i32
  }
}

module attributes {stable_mosaic.version = 11 : i64} {
  func.func @_bn_relu_kernel(%arg0: i32, %arg1: memref<256x4xf32, #tpu.memory_space<vmem>>, %arg2: memref<1x4xf32, #tpu.memory_space<vmem>>, %arg3: memref<1x4xf32, #tpu.memory_space<vmem>>, %arg4: memref<256x4xf32, #tpu.memory_space<vmem>>) attributes {dimension_semantics = [#tpu.dimension_semantics<parallel>], iteration_bounds = array<i64: 2>, scalar_prefetch = 0 : i64, scratch_operands = 0 : i64, tpu.core_type = #tpu.core_type<tc>, window_params = [{transform_indices = @transform_0, window_bounds = array<i64: 256, 4>}, {pipeline_mode = #tpu.pipeline_mode<synchronous>, transform_indices = @transform_1, window_bounds = array<i64: 1, 4>}, {pipeline_mode = #tpu.pipeline_mode<synchronous>, transform_indices = @transform_2, window_bounds = array<i64: 1, 4>}, {transform_indices = @transform_3, window_bounds = array<i64: 256, 4>}]} {
    %c0 = arith.constant 0 : index
    %c0_0 = arith.constant 0 : index
    %0 = vector.load %arg1[%c0, %c0_0] : memref<256x4xf32, #tpu.memory_space<vmem>>, vector<256x4xf32>
    %c0_1 = arith.constant 0 : index
    %c0_2 = arith.constant 0 : index
    %1 = vector.load %arg2[%c0_1, %c0_2] : memref<1x4xf32, #tpu.memory_space<vmem>>, vector<1x4xf32>
    %2 = vector.broadcast %1 : vector<1x4xf32> to vector<256x4xf32>
    %3 = arith.mulf %0, %2 : vector<256x4xf32>
    %c0_3 = arith.constant 0 : index
    %c0_4 = arith.constant 0 : index
    %4 = vector.load %arg3[%c0_3, %c0_4] : memref<1x4xf32, #tpu.memory_space<vmem>>, vector<1x4xf32>
    %5 = vector.broadcast %4 : vector<1x4xf32> to vector<256x4xf32>
    %6 = arith.addf %3, %5 : vector<256x4xf32>
    %cst = arith.constant 0.000000e+00 : f32
    %7 = vector.broadcast %cst : f32 to vector<256x4xf32>
    %8 = arith.maximumf %6, %7 : vector<256x4xf32>
    %c0_5 = arith.constant 0 : index
    %c0_6 = arith.constant 0 : index
    %9 = vector.load %arg4[%c0_5, %c0_6] : memref<256x4xf32, #tpu.memory_space<vmem>>, vector<256x4xf32>
    tpu.vector_store %arg4[%c0_5, %c0_6], %8 {strides = array<i32>} : memref<256x4xf32, #tpu.memory_space<vmem>>, vector<256x4xf32>,
    return
  }
  func.func @transform_0(%arg0: i32) -> (i32, i32) {
    %c0_i32 = arith.constant 0 : i32
    %c0_i32_0 = arith.constant 0 : i32
    return %arg0, %c0_i32 : i32, i32
  }
  func.func @transform_1(%arg0: i32) -> (i32, i32) {
    %c0_i32 = arith.constant 0 : i32
    %c0_i32_0 = arith.constant 0 : i32
    %c0_i32_1 = arith.constant 0 : i32
    return %c0_i32, %c0_i32_0 : i32, i32
  }
  func.func @transform_2(%arg0: i32) -> (i32, i32) {
    %c0_i32 = arith.constant 0 : i32
    %c0_i32_0 = arith.constant 0 : i32
    %c0_i32_1 = arith.constant 0 : i32
    return %c0_i32, %c0_i32_0 : i32, i32
  }
  func.func @transform_3(%arg0: i32) -> (i32, i32) {
    %c0_i32 = arith.constant 0 : i32
    %c0_i32_0 = arith.constant 0 : i32
    return %arg0, %c0_i32 : i32, i32
  }
}

module attributes {stable_mosaic.version = 11 : i64} {
  func.func @_matmul_scale_shift_kernel(%arg0: i32, %arg1: memref<256x4xbf16, #tpu.memory_space<vmem>>, %arg2: memref<4x8xbf16, #tpu.memory_space<vmem>>, %arg3: memref<1x8xf32, #tpu.memory_space<vmem>>, %arg4: memref<1x8xf32, #tpu.memory_space<vmem>>, %arg5: memref<256x8xf32, #tpu.memory_space<vmem>>) attributes {dimension_semantics = [#tpu.dimension_semantics<parallel>], iteration_bounds = array<i64: 2>, scalar_prefetch = 0 : i64, scratch_operands = 0 : i64, tpu.core_type = #tpu.core_type<tc>, window_params = [{transform_indices = @transform_0, window_bounds = array<i64: 256, 4>}, {pipeline_mode = #tpu.pipeline_mode<synchronous>, transform_indices = @transform_1, window_bounds = array<i64: 4, 8>}, {pipeline_mode = #tpu.pipeline_mode<synchronous>, transform_indices = @transform_2, window_bounds = array<i64: 1, 8>}, {pipeline_mode = #tpu.pipeline_mode<synchronous>, transform_indices = @transform_3, window_bounds = array<i64: 1, 8>}, {transform_indices = @transform_4, window_bounds = array<i64: 256, 8>}]} {
    %c0 = arith.constant 0 : index
    %c0_0 = arith.constant 0 : index
    %0 = vector.load %arg1[%c0, %c0_0] : memref<256x4xbf16, #tpu.memory_space<vmem>>, vector<256x4xbf16>
    %c0_1 = arith.constant 0 : index
    %c0_2 = arith.constant 0 : index
    %1 = vector.load %arg2[%c0_1, %c0_2] : memref<4x8xbf16, #tpu.memory_space<vmem>>, vector<4x8xbf16>
    %cst = arith.constant dense<0.000000e+00> : vector<256x8xf32>
    %2 = tpu.matmul %0, %1, %cst {dimension_numbers = #tpu.dot_dimension_numbers<[1], [0], [0], [1], [0, 0, 1, 1], [], []>} : vector<256x4xbf16>, vector<4x8xbf16>, vector<256x8xf32> -> vector<256x8xf32>
    %c0_3 = arith.constant 0 : index
    %c0_4 = arith.constant 0 : index
    %3 = vector.load %arg3[%c0_3, %c0_4] : memref<1x8xf32, #tpu.memory_space<vmem>>, vector<1x8xf32>
    %4 = vector.broadcast %3 : vector<1x8xf32> to vector<256x8xf32>
    %5 = arith.mulf %2, %4 : vector<256x8xf32>
    %c0_5 = arith.constant 0 : index
    %c0_6 = arith.constant 0 : index
    %6 = vector.load %arg4[%c0_5, %c0_6] : memref<1x8xf32, #tpu.memory_space<vmem>>, vector<1x8xf32>
    %7 = vector.broadcast %6 : vector<1x8xf32> to vector<256x8xf32>
    %8 = arith.addf %5, %7 : vector<256x8xf32>
    %c0_7 = arith.constant 0 : index
    %c0_8 = arith.constant 0 : index
    %9 = vector.load %arg5[%c0_7, %c0_8] : memref<256x8xf32, #tpu.memory_space<vmem>>, vector<256x8xf32>
    tpu.vector_store %arg5[%c0_7, %c0_8], %8 {strides = array<i32>} : memref<256x8xf32, #tpu.memory_space<vmem>>, vector<256x8xf32>,
    return
  }
  func.func @transform_0(%arg0: i32) -> (i32, i32) {
    %c0_i32 = arith.constant 0 : i32
    %c0_i32_0 = arith.constant 0 : i32
    return %arg0, %c0_i32 : i32, i32
  }
  func.func @transform_1(%arg0: i32) -> (i32, i32) {
    %c0_i32 = arith.constant 0 : i32
    %c0_i32_0 = arith.constant 0 : i32
    %c0_i32_1 = arith.constant 0 : i32
    return %c0_i32, %c0_i32_0 : i32, i32
  }
  func.func @transform_2(%arg0: i32) -> (i32, i32) {
    %c0_i32 = arith.constant 0 : i32
    %c0_i32_0 = arith.constant 0 : i32
    %c0_i32_1 = arith.constant 0 : i32
    return %c0_i32, %c0_i32_0 : i32, i32
  }
  func.func @transform_3(%arg0: i32) -> (i32, i32) {
    %c0_i32 = arith.constant 0 : i32
    %c0_i32_0 = arith.constant 0 : i32
    %c0_i32_1 = arith.constant 0 : i32
    return %c0_i32, %c0_i32_0 : i32, i32
  }
  func.func @transform_4(%arg0: i32) -> (i32, i32) {
    %c0_i32 = arith.constant 0 : i32
    %c0_i32_0 = arith.constant 0 : i32
    return %arg0, %c0_i32 : i32, i32
  }
}

module attributes {stable_mosaic.version = 11 : i64} {
  func.func @_ca_fc_kernel(%arg0: i32, %arg1: memref<1x16x8xf32, #tpu.memory_space<vmem>>, %arg2: memref<1x16x8xf32, #tpu.memory_space<vmem>>, %arg3: memref<8x8xf32, #tpu.memory_space<vmem>>, %arg4: memref<1x8xf32, #tpu.memory_space<vmem>>, %arg5: memref<1x8xf32, #tpu.memory_space<vmem>>, %arg6: memref<8x8xf32, #tpu.memory_space<vmem>>, %arg7: memref<1x8xf32, #tpu.memory_space<vmem>>, %arg8: memref<8x8xf32, #tpu.memory_space<vmem>>, %arg9: memref<1x8xf32, #tpu.memory_space<vmem>>, %arg10: memref<1x16x8xf32, #tpu.memory_space<vmem>>, %arg11: memref<1x16x8xf32, #tpu.memory_space<vmem>>) attributes {dimension_semantics = [#tpu.dimension_semantics<parallel>], iteration_bounds = array<i64: 2>, scalar_prefetch = 0 : i64, scratch_operands = 0 : i64, tpu.core_type = #tpu.core_type<tc>, window_params = [{transform_indices = @transform_0, window_bounds = array<i64: 1, 16, 8>}, {transform_indices = @transform_1, window_bounds = array<i64: 1, 16, 8>}, {pipeline_mode = #tpu.pipeline_mode<synchronous>, transform_indices = @transform_2, window_bounds = array<i64: 8, 8>}, {pipeline_mode = #tpu.pipeline_mode<synchronous>, transform_indices = @transform_3, window_bounds = array<i64: 1, 8>}, {pipeline_mode = #tpu.pipeline_mode<synchronous>, transform_indices = @transform_4, window_bounds = array<i64: 1, 8>}, {pipeline_mode = #tpu.pipeline_mode<synchronous>, transform_indices = @transform_5, window_bounds = array<i64: 8, 8>}, {pipeline_mode = #tpu.pipeline_mode<synchronous>, transform_indices = @transform_6, window_bounds = array<i64: 1, 8>}, {pipeline_mode = #tpu.pipeline_mode<synchronous>, transform_indices = @transform_7, window_bounds = array<i64: 8, 8>}, {pipeline_mode = #tpu.pipeline_mode<synchronous>, transform_indices = @transform_8, window_bounds = array<i64: 1, 8>}, {transform_indices = @transform_9, window_bounds = array<i64: 1, 16, 8>}, {transform_indices = @transform_10, window_bounds = array<i64: 1, 16, 8>}]} {
    %c0 = arith.constant 0 : index
    %c0_0 = arith.constant 0 : index
    %0 = vector.load %arg3[%c0, %c0_0] : memref<8x8xf32, #tpu.memory_space<vmem>>, vector<8x8xf32>
    %c0_1 = arith.constant 0 : index
    %c0_2 = arith.constant 0 : index
    %1 = vector.load %arg4[%c0_1, %c0_2] : memref<1x8xf32, #tpu.memory_space<vmem>>, vector<1x8xf32>
    %c0_3 = arith.constant 0 : index
    %c0_4 = arith.constant 0 : index
    %2 = vector.load %arg5[%c0_3, %c0_4] : memref<1x8xf32, #tpu.memory_space<vmem>>, vector<1x8xf32>
    %c0_5 = arith.constant 0 : index
    %c0_6 = arith.constant 0 : index
    %c0_7 = arith.constant 0 : index
    %3 = vector.load %arg1[%c0_5, %c0_6, %c0_7] : memref<1x16x8xf32, #tpu.memory_space<vmem>>, vector<1x16x8xf32>
    %4 = vector.shape_cast %3 : vector<1x16x8xf32> to vector<16x8xf32>
    %cst = arith.constant dense<0.000000e+00> : vector<16x8xf32>
    %5 = tpu.matmul %4, %0, %cst {dimension_numbers = #tpu.dot_dimension_numbers<[1], [0], [0], [1], [0, 0, 1, 1], [], []>} : vector<16x8xf32>, vector<8x8xf32>, vector<16x8xf32> -> vector<16x8xf32>
    %6 = vector.broadcast %1 : vector<1x8xf32> to vector<16x8xf32>
    %7 = arith.mulf %5, %6 : vector<16x8xf32>
    %8 = vector.broadcast %2 : vector<1x8xf32> to vector<16x8xf32>
    %9 = arith.addf %7, %8 : vector<16x8xf32>
    %cst_8 = arith.constant 3.000000e+00 : f32
    %10 = vector.broadcast %cst_8 : f32 to vector<16x8xf32>
    %11 = arith.addf %9, %10 : vector<16x8xf32>
    %cst_9 = arith.constant 0.000000e+00 : f32
    %cst_10 = arith.constant 6.000000e+00 : f32
    %12 = vector.broadcast %cst_9 : f32 to vector<16x8xf32>
    %13 = arith.maximumf %12, %11 : vector<16x8xf32>
    %14 = vector.broadcast %cst_10 : f32 to vector<16x8xf32>
    %15 = arith.minimumf %14, %13 : vector<16x8xf32>
    %16 = arith.mulf %9, %15 : vector<16x8xf32>
    %cst_11 = arith.constant 0.166666672 : f32
    %17 = vector.broadcast %cst_11 : f32 to vector<16x8xf32>
    %18 = arith.mulf %16, %17 : vector<16x8xf32>
    %c0_12 = arith.constant 0 : index
    %c0_13 = arith.constant 0 : index
    %c0_14 = arith.constant 0 : index
    %19 = vector.load %arg2[%c0_12, %c0_13, %c0_14] : memref<1x16x8xf32, #tpu.memory_space<vmem>>, vector<1x16x8xf32>
    %20 = vector.shape_cast %19 : vector<1x16x8xf32> to vector<16x8xf32>
    %cst_15 = arith.constant dense<0.000000e+00> : vector<16x8xf32>
    %21 = tpu.matmul %20, %0, %cst_15 {dimension_numbers = #tpu.dot_dimension_numbers<[1], [0], [0], [1], [0, 0, 1, 1], [], []>} : vector<16x8xf32>, vector<8x8xf32>, vector<16x8xf32> -> vector<16x8xf32>
    %22 = vector.broadcast %1 : vector<1x8xf32> to vector<16x8xf32>
    %23 = arith.mulf %21, %22 : vector<16x8xf32>
    %24 = vector.broadcast %2 : vector<1x8xf32> to vector<16x8xf32>
    %25 = arith.addf %23, %24 : vector<16x8xf32>
    %cst_16 = arith.constant 3.000000e+00 : f32
    %26 = vector.broadcast %cst_16 : f32 to vector<16x8xf32>
    %27 = arith.addf %25, %26 : vector<16x8xf32>
    %cst_17 = arith.constant 0.000000e+00 : f32
    %cst_18 = arith.constant 6.000000e+00 : f32
    %28 = vector.broadcast %cst_17 : f32 to vector<16x8xf32>
    %29 = arith.maximumf %28, %27 : vector<16x8xf32>
    %30 = vector.broadcast %cst_18 : f32 to vector<16x8xf32>
    %31 = arith.minimumf %30, %29 : vector<16x8xf32>
    %32 = arith.mulf %25, %31 : vector<16x8xf32>
    %cst_19 = arith.constant 0.166666672 : f32
    %33 = vector.broadcast %cst_19 : f32 to vector<16x8xf32>
    %34 = arith.mulf %32, %33 : vector<16x8xf32>
    %c0_20 = arith.constant 0 : index
    %c0_21 = arith.constant 0 : index
    %35 = vector.load %arg6[%c0_20, %c0_21] : memref<8x8xf32, #tpu.memory_space<vmem>>, vector<8x8xf32>
    %cst_22 = arith.constant dense<0.000000e+00> : vector<16x8xf32>
    %36 = tpu.matmul %18, %35, %cst_22 {dimension_numbers = #tpu.dot_dimension_numbers<[1], [0], [0], [1], [0, 0, 1, 1], [], []>} : vector<16x8xf32>, vector<8x8xf32>, vector<16x8xf32> -> vector<16x8xf32>
    %c0_23 = arith.constant 0 : index
    %c0_24 = arith.constant 0 : index
    %37 = vector.load %arg7[%c0_23, %c0_24] : memref<1x8xf32, #tpu.memory_space<vmem>>, vector<1x8xf32>
    %38 = vector.broadcast %37 : vector<1x8xf32> to vector<16x8xf32>
    %39 = arith.addf %36, %38 : vector<16x8xf32>
    %cst_25 = arith.constant 0.000000e+00 : f32
    %40 = vector.broadcast %cst_25 : f32 to vector<16x8xf32>
    %41 = arith.subf %40, %39 : vector<16x8xf32>
    %42 = math.exp %41 : vector<16x8xf32>
    %cst_26 = arith.constant 1.000000e+00 : f32
    %43 = vector.broadcast %cst_26 : f32 to vector<16x8xf32>
    %44 = arith.addf %43, %42 : vector<16x8xf32>
    %45 = tpu.reciprocal %44 {approx = true} : vector<16x8xf32> -> vector<16x8xf32>
    %c0_27 = arith.constant 0 : index
    %c0_28 = arith.constant 0 : index
    %c0_29 = arith.constant 0 : index
    %46 = vector.load %arg10[%c0_27, %c0_28, %c0_29] : memref<1x16x8xf32, #tpu.memory_space<vmem>>, vector<1x16x8xf32>
    %47 = vector.shape_cast %46 : vector<1x16x8xf32> to vector<16x8xf32>
    %48 = vector.shape_cast %45 : vector<16x8xf32> to vector<1x16x8xf32>
    tpu.vector_store %arg10[%c0_27, %c0_28, %c0_29], %48 {strides = array<i32>} : memref<1x16x8xf32, #tpu.memory_space<vmem>>, vector<1x16x8xf32>,
    %c0_30 = arith.constant 0 : index
    %c0_31 = arith.constant 0 : index
    %49 = vector.load %arg8[%c0_30, %c0_31] : memref<8x8xf32, #tpu.memory_space<vmem>>, vector<8x8xf32>
    %cst_32 = arith.constant dense<0.000000e+00> : vector<16x8xf32>
    %50 = tpu.matmul %34, %49, %cst_32 {dimension_numbers = #tpu.dot_dimension_numbers<[1], [0], [0], [1], [0, 0, 1, 1], [], []>} : vector<16x8xf32>, vector<8x8xf32>, vector<16x8xf32> -> vector<16x8xf32>
    %c0_33 = arith.constant 0 : index
    %c0_34 = arith.constant 0 : index
    %51 = vector.load %arg9[%c0_33, %c0_34] : memref<1x8xf32, #tpu.memory_space<vmem>>, vector<1x8xf32>
    %52 = vector.broadcast %51 : vector<1x8xf32> to vector<16x8xf32>
    %53 = arith.addf %50, %52 : vector<16x8xf32>
    %cst_35 = arith.constant 0.000000e+00 : f32
    %54 = vector.broadcast %cst_35 : f32 to vector<16x8xf32>
    %55 = arith.subf %54, %53 : vector<16x8xf32>
    %56 = math.exp %55 : vector<16x8xf32>
    %cst_36 = arith.constant 1.000000e+00 : f32
    %57 = vector.broadcast %cst_36 : f32 to vector<16x8xf32>
    %58 = arith.addf %57, %56 : vector<16x8xf32>
    %59 = tpu.reciprocal %58 {approx = true} : vector<16x8xf32> -> vector<16x8xf32>
    %c0_37 = arith.constant 0 : index
    %c0_38 = arith.constant 0 : index
    %c0_39 = arith.constant 0 : index
    %60 = vector.load %arg11[%c0_37, %c0_38, %c0_39] : memref<1x16x8xf32, #tpu.memory_space<vmem>>, vector<1x16x8xf32>
    %61 = vector.shape_cast %60 : vector<1x16x8xf32> to vector<16x8xf32>
    %62 = vector.shape_cast %59 : vector<16x8xf32> to vector<1x16x8xf32>
    tpu.vector_store %arg11[%c0_37, %c0_38, %c0_39], %62 {strides = array<i32>} : memref<1x16x8xf32, #tpu.memory_space<vmem>>, vector<1x16x8xf32>,
    return
  }
  func.func @transform_0(%arg0: i32) -> (i32, i32, i32) {
    %c0_i32 = arith.constant 0 : i32
    %c0_i32_0 = arith.constant 0 : i32
    %c0_i32_1 = arith.constant 0 : i32
    return %arg0, %c0_i32, %c0_i32_0 : i32, i32, i32
  }
  func.func @transform_1(%arg0: i32) -> (i32, i32, i32) {
    %c0_i32 = arith.constant 0 : i32
    %c0_i32_0 = arith.constant 0 : i32
    %c0_i32_1 = arith.constant 0 : i32
    return %arg0, %c0_i32, %c0_i32_0 : i32, i32, i32
  }
  func.func @transform_2(%arg0: i32) -> (i32, i32) {
    %c0_i32 = arith.constant 0 : i32
    %c0_i32_0 = arith.constant 0 : i32
    %c0_i32_1 = arith.constant 0 : i32
    return %c0_i32, %c0_i32_0 : i32, i32
  }
  func.func @transform_3(%arg0: i32) -> (i32, i32) {
    %c0_i32 = arith.constant 0 : i32
    %c0_i32_0 = arith.constant 0 : i32
    %c0_i32_1 = arith.constant 0 : i32
    return %c0_i32, %c0_i32_0 : i32, i32
  }
  func.func @transform_4(%arg0: i32) -> (i32, i32) {
    %c0_i32 = arith.constant 0 : i32
    %c0_i32_0 = arith.constant 0 : i32
    %c0_i32_1 = arith.constant 0 : i32
    return %c0_i32, %c0_i32_0 : i32, i32
  }
  func.func @transform_5(%arg0: i32) -> (i32, i32) {
    %c0_i32 = arith.constant 0 : i32
    %c0_i32_0 = arith.constant 0 : i32
    %c0_i32_1 = arith.constant 0 : i32
    return %c0_i32, %c0_i32_0 : i32, i32
  }
  func.func @transform_6(%arg0: i32) -> (i32, i32) {
    %c0_i32 = arith.constant 0 : i32
    %c0_i32_0 = arith.constant 0 : i32
    %c0_i32_1 = arith.constant 0 : i32
    return %c0_i32, %c0_i32_0 : i32, i32
  }
  func.func @transform_7(%arg0: i32) -> (i32, i32) {
    %c0_i32 = arith.constant 0 : i32
    %c0_i32_0 = arith.constant 0 : i32
    %c0_i32_1 = arith.constant 0 : i32
    return %c0_i32, %c0_i32_0 : i32, i32
  }
  func.func @transform_8(%arg0: i32) -> (i32, i32) {
    %c0_i32 = arith.constant 0 : i32
    %c0_i32_0 = arith.constant 0 : i32
    %c0_i32_1 = arith.constant 0 : i32
    return %c0_i32, %c0_i32_0 : i32, i32
  }
  func.func @transform_9(%arg0: i32) -> (i32, i32, i32) {
    %c0_i32 = arith.constant 0 : i32
    %c0_i32_0 = arith.constant 0 : i32
    %c0_i32_1 = arith.constant 0 : i32
    return %arg0, %c0_i32, %c0_i32_0 : i32, i32, i32
  }
  func.func @transform_10(%arg0: i32) -> (i32, i32, i32) {
    %c0_i32 = arith.constant 0 : i32
    %c0_i32_0 = arith.constant 0 : i32
    %c0_i32_1 = arith.constant 0 : i32
    return %arg0, %c0_i32, %c0_i32_0 : i32, i32, i32
  }
}

module attributes {stable_mosaic.version = 11 : i64} {
  func.func @_ca_apply_kernel(%arg0: i32, %arg1: i32, %arg2: memref<1x8x16x8xf32, #tpu.memory_space<vmem>>, %arg3: memref<1x8x8xf32, #tpu.memory_space<vmem>>, %arg4: memref<1x16x8xf32, #tpu.memory_space<vmem>>, %arg5: memref<1x8x16x8xf32, #tpu.memory_space<vmem>>) attributes {dimension_semantics = [#tpu.dimension_semantics<parallel>, #tpu.dimension_semantics<parallel>], iteration_bounds = array<i64: 2, 2>, scalar_prefetch = 0 : i64, scratch_operands = 0 : i64, tpu.core_type = #tpu.core_type<tc>, window_params = [{transform_indices = @transform_0, window_bounds = array<i64: 1, 8, 16, 8>}, {transform_indices = @transform_1, window_bounds = array<i64: 1, 8, 8>}, {transform_indices = @transform_2, window_bounds = array<i64: 1, 16, 8>}, {transform_indices = @transform_3, window_bounds = array<i64: 1, 8, 16, 8>}]} {
    %c0 = arith.constant 0 : index
    %c0_0 = arith.constant 0 : index
    %c0_1 = arith.constant 0 : index
    %0 = vector.load %arg3[%c0, %c0_0, %c0_1] : memref<1x8x8xf32, #tpu.memory_space<vmem>>, vector<1x8x8xf32>
    %1 = vector.shape_cast %0 : vector<1x8x8xf32> to vector<8x8xf32>
    %c0_2 = arith.constant 0 : index
    %c0_3 = arith.constant 0 : index
    %c0_4 = arith.constant 0 : index
    %2 = vector.load %arg4[%c0_2, %c0_3, %c0_4] : memref<1x16x8xf32, #tpu.memory_space<vmem>>, vector<1x16x8xf32>
    %3 = vector.shape_cast %2 : vector<1x16x8xf32> to vector<16x8xf32>
    %c0_5 = arith.constant 0 : index
    %c0_6 = arith.constant 0 : index
    %c0_7 = arith.constant 0 : index
    %c0_8 = arith.constant 0 : index
    %4 = vector.load %arg2[%c0_5, %c0_6, %c0_7, %c0_8] : memref<1x8x16x8xf32, #tpu.memory_space<vmem>>, vector<1x8x16x8xf32>
    %5 = vector.shape_cast %4 : vector<1x8x16x8xf32> to vector<8x16x8xf32>
    %6 = vector.shape_cast %3 : vector<16x8xf32> to vector<1x16x8xf32>
    %7 = vector.broadcast %6 : vector<1x16x8xf32> to vector<8x16x8xf32>
    %8 = arith.mulf %5, %7 : vector<8x16x8xf32>
    %9 = vector.shape_cast %1 : vector<8x8xf32> to vector<8x1x8xf32>
    %10 = vector.broadcast %9 : vector<8x1x8xf32> to vector<8x16x8xf32>
    %11 = arith.mulf %8, %10 : vector<8x16x8xf32>
    %c0_9 = arith.constant 0 : index
    %c0_10 = arith.constant 0 : index
    %c0_11 = arith.constant 0 : index
    %c0_12 = arith.constant 0 : index
    %12 = vector.load %arg5[%c0_9, %c0_10, %c0_11, %c0_12] : memref<1x8x16x8xf32, #tpu.memory_space<vmem>>, vector<1x8x16x8xf32>
    %13 = vector.shape_cast %12 : vector<1x8x16x8xf32> to vector<8x16x8xf32>
    %14 = vector.shape_cast %11 : vector<8x16x8xf32> to vector<1x8x16x8xf32>
    tpu.vector_store %arg5[%c0_9, %c0_10, %c0_11, %c0_12], %14 {strides = array<i32>} : memref<1x8x16x8xf32, #tpu.memory_space<vmem>>, vector<1x8x16x8xf32>,
    return
  }
  func.func @transform_0(%arg0: i32, %arg1: i32) -> (i32, i32, i32, i32) {
    %c0_i32 = arith.constant 0 : i32
    %c0_i32_0 = arith.constant 0 : i32
    %c0_i32_1 = arith.constant 0 : i32
    return %arg0, %arg1, %c0_i32, %c0_i32_0 : i32, i32, i32, i32
  }
  func.func @transform_1(%arg0: i32, %arg1: i32) -> (i32, i32, i32) {
    %c0_i32 = arith.constant 0 : i32
    %c0_i32_0 = arith.constant 0 : i32
    return %arg0, %arg1, %c0_i32 : i32, i32, i32
  }
  func.func @transform_2(%arg0: i32, %arg1: i32) -> (i32, i32, i32) {
    %c0_i32 = arith.constant 0 : i32
    %c0_i32_0 = arith.constant 0 : i32
    %c0_i32_1 = arith.constant 0 : i32
    return %arg0, %c0_i32, %c0_i32_0 : i32, i32, i32
  }
  func.func @transform_3(%arg0: i32, %arg1: i32) -> (i32, i32, i32, i32) {
    %c0_i32 = arith.constant 0 : i32
    %c0_i32_0 = arith.constant 0 : i32
    %c0_i32_1 = arith.constant 0 : i32
    return %arg0, %arg1, %c0_i32, %c0_i32_0 : i32, i32, i32, i32
  }
}

module attributes {stable_mosaic.version = 11 : i64} {
  func.func @_matmul_scale_shift_kernel(%arg0: i32, %arg1: memref<256x36xbf16, #tpu.memory_space<vmem>>, %arg2: memref<36x8xbf16, #tpu.memory_space<vmem>>, %arg3: memref<1x8xf32, #tpu.memory_space<vmem>>, %arg4: memref<1x8xf32, #tpu.memory_space<vmem>>, %arg5: memref<256x8xf32, #tpu.memory_space<vmem>>) attributes {dimension_semantics = [#tpu.dimension_semantics<parallel>], iteration_bounds = array<i64: 2>, scalar_prefetch = 0 : i64, scratch_operands = 0 : i64, tpu.core_type = #tpu.core_type<tc>, window_params = [{transform_indices = @transform_0, window_bounds = array<i64: 256, 36>}, {pipeline_mode = #tpu.pipeline_mode<synchronous>, transform_indices = @transform_1, window_bounds = array<i64: 36, 8>}, {pipeline_mode = #tpu.pipeline_mode<synchronous>, transform_indices = @transform_2, window_bounds = array<i64: 1, 8>}, {pipeline_mode = #tpu.pipeline_mode<synchronous>, transform_indices = @transform_3, window_bounds = array<i64: 1, 8>}, {transform_indices = @transform_4, window_bounds = array<i64: 256, 8>}]} {
    %c0 = arith.constant 0 : index
    %c0_0 = arith.constant 0 : index
    %0 = vector.load %arg1[%c0, %c0_0] : memref<256x36xbf16, #tpu.memory_space<vmem>>, vector<256x36xbf16>
    %c0_1 = arith.constant 0 : index
    %c0_2 = arith.constant 0 : index
    %1 = vector.load %arg2[%c0_1, %c0_2] : memref<36x8xbf16, #tpu.memory_space<vmem>>, vector<36x8xbf16>
    %cst = arith.constant dense<0.000000e+00> : vector<256x8xf32>
    %2 = tpu.matmul %0, %1, %cst {dimension_numbers = #tpu.dot_dimension_numbers<[1], [0], [0], [1], [0, 0, 1, 1], [], []>} : vector<256x36xbf16>, vector<36x8xbf16>, vector<256x8xf32> -> vector<256x8xf32>
    %c0_3 = arith.constant 0 : index
    %c0_4 = arith.constant 0 : index
    %3 = vector.load %arg3[%c0_3, %c0_4] : memref<1x8xf32, #tpu.memory_space<vmem>>, vector<1x8xf32>
    %4 = vector.broadcast %3 : vector<1x8xf32> to vector<256x8xf32>
    %5 = arith.mulf %2, %4 : vector<256x8xf32>
    %c0_5 = arith.constant 0 : index
    %c0_6 = arith.constant 0 : index
    %6 = vector.load %arg4[%c0_5, %c0_6] : memref<1x8xf32, #tpu.memory_space<vmem>>, vector<1x8xf32>
    %7 = vector.broadcast %6 : vector<1x8xf32> to vector<256x8xf32>
    %8 = arith.addf %5, %7 : vector<256x8xf32>
    %cst_7 = arith.constant 0.000000e+00 : f32
    %9 = vector.broadcast %cst_7 : f32 to vector<256x8xf32>
    %10 = arith.maximumf %8, %9 : vector<256x8xf32>
    %c0_8 = arith.constant 0 : index
    %c0_9 = arith.constant 0 : index
    %11 = vector.load %arg5[%c0_8, %c0_9] : memref<256x8xf32, #tpu.memory_space<vmem>>, vector<256x8xf32>
    tpu.vector_store %arg5[%c0_8, %c0_9], %10 {strides = array<i32>} : memref<256x8xf32, #tpu.memory_space<vmem>>, vector<256x8xf32>,
    return
  }
  func.func @transform_0(%arg0: i32) -> (i32, i32) {
    %c0_i32 = arith.constant 0 : i32
    %c0_i32_0 = arith.constant 0 : i32
    return %arg0, %c0_i32 : i32, i32
  }
  func.func @transform_1(%arg0: i32) -> (i32, i32) {
    %c0_i32 = arith.constant 0 : i32
    %c0_i32_0 = arith.constant 0 : i32
    %c0_i32_1 = arith.constant 0 : i32
    return %c0_i32, %c0_i32_0 : i32, i32
  }
  func.func @transform_2(%arg0: i32) -> (i32, i32) {
    %c0_i32 = arith.constant 0 : i32
    %c0_i32_0 = arith.constant 0 : i32
    %c0_i32_1 = arith.constant 0 : i32
    return %c0_i32, %c0_i32_0 : i32, i32
  }
  func.func @transform_3(%arg0: i32) -> (i32, i32) {
    %c0_i32 = arith.constant 0 : i32
    %c0_i32_0 = arith.constant 0 : i32
    %c0_i32_1 = arith.constant 0 : i32
    return %c0_i32, %c0_i32_0 : i32, i32
  }
  func.func @transform_4(%arg0: i32) -> (i32, i32) {
    %c0_i32 = arith.constant 0 : i32
    %c0_i32_0 = arith.constant 0 : i32
    return %arg0, %c0_i32 : i32, i32
  }
}

module attributes {stable_mosaic.version = 11 : i64} {
  func.func @_matmul_scale_shift_kernel(%arg0: i32, %arg1: memref<256x72xbf16, #tpu.memory_space<vmem>>, %arg2: memref<72x8xbf16, #tpu.memory_space<vmem>>, %arg3: memref<1x8xf32, #tpu.memory_space<vmem>>, %arg4: memref<1x8xf32, #tpu.memory_space<vmem>>, %arg5: memref<256x8xf32, #tpu.memory_space<vmem>>) attributes {dimension_semantics = [#tpu.dimension_semantics<parallel>], iteration_bounds = array<i64: 2>, scalar_prefetch = 0 : i64, scratch_operands = 0 : i64, tpu.core_type = #tpu.core_type<tc>, window_params = [{transform_indices = @transform_0, window_bounds = array<i64: 256, 72>}, {pipeline_mode = #tpu.pipeline_mode<synchronous>, transform_indices = @transform_1, window_bounds = array<i64: 72, 8>}, {pipeline_mode = #tpu.pipeline_mode<synchronous>, transform_indices = @transform_2, window_bounds = array<i64: 1, 8>}, {pipeline_mode = #tpu.pipeline_mode<synchronous>, transform_indices = @transform_3, window_bounds = array<i64: 1, 8>}, {transform_indices = @transform_4, window_bounds = array<i64: 256, 8>}]} {
    %c0 = arith.constant 0 : index
    %c0_0 = arith.constant 0 : index
    %0 = vector.load %arg1[%c0, %c0_0] : memref<256x72xbf16, #tpu.memory_space<vmem>>, vector<256x72xbf16>
    %c0_1 = arith.constant 0 : index
    %c0_2 = arith.constant 0 : index
    %1 = vector.load %arg2[%c0_1, %c0_2] : memref<72x8xbf16, #tpu.memory_space<vmem>>, vector<72x8xbf16>
    %cst = arith.constant dense<0.000000e+00> : vector<256x8xf32>
    %2 = tpu.matmul %0, %1, %cst {dimension_numbers = #tpu.dot_dimension_numbers<[1], [0], [0], [1], [0, 0, 1, 1], [], []>} : vector<256x72xbf16>, vector<72x8xbf16>, vector<256x8xf32> -> vector<256x8xf32>
    %c0_3 = arith.constant 0 : index
    %c0_4 = arith.constant 0 : index
    %3 = vector.load %arg3[%c0_3, %c0_4] : memref<1x8xf32, #tpu.memory_space<vmem>>, vector<1x8xf32>
    %4 = vector.broadcast %3 : vector<1x8xf32> to vector<256x8xf32>
    %5 = arith.mulf %2, %4 : vector<256x8xf32>
    %c0_5 = arith.constant 0 : index
    %c0_6 = arith.constant 0 : index
    %6 = vector.load %arg4[%c0_5, %c0_6] : memref<1x8xf32, #tpu.memory_space<vmem>>, vector<1x8xf32>
    %7 = vector.broadcast %6 : vector<1x8xf32> to vector<256x8xf32>
    %8 = arith.addf %5, %7 : vector<256x8xf32>
    %c0_7 = arith.constant 0 : index
    %c0_8 = arith.constant 0 : index
    %9 = vector.load %arg5[%c0_7, %c0_8] : memref<256x8xf32, #tpu.memory_space<vmem>>, vector<256x8xf32>
    tpu.vector_store %arg5[%c0_7, %c0_8], %8 {strides = array<i32>} : memref<256x8xf32, #tpu.memory_space<vmem>>, vector<256x8xf32>,
    return
  }
  func.func @transform_0(%arg0: i32) -> (i32, i32) {
    %c0_i32 = arith.constant 0 : i32
    %c0_i32_0 = arith.constant 0 : i32
    return %arg0, %c0_i32 : i32, i32
  }
  func.func @transform_1(%arg0: i32) -> (i32, i32) {
    %c0_i32 = arith.constant 0 : i32
    %c0_i32_0 = arith.constant 0 : i32
    %c0_i32_1 = arith.constant 0 : i32
    return %c0_i32, %c0_i32_0 : i32, i32
  }
  func.func @transform_2(%arg0: i32) -> (i32, i32) {
    %c0_i32 = arith.constant 0 : i32
    %c0_i32_0 = arith.constant 0 : i32
    %c0_i32_1 = arith.constant 0 : i32
    return %c0_i32, %c0_i32_0 : i32, i32
  }
  func.func @transform_3(%arg0: i32) -> (i32, i32) {
    %c0_i32 = arith.constant 0 : i32
    %c0_i32_0 = arith.constant 0 : i32
    %c0_i32_1 = arith.constant 0 : i32
    return %c0_i32, %c0_i32_0 : i32, i32
  }
  func.func @transform_4(%arg0: i32) -> (i32, i32) {
    %c0_i32 = arith.constant 0 : i32
    %c0_i32_0 = arith.constant 0 : i32
    return %arg0, %c0_i32 : i32, i32
  }
}

module attributes {stable_mosaic.version = 11 : i64} {
  func.func @_se_pool_kernel(%arg0: i32, %arg1: i32, %arg2: memref<1x8x16x8xf32, #tpu.memory_space<vmem>>, %arg3: memref<1x8x16x8xf32, #tpu.memory_space<vmem>>, %arg4: memref<1x1x8xf32, #tpu.memory_space<vmem>>) attributes {dimension_semantics = [#tpu.dimension_semantics<parallel>, #tpu.dimension_semantics<arbitrary>], iteration_bounds = array<i64: 2, 2>, scalar_prefetch = 0 : i64, scratch_operands = 0 : i64, tpu.core_type = #tpu.core_type<tc>, window_params = [{transform_indices = @transform_0, window_bounds = array<i64: 1, 8, 16, 8>}, {transform_indices = @transform_1, window_bounds = array<i64: 1, 8, 16, 8>}, {transform_indices = @transform_2, window_bounds = array<i64: 1, 1, 8>}]} {
    %c0_i32 = arith.constant 0 : i32
    %0 = arith.cmpi eq, %arg1, %c0_i32 : i32
    %1 = arith.extui %0 : i1 to i32
    %c0_i32_0 = arith.constant 0 : i32
    %2 = arith.cmpi ne, %1, %c0_i32_0 : i32
    scf.if %2 {
      %cst_15 = arith.constant 0.000000e+00 : f32
      %19 = vector.broadcast %cst_15 : f32 to vector<1x8xf32>
      %c0_16 = arith.constant 0 : index
      %c0_17 = arith.constant 0 : index
      %c0_18 = arith.constant 0 : index
      %20 = vector.load %arg4[%c0_16, %c0_17, %c0_18] : memref<1x1x8xf32, #tpu.memory_space<vmem>>, vector<1x1x8xf32>
      %21 = vector.shape_cast %20 : vector<1x1x8xf32> to vector<1x8xf32>
      %22 = vector.shape_cast %19 : vector<1x8xf32> to vector<1x1x8xf32>
      tpu.vector_store %arg4[%c0_16, %c0_17, %c0_18], %22 {strides = array<i32>} : memref<1x1x8xf32, #tpu.memory_space<vmem>>, vector<1x1x8xf32>,
    } else {
    }
    %c0 = arith.constant 0 : index
    %c0_1 = arith.constant 0 : index
    %c0_2 = arith.constant 0 : index
    %c0_3 = arith.constant 0 : index
    %3 = vector.load %arg2[%c0, %c0_1, %c0_2, %c0_3] : memref<1x8x16x8xf32, #tpu.memory_space<vmem>>, vector<1x8x16x8xf32>
    %4 = vector.shape_cast %3 : vector<1x8x16x8xf32> to vector<8x16x8xf32>
    %c0_4 = arith.constant 0 : index
    %c0_5 = arith.constant 0 : index
    %c0_6 = arith.constant 0 : index
    %c0_7 = arith.constant 0 : index
    %5 = vector.load %arg3[%c0_4, %c0_5, %c0_6, %c0_7] : memref<1x8x16x8xf32, #tpu.memory_space<vmem>>, vector<1x8x16x8xf32>
    %6 = vector.shape_cast %5 : vector<1x8x16x8xf32> to vector<8x16x8xf32>
    %7 = arith.addf %4, %6 : vector<8x16x8xf32>
    %c0_8 = arith.constant 0 : index
    %c0_9 = arith.constant 0 : index
    %c0_10 = arith.constant 0 : index
    %8 = vector.load %arg4[%c0_8, %c0_9, %c0_10] : memref<1x1x8xf32, #tpu.memory_space<vmem>>, vector<1x1x8xf32>
    %9 = vector.shape_cast %8 : vector<1x1x8xf32> to vector<1x8xf32>
    %cst = arith.constant dense<0.000000e+00> : vector<8xf32>
    %10 = vector.multi_reduction <add>, %7, %cst [0, 1] : vector<8x16x8xf32> to vector<8xf32>
    %11 = vector.shape_cast %10 : vector<8xf32> to vector<1x8xf32>
    %12 = arith.addf %9, %11 : vector<1x8xf32>
    %c0_11 = arith.constant 0 : index
    %c0_12 = arith.constant 0 : index
    %c0_13 = arith.constant 0 : index
    %13 = vector.load %arg4[%c0_11, %c0_12, %c0_13] : memref<1x1x8xf32, #tpu.memory_space<vmem>>, vector<1x1x8xf32>
    %14 = vector.shape_cast %13 : vector<1x1x8xf32> to vector<1x8xf32>
    %15 = vector.shape_cast %12 : vector<1x8xf32> to vector<1x1x8xf32>
    tpu.vector_store %arg4[%c0_11, %c0_12, %c0_13], %15 {strides = array<i32>} : memref<1x1x8xf32, #tpu.memory_space<vmem>>, vector<1x1x8xf32>,
    %c1_i32 = arith.constant 1 : i32
    %16 = arith.cmpi eq, %arg1, %c1_i32 : i32
    %17 = arith.extui %16 : i1 to i32
    %c0_i32_14 = arith.constant 0 : i32
    %18 = arith.cmpi ne, %17, %c0_i32_14 : i32
    scf.if %18 {
      %c0_15 = arith.constant 0 : index
      %c0_16 = arith.constant 0 : index
      %c0_17 = arith.constant 0 : index
      %19 = vector.load %arg4[%c0_15, %c0_16, %c0_17] : memref<1x1x8xf32, #tpu.memory_space<vmem>>, vector<1x1x8xf32>
      %20 = vector.shape_cast %19 : vector<1x1x8xf32> to vector<1x8xf32>
      %cst_18 = arith.constant 3.906250e-03 : f32
      %21 = vector.broadcast %cst_18 : f32 to vector<1x8xf32>
      %22 = arith.mulf %20, %21 : vector<1x8xf32>
      %c0_19 = arith.constant 0 : index
      %c0_20 = arith.constant 0 : index
      %c0_21 = arith.constant 0 : index
      %23 = vector.load %arg4[%c0_19, %c0_20, %c0_21] : memref<1x1x8xf32, #tpu.memory_space<vmem>>, vector<1x1x8xf32>
      %24 = vector.shape_cast %23 : vector<1x1x8xf32> to vector<1x8xf32>
      %25 = vector.shape_cast %22 : vector<1x8xf32> to vector<1x1x8xf32>
      tpu.vector_store %arg4[%c0_19, %c0_20, %c0_21], %25 {strides = array<i32>} : memref<1x1x8xf32, #tpu.memory_space<vmem>>, vector<1x1x8xf32>,
    } else {
    }
    return
  }
  func.func @transform_0(%arg0: i32, %arg1: i32) -> (i32, i32, i32, i32) {
    %c0_i32 = arith.constant 0 : i32
    %c0_i32_0 = arith.constant 0 : i32
    %c0_i32_1 = arith.constant 0 : i32
    return %arg0, %arg1, %c0_i32, %c0_i32_0 : i32, i32, i32, i32
  }
  func.func @transform_1(%arg0: i32, %arg1: i32) -> (i32, i32, i32, i32) {
    %c0_i32 = arith.constant 0 : i32
    %c0_i32_0 = arith.constant 0 : i32
    %c0_i32_1 = arith.constant 0 : i32
    return %arg0, %arg1, %c0_i32, %c0_i32_0 : i32, i32, i32, i32
  }
  func.func @transform_2(%arg0: i32, %arg1: i32) -> (i32, i32, i32) {
    %c0_i32 = arith.constant 0 : i32
    %c0_i32_0 = arith.constant 0 : i32
    %c0_i32_1 = arith.constant 0 : i32
    return %arg0, %c0_i32, %c0_i32_0 : i32, i32, i32
  }
}

module attributes {stable_mosaic.version = 11 : i64} {
  func.func @_se_fc_kernel(%arg0: i32, %arg1: memref<2x1x8xf32, #tpu.memory_space<vmem>>, %arg2: memref<8x1xf32, #tpu.memory_space<vmem>>, %arg3: memref<1x8xf32, #tpu.memory_space<vmem>>, %arg4: memref<2x1x8xf32, #tpu.memory_space<vmem>>) attributes {dimension_semantics = [#tpu.dimension_semantics<arbitrary>], iteration_bounds = array<i64: 1>, scalar_prefetch = 0 : i64, scratch_operands = 0 : i64, tpu.core_type = #tpu.core_type<tc>, window_params = [{pipeline_mode = #tpu.pipeline_mode<synchronous>, transform_indices = @transform_0, window_bounds = array<i64: 2, 1, 8>}, {pipeline_mode = #tpu.pipeline_mode<synchronous>, transform_indices = @transform_1, window_bounds = array<i64: 8, 1>}, {pipeline_mode = #tpu.pipeline_mode<synchronous>, transform_indices = @transform_2, window_bounds = array<i64: 1, 8>}, {pipeline_mode = #tpu.pipeline_mode<synchronous>, transform_indices = @transform_3, window_bounds = array<i64: 2, 1, 8>}]} {
    %c0 = arith.constant 0 : index
    %c0_0 = arith.constant 0 : index
    %c0_1 = arith.constant 0 : index
    %0 = vector.load %arg1[%c0, %c0_0, %c0_1] : memref<2x1x8xf32, #tpu.memory_space<vmem>>, vector<2x1x8xf32>
    %1 = vector.shape_cast %0 : vector<2x1x8xf32> to vector<2x8xf32>
    %c0_2 = arith.constant 0 : index
    %c0_3 = arith.constant 0 : index
    %2 = vector.load %arg2[%c0_2, %c0_3] : memref<8x1xf32, #tpu.memory_space<vmem>>, vector<8x1xf32>
    %cst = arith.constant dense<0.000000e+00> : vector<2x1xf32>
    %3 = tpu.matmul %1, %2, %cst {dimension_numbers = #tpu.dot_dimension_numbers<[1], [0], [0], [1], [0, 0, 1, 1], [], []>} : vector<2x8xf32>, vector<8x1xf32>, vector<2x1xf32> -> vector<2x1xf32>
    %cst_4 = arith.constant 0.000000e+00 : f32
    %4 = vector.broadcast %cst_4 : f32 to vector<2x1xf32>
    %5 = arith.maximumf %3, %4 : vector<2x1xf32>
    %c0_5 = arith.constant 0 : index
    %c0_6 = arith.constant 0 : index
    %6 = vector.load %arg3[%c0_5, %c0_6] : memref<1x8xf32, #tpu.memory_space<vmem>>, vector<1x8xf32>
    %cst_7 = arith.constant dense<0.000000e+00> : vector<2x8xf32>
    %7 = tpu.matmul %5, %6, %cst_7 {dimension_numbers = #tpu.dot_dimension_numbers<[1], [0], [0], [1], [0, 0, 1, 1], [], []>} : vector<2x1xf32>, vector<1x8xf32>, vector<2x8xf32> -> vector<2x8xf32>
    %cst_8 = arith.constant 0.000000e+00 : f32
    %8 = vector.broadcast %cst_8 : f32 to vector<2x8xf32>
    %9 = arith.subf %8, %7 : vector<2x8xf32>
    %10 = math.exp %9 : vector<2x8xf32>
    %cst_9 = arith.constant 1.000000e+00 : f32
    %11 = vector.broadcast %cst_9 : f32 to vector<2x8xf32>
    %12 = arith.addf %11, %10 : vector<2x8xf32>
    %13 = tpu.reciprocal %12 {approx = true} : vector<2x8xf32> -> vector<2x8xf32>
    %14 = vector.shape_cast %13 : vector<2x8xf32> to vector<2x1x8xf32>
    %c0_10 = arith.constant 0 : index
    %c0_11 = arith.constant 0 : index
    %c0_12 = arith.constant 0 : index
    %15 = vector.load %arg4[%c0_10, %c0_11, %c0_12] : memref<2x1x8xf32, #tpu.memory_space<vmem>>, vector<2x1x8xf32>
    tpu.vector_store %arg4[%c0_10, %c0_11, %c0_12], %14 {strides = array<i32>} : memref<2x1x8xf32, #tpu.memory_space<vmem>>, vector<2x1x8xf32>,
    return
  }
  func.func @transform_0(%arg0: i32) -> (i32, i32, i32) {
    %c0_i32 = arith.constant 0 : i32
    %c0_i32_0 = arith.constant 0 : i32
    %c0_i32_1 = arith.constant 0 : i32
    %c0_i32_2 = arith.constant 0 : i32
    return %c0_i32, %c0_i32_0, %c0_i32_1 : i32, i32, i32
  }
  func.func @transform_1(%arg0: i32) -> (i32, i32) {
    %c0_i32 = arith.constant 0 : i32
    %c0_i32_0 = arith.constant 0 : i32
    %c0_i32_1 = arith.constant 0 : i32
    return %c0_i32, %c0_i32_0 : i32, i32
  }
  func.func @transform_2(%arg0: i32) -> (i32, i32) {
    %c0_i32 = arith.constant 0 : i32
    %c0_i32_0 = arith.constant 0 : i32
    %c0_i32_1 = arith.constant 0 : i32
    return %c0_i32, %c0_i32_0 : i32, i32
  }
  func.func @transform_3(%arg0: i32) -> (i32, i32, i32) {
    %c0_i32 = arith.constant 0 : i32
    %c0_i32_0 = arith.constant 0 : i32
    %c0_i32_1 = arith.constant 0 : i32
    %c0_i32_2 = arith.constant 0 : i32
    return %c0_i32, %c0_i32_0, %c0_i32_1 : i32, i32, i32
  }
}

module attributes {stable_mosaic.version = 11 : i64} {
  func.func @_se_apply_kernel(%arg0: i32, %arg1: i32, %arg2: memref<1x8x16x8xf32, #tpu.memory_space<vmem>>, %arg3: memref<1x8x16x8xf32, #tpu.memory_space<vmem>>, %arg4: memref<1x1x8xf32, #tpu.memory_space<vmem>>, %arg5: memref<1x8x16x8xf32, #tpu.memory_space<vmem>>) attributes {dimension_semantics = [#tpu.dimension_semantics<parallel>, #tpu.dimension_semantics<parallel>], iteration_bounds = array<i64: 2, 2>, scalar_prefetch = 0 : i64, scratch_operands = 0 : i64, tpu.core_type = #tpu.core_type<tc>, window_params = [{transform_indices = @transform_0, window_bounds = array<i64: 1, 8, 16, 8>}, {transform_indices = @transform_1, window_bounds = array<i64: 1, 8, 16, 8>}, {transform_indices = @transform_2, window_bounds = array<i64: 1, 1, 8>}, {transform_indices = @transform_3, window_bounds = array<i64: 1, 8, 16, 8>}]} {
    %c0 = arith.constant 0 : index
    %c0_0 = arith.constant 0 : index
    %c0_1 = arith.constant 0 : index
    %c0_2 = arith.constant 0 : index
    %0 = vector.load %arg2[%c0, %c0_0, %c0_1, %c0_2] : memref<1x8x16x8xf32, #tpu.memory_space<vmem>>, vector<1x8x16x8xf32>
    %1 = vector.shape_cast %0 : vector<1x8x16x8xf32> to vector<8x16x8xf32>
    %c0_3 = arith.constant 0 : index
    %c0_4 = arith.constant 0 : index
    %c0_5 = arith.constant 0 : index
    %c0_6 = arith.constant 0 : index
    %2 = vector.load %arg3[%c0_3, %c0_4, %c0_5, %c0_6] : memref<1x8x16x8xf32, #tpu.memory_space<vmem>>, vector<1x8x16x8xf32>
    %3 = vector.shape_cast %2 : vector<1x8x16x8xf32> to vector<8x16x8xf32>
    %4 = arith.addf %1, %3 : vector<8x16x8xf32>
    %c0_7 = arith.constant 0 : index
    %c0_8 = arith.constant 0 : index
    %c0_9 = arith.constant 0 : index
    %5 = vector.load %arg4[%c0_7, %c0_8, %c0_9] : memref<1x1x8xf32, #tpu.memory_space<vmem>>, vector<1x1x8xf32>
    %6 = vector.shape_cast %5 : vector<1x1x8xf32> to vector<1x8xf32>
    %7 = vector.shape_cast %6 : vector<1x8xf32> to vector<1x1x8xf32>
    %8 = vector.broadcast %7 : vector<1x1x8xf32> to vector<8x16x8xf32>
    %9 = arith.mulf %4, %8 : vector<8x16x8xf32>
    %c0_10 = arith.constant 0 : index
    %c0_11 = arith.constant 0 : index
    %c0_12 = arith.constant 0 : index
    %c0_13 = arith.constant 0 : index
    %10 = vector.load %arg5[%c0_10, %c0_11, %c0_12, %c0_13] : memref<1x8x16x8xf32, #tpu.memory_space<vmem>>, vector<1x8x16x8xf32>
    %11 = vector.shape_cast %10 : vector<1x8x16x8xf32> to vector<8x16x8xf32>
    %12 = vector.shape_cast %9 : vector<8x16x8xf32> to vector<1x8x16x8xf32>
    tpu.vector_store %arg5[%c0_10, %c0_11, %c0_12, %c0_13], %12 {strides = array<i32>} : memref<1x8x16x8xf32, #tpu.memory_space<vmem>>, vector<1x8x16x8xf32>,
    return
  }
  func.func @transform_0(%arg0: i32, %arg1: i32) -> (i32, i32, i32, i32) {
    %c0_i32 = arith.constant 0 : i32
    %c0_i32_0 = arith.constant 0 : i32
    %c0_i32_1 = arith.constant 0 : i32
    return %arg0, %arg1, %c0_i32, %c0_i32_0 : i32, i32, i32, i32
  }
  func.func @transform_1(%arg0: i32, %arg1: i32) -> (i32, i32, i32, i32) {
    %c0_i32 = arith.constant 0 : i32
    %c0_i32_0 = arith.constant 0 : i32
    %c0_i32_1 = arith.constant 0 : i32
    return %arg0, %arg1, %c0_i32, %c0_i32_0 : i32, i32, i32, i32
  }
  func.func @transform_2(%arg0: i32, %arg1: i32) -> (i32, i32, i32) {
    %c0_i32 = arith.constant 0 : i32
    %c0_i32_0 = arith.constant 0 : i32
    %c0_i32_1 = arith.constant 0 : i32
    return %arg0, %c0_i32, %c0_i32_0 : i32, i32, i32
  }
  func.func @transform_3(%arg0: i32, %arg1: i32) -> (i32, i32, i32, i32) {
    %c0_i32 = arith.constant 0 : i32
    %c0_i32_0 = arith.constant 0 : i32
    %c0_i32_1 = arith.constant 0 : i32
    return %arg0, %arg1, %c0_i32, %c0_i32_0 : i32, i32, i32, i32
  }
}

</mosaic_0001>

<llo_original>
// kernel: resnet_block_forward.13
$region0: #{resnet_block_forward.13}
  #allocation0 [shape = 'u32[]', space=smem, size = 0x4, offset = 0x4, fixed_abs, tag = 'smem constant byte address 0x4 - core index']
  #allocation1 [shape = 'u32[72,128]{1,0:T(1,128)}', space=vmem, size = 0x9000, scoped, tag = 'internal scratch']
  %s0 = inlined_call_operand.vmem [shape: f32[512,4], index: 0, kind: input, shape index: {}]
  %s1 = inlined_call_operand.vmem [shape: f32[1,4], index: 1, kind: input, shape index: {}]
  %s2 = inlined_call_operand.vmem [shape: f32[1,4], index: 2, kind: input, shape index: {}]
  %s3 = inlined_call_operand.vmem [shape: f32[512,4], index: 3, kind: output, shape index: {}]
  %s4 = sld [smem:[#allocation0]]
  $region45: #{resnet_block_forward.13} parent=0
    _
  %s6 = ssub.s32 1, %s4
  %s7 = scalar_select 0, %s6, %s4
  loop: start=0, step=1, limit=4
  $region2: #{resnet_block_forward.13} parent=0 // loop_pre_header
    _
  $region3: #{resnet_block_forward.13} parent=0 // loop_header
    %s9 = sphi 0, %s13
    %p10 = scmp.ge.s32.totalorder %s9, 4
    %s19 = sphi 0, %s21
    %s22 = sphi 0, %s19
    %s23 = sphi 0, %s22
    %s39 = sphi 0, %s23
    %s43 = sphi 0, %s43
    %s45 = sphi 0, %s43
    %s46 = sphi 0, %s45
    %s60 = sphi 0, %s46
    %s64 = sphi 0, %s64
    %s66 = sphi 0, %s64
    %s67 = sphi 0, %s66
    %s81 = sphi 0, %s67
    %s87 = sphi 0, %s89
    %s90 = sphi 0, %s87
    %s91 = sphi 0, %s90
    %s107 = sphi 0, %s91
  $region4: #{resnet_block_forward.13} parent=0 // loop_header_branch
    %12 = sbr.rel (%p10) target = $region8
  $region5: #{resnet_block_forward.13} parent=0 // loop_body
    %s14 = ssub.s32 %s9, 1
    %s15 = ssub.s32 %s9, 2
    %s16 = sadd.s32 %s9, 1
    %s17 = ssub.s32 %s9, %s16
    %p18 = scmp.eq.s32.totalorder %s17, 0
    %s20 = sadd.s32 %s19, 1
    %s21 = scalar_select %p18, %s19, %s20
    %p24 = pneg %p18
    %p25 = scmp.eq.s32.totalorder %s9, 1
    %p26 = por %p24, %p25
    %p27 = scmp.ne.s32.totalorder %s19, %s22
    %p28 = scmp.eq.s32.totalorder %s9, 0
    %p29 = por %p27, %p28
    %p30 = scmp.ne.s32.totalorder %s19, %s22
    %p31 = scmp.eq.s32.totalorder %s14, 1
    %p32 = por %p30, %p31
    %p33 = scmp.ne.s32.totalorder %s22, %s23
    %p34 = scmp.eq.s32.totalorder %s14, 0
    %p35 = por %p33, %p34
    %p36 = scmp.ne.s32.totalorder %s22, %s23
    %p37 = scmp.eq.s32.totalorder %s15, 1
    %p38 = por %p36, %p37
    %p40 = scmp.ne.s32.totalorder %s23, %s39
    %p41 = scmp.eq.s32.totalorder %s15, 0
    %p42 = por %p40, %p41
    %s44 = sadd.s32 %s43, 1
    %p47 = scmp.eq.s32.totalorder %s9, 1
    %p48 = scmp.ne.s32.totalorder %s43, %s45
    %p49 = scmp.eq.s32.totalorder %s9, 0
    %p50 = por %p48, %p49
    %p51 = scmp.ne.s32.totalorder %s43, %s45
    %p52 = scmp.eq.s32.totalorder %s14, 1
    %p53 = por %p51, %p52
    %p54 = scmp.ne.s32.totalorder %s45, %s46
    %p55 = scmp.eq.s32.totalorder %s14, 0
    %p56 = por %p54, %p55
    %p57 = scmp.ne.s32.totalorder %s45, %s46
    %p58 = scmp.eq.s32.totalorder %s15, 1
    %p59 = por %p57, %p58
    %p61 = scmp.ne.s32.totalorder %s46, %s60
    %p62 = scmp.eq.s32.totalorder %s15, 0
    %p63 = por %p61, %p62
    %s65 = sadd.s32 %s64, 1
    %p68 = scmp.eq.s32.totalorder %s9, 1
    %p69 = scmp.ne.s32.totalorder %s64, %s66
    %p70 = scmp.eq.s32.totalorder %s9, 0
    %p71 = por %p69, %p70
    %p72 = scmp.ne.s32.totalorder %s64, %s66
    %p73 = scmp.eq.s32.totalorder %s14, 1
    %p74 = por %p72, %p73
    %p75 = scmp.ne.s32.totalorder %s66, %s67
    %p76 = scmp.eq.s32.totalorder %s14, 0
    %p77 = por %p75, %p76
    %p78 = scmp.ne.s32.totalorder %s66, %s67
    %p79 = scmp.eq.s32.totalorder %s15, 1
    %p80 = por %p78, %p79
    %p82 = scmp.ne.s32.totalorder %s67, %s81
    %p83 = scmp.eq.s32.totalorder %s15, 0
    %p84 = por %p82, %p83
    %s85 = ssub.s32 %s9, %s16
    %p86 = scmp.eq.s32.totalorder %s85, 0
    %s88 = sadd.s32 %s87, 1
    %s89 = scalar_select %p86, %s87, %s88
    %p92 = pneg %p86
    %p93 = scmp.eq.s32.totalorder %s9, 1
    %p94 = por %p92, %p93
    %p95 = scmp.ne.s32.totalorder %s87, %s90
    %p96 = scmp.eq.s32.totalorder %s9, 0
    %p97 = por %p95, %p96
    %p98 = scmp.ne.s32.totalorder %s87, %s90
    %p99 = scmp.eq.s32.totalorder %s14, 1
    %p100 = por %p98, %p99
    %p101 = scmp.ne.s32.totalorder %s90, %s91
    %p102 = scmp.eq.s32.totalorder %s14, 0
    %p103 = por %p101, %p102
    %p104 = scmp.ne.s32.totalorder %s90, %s91
    %p105 = scmp.eq.s32.totalorder %s15, 1
    %p106 = por %p104, %p105
    %p108 = scmp.ne.s32.totalorder %s91, %s107
    %p109 = scmp.eq.s32.totalorder %s15, 0
    %p110 = por %p108, %p109
    %p111 = scmp.le.s32.totalorder 1, %s9
    %p112 = scmp.lt.s32.totalorder %s9, 3
    %p113 = pnand %p111, %p112
    %p114 = pneg %p113
    // Predicated region
    $region9: #{resnet_block_forward.13} parent=5 // pred_check
      _
    $region10: #{resnet_block_forward.13} parent=5 // pred_check_branch
      %116 = sbr.rel (%p113) target = $region12
    $region11: #{resnet_block_forward.13} parent=5 // pred_region
      %s117 = ssub.s32 %s9, 1
      // Predicated region
      $region13: #{resnet_block_forward.13} parent=11 // pred_check
        %p118 = pneg %p56
      $region14: #{resnet_block_forward.13} parent=11 // pred_check_branch
        %120 = sbr.rel (%p118) target = $region16
      $region15: #{resnet_block_forward.13} parent=11 // pred_region
        _
      $region16: #{resnet_block_forward.13} parent=11 // pred_fallthru
        _
      // Predicated region
      $region17: #{resnet_block_forward.13} parent=11 // pred_check
        %p121 = pneg %p77
      $region18: #{resnet_block_forward.13} parent=11 // pred_check_branch
        %123 = sbr.rel (%p121) target = $region20
      $region19: #{resnet_block_forward.13} parent=11 // pred_region
        _
      $region20: #{resnet_block_forward.13} parent=11 // pred_fallthru
        _
    $region12: #{resnet_block_forward.13} parent=5 // pred_fallthru
      _
    %p124 = scmp.lt.s32.totalorder %s9, 2
    // Predicated region
    $region21: #{resnet_block_forward.13} parent=5 // pred_check
      %p125 = pneg %p124
    $region22: #{resnet_block_forward.13} parent=5 // pred_check_branch
      %127 = sbr.rel (%p125) target = $region24
    $region23: #{resnet_block_forward.13} parent=5 // pred_region
      // Predicated region
      $region25: #{resnet_block_forward.13} parent=23 // pred_check
        %p128 = pneg %p29
      $region26: #{resnet_block_forward.13} parent=23 // pred_check_branch
        %130 = sbr.rel (%p128) target = $region28
      $region27: #{resnet_block_forward.13} parent=23 // pred_region
        %s131 = smul.u32 32, %s9
        %p132 = scmp.lt.s32.totalorder %s131, 63
        %s133 = scalar_select %p132, %s131, 63
        %s134 = smul.addr %s133, 8
        %s135 = scalar_lea.vmem %s0, %s134
        %s136 = smul.u32 32, %s9
      $region28: #{resnet_block_forward.13} parent=23 // pred_fallthru
        _
    $region24: #{resnet_block_forward.13} parent=5 // pred_fallthru
      _
    %p137 = scmp.le.s32.totalorder 1, %s9
    %p138 = scmp.lt.s32.totalorder %s9, 3
    %p139 = pnand %p137, %p138
    %p140 = pneg %p139
    // Predicated region
    $region29: #{resnet_block_forward.13} parent=5 // pred_check
      _
    $region30: #{resnet_block_forward.13} parent=5 // pred_check_branch
      %142 = sbr.rel (%p139) target = $region32
    $region31: #{resnet_block_forward.13} parent=5 // pred_region
      %s143 = ssub.s32 %s9, 1
      %s144 = smul.u32 32, %s14
      %p145 = scmp.lt.s32.totalorder %s144, 63
      %s146 = scalar_select %p145, %s144, 63
      %s147 = smul.addr %s146, 8
      %s148 = scalar_lea.vmem %s0, %s147
      %p149 = pneg %p35
      %p150 = pneg %p32
      %p151 = pneg %p56
      %p152 = pneg %p53
      %p153 = pneg %p77
      %p154 = pneg %p74
      %p155 = pneg %p103
      %p156 = pneg %p100
      %s157 = smul.u32 32, %s14
      %p158 = scmp.lt.s32.totalorder %s157, 63
      %s159 = scalar_select %p158, %s157, 63
      %s160 = smul.addr %s159, 8
      %s161 = scalar_lea.vmem %s3, %s160
      %s162 = smul.u32 32, %s14
      %p163 = scmp.lt.s32.totalorder %s162, 63
      %s164 = scalar_select %p163, %s162, 63
      %s165 = smul.addr %s164, 8
      %s166 = scalar_lea.vmem %s0, %s165
      %s167 = smul.u32 32, %s14
      %s168 = smul.u32 32, %s14
      %p169 = scmp.lt.s32.totalorder %s168, 63
      %s170 = scalar_select %p169, %s168, 63
      %s171 = smul.addr %s170, 8
      %s172 = scalar_lea.vmem %s3, %s171
      %s173 = smul.u32 32, %s14
      %v174 = vld [vmem:[%s166] sm:$0xff]
      %v175 = vld [vmem:[%s166 + $0x8] sm:$0xff]
      %v176 = vld [vmem:[%s166 + $0x10] sm:$0xff]
      %v177 = vld [vmem:[%s166 + $0x18] sm:$0xff]
      %v178 = vld [vmem:[%s166 + $0x20] sm:$0xff]
      %v179 = vld [vmem:[%s166 + $0x28] sm:$0xff]
      %v180 = vld [vmem:[%s166 + $0x30] sm:$0xff]
      %v181 = vld [vmem:[%s166 + $0x38] sm:$0xff]
      %v182 = vld [vmem:[%s166 + $0x40] sm:$0xff]
      %v183 = vld [vmem:[%s166 + $0x48] sm:$0xff]
      %v184 = vld [vmem:[%s166 + $0x50] sm:$0xff]
      %v185 = vld [vmem:[%s166 + $0x58] sm:$0xff]
      %v186 = vld [vmem:[%s166 + $0x60] sm:$0xff]
      %v187 = vld [vmem:[%s166 + $0x68] sm:$0xff]
      %v188 = vld [vmem:[%s166 + $0x70] sm:$0xff]
      %v189 = vld [vmem:[%s166 + $0x78] sm:$0xff]
      %v190 = vld [vmem:[%s166 + $0x80] sm:$0xff]
      %v191 = vld [vmem:[%s166 + $0x88] sm:$0xff]
      %v192 = vld [vmem:[%s166 + $0x90] sm:$0xff]
      %v193 = vld [vmem:[%s166 + $0x98] sm:$0xff]
      %v194 = vld [vmem:[%s166 + $0xa0] sm:$0xff]
      %v195 = vld [vmem:[%s166 + $0xa8] sm:$0xff]
      %v196 = vld [vmem:[%s166 + $0xb0] sm:$0xff]
      %v197 = vld [vmem:[%s166 + $0xb8] sm:$0xff]
      %v198 = vld [vmem:[%s166 + $0xc0] sm:$0xff]
      %v199 = vld [vmem:[%s166 + $0xc8] sm:$0xff]
      %v200 = vld [vmem:[%s166 + $0xd0] sm:$0xff]
      %v201 = vld [vmem:[%s166 + $0xd8] sm:$0xff]
      %v202 = vld [vmem:[%s166 + $0xe0] sm:$0xff]
      %v203 = vld [vmem:[%s166 + $0xe8] sm:$0xff]
      %v204 = vld [vmem:[%s166 + $0xf0] sm:$0xff]
      %v205 = vld [vmem:[%s166 + $0xf8] sm:$0xff]
      %v206 = vld [vmem:[%s1] sm:$0x1]
      %v208 = vperm.slane %v206, 0
      %v210 = vmul.f32 %v174, %v208
      %v211 = vmul.f32 %v175, %v208
      %v212 = vmul.f32 %v176, %v208
      %v213 = vmul.f32 %v177, %v208
      %v214 = vmul.f32 %v178, %v208
      %v215 = vmul.f32 %v179, %v208
      %v216 = vmul.f32 %v180, %v208
      %v217 = vmul.f32 %v181, %v208
      %v218 = vmul.f32 %v182, %v208
      %v219 = vmul.f32 %v183, %v208
      %v220 = vmul.f32 %v184, %v208
      %v221 = vmul.f32 %v185, %v208
      %v222 = vmul.f32 %v186, %v208
      %v223 = vmul.f32 %v187, %v208
      %v224 = vmul.f32 %v188, %v208
      %v225 = vmul.f32 %v189, %v208
      %v226 = vmul.f32 %v190, %v208
      %v227 = vmul.f32 %v191, %v208
      %v228 = vmul.f32 %v192, %v208
      %v229 = vmul.f32 %v193, %v208
      %v230 = vmul.f32 %v194, %v208
      %v231 = vmul.f32 %v195, %v208
      %v232 = vmul.f32 %v196, %v208
      %v233 = vmul.f32 %v197, %v208
      %v234 = vmul.f32 %v198, %v208
      %v235 = vmul.f32 %v199, %v208
      %v236 = vmul.f32 %v200, %v208
      %v237 = vmul.f32 %v201, %v208
      %v238 = vmul.f32 %v202, %v208
      %v239 = vmul.f32 %v203, %v208
      %v240 = vmul.f32 %v204, %v208
      %v241 = vmul.f32 %v205, %v208
      %v242 = vld [vmem:[%s2] sm:$0x1]
      %v244 = vperm.slane %v242, 0
      %v246 = vadd.f32 %v210, %v244
      %v247 = vadd.f32 %v211, %v244
      %v248 = vadd.f32 %v212, %v244
      %v249 = vadd.f32 %v213, %v244
      %v250 = vadd.f32 %v214, %v244
      %v251 = vadd.f32 %v215, %v244
      %v252 = vadd.f32 %v216, %v244
      %v253 = vadd.f32 %v217, %v244
      %v254 = vadd.f32 %v218, %v244
      %v255 = vadd.f32 %v219, %v244
      %v256 = vadd.f32 %v220, %v244
      %v257 = vadd.f32 %v221, %v244
      %v258 = vadd.f32 %v222, %v244
      %v259 = vadd.f32 %v223, %v244
      %v260 = vadd.f32 %v224, %v244
      %v261 = vadd.f32 %v225, %v244
      %v262 = vadd.f32 %v226, %v244
      %v263 = vadd.f32 %v227, %v244
      %v264 = vadd.f32 %v228, %v244
      %v265 = vadd.f32 %v229, %v244
      %v266 = vadd.f32 %v230, %v244
      %v267 = vadd.f32 %v231, %v244
      %v268 = vadd.f32 %v232, %v244
      %v269 = vadd.f32 %v233, %v244
      %v270 = vadd.f32 %v234, %v244
      %v271 = vadd.f32 %v235, %v244
      %v272 = vadd.f32 %v236, %v244
      %v273 = vadd.f32 %v237, %v244
      %v274 = vadd.f32 %v238, %v244
      %v275 = vadd.f32 %v239, %v244
      %v276 = vadd.f32 %v240, %v244
      %v277 = vadd.f32 %v241, %v244
      %v278 = vmax.f32 %v246, 0.0
      %v279 = vmax.f32 %v247, 0.0
      %v280 = vmax.f32 %v248, 0.0
      %v281 = vmax.f32 %v249, 0.0
      %v282 = vmax.f32 %v250, 0.0
      %v283 = vmax.f32 %v251, 0.0
      %v284 = vmax.f32 %v252, 0.0
      %v285 = vmax.f32 %v253, 0.0
      %v286 = vmax.f32 %v254, 0.0
      %v287 = vmax.f32 %v255, 0.0
      %v288 = vmax.f32 %v256, 0.0
      %v289 = vmax.f32 %v257, 0.0
      %v290 = vmax.f32 %v258, 0.0
      %v291 = vmax.f32 %v259, 0.0
      %v292 = vmax.f32 %v260, 0.0
      %v293 = vmax.f32 %v261, 0.0
      %v294 = vmax.f32 %v262, 0.0
      %v295 = vmax.f32 %v263, 0.0
      %v296 = vmax.f32 %v264, 0.0
      %v297 = vmax.f32 %v265, 0.0
      %v298 = vmax.f32 %v266, 0.0
      %v299 = vmax.f32 %v267, 0.0
      %v300 = vmax.f32 %v268, 0.0
      %v301 = vmax.f32 %v269, 0.0
      %v302 = vmax.f32 %v270, 0.0
      %v303 = vmax.f32 %v271, 0.0
      %v304 = vmax.f32 %v272, 0.0
      %v305 = vmax.f32 %v273, 0.0
      %v306 = vmax.f32 %v274, 0.0
      %v307 = vmax.f32 %v275, 0.0
      %v308 = vmax.f32 %v276, 0.0
      %v309 = vmax.f32 %v277, 0.0
      %vm310 = vcmask 31744
      %311 = vst.msk [vmem:[%s172] sm:$0xff] %vm310, %v278
      %312 = vst.msk [vmem:[%s172 + $0x8] sm:$0xff] %vm310, %v279
      %313 = vst.msk [vmem:[%s172 + $0x10] sm:$0xff] %vm310, %v280
      %314 = vst.msk [vmem:[%s172 + $0x18] sm:$0xff] %vm310, %v281
      %315 = vst.msk [vmem:[%s172 + $0x20] sm:$0xff] %vm310, %v282
      %316 = vst.msk [vmem:[%s172 + $0x28] sm:$0xff] %vm310, %v283
      %317 = vst.msk [vmem:[%s172 + $0x30] sm:$0xff] %vm310, %v284
      %318 = vst.msk [vmem:[%s172 + $0x38] sm:$0xff] %vm310, %v285
      %319 = vst.msk [vmem:[%s172 + $0x40] sm:$0xff] %vm310, %v286
      %320 = vst.msk [vmem:[%s172 + $0x48] sm:$0xff] %vm310, %v287
      %321 = vst.msk [vmem:[%s172 + $0x50] sm:$0xff] %vm310, %v288
      %322 = vst.msk [vmem:[%s172 + $0x58] sm:$0xff] %vm310, %v289
      %323 = vst.msk [vmem:[%s172 + $0x60] sm:$0xff] %vm310, %v290
      %324 = vst.msk [vmem:[%s172 + $0x68] sm:$0xff] %vm310, %v291
      %325 = vst.msk [vmem:[%s172 + $0x70] sm:$0xff] %vm310, %v292
      %326 = vst.msk [vmem:[%s172 + $0x78] sm:$0xff] %vm310, %v293
      %327 = vst.msk [vmem:[%s172 + $0x80] sm:$0xff] %vm310, %v294
      %328 = vst.msk [vmem:[%s172 + $0x88] sm:$0xff] %vm310, %v295
      %329 = vst.msk [vmem:[%s172 + $0x90] sm:$0xff] %vm310, %v296
      %330 = vst.msk [vmem:[%s172 + $0x98] sm:$0xff] %vm310, %v297
      %331 = vst.msk [vmem:[%s172 + $0xa0] sm:$0xff] %vm310, %v298
      %332 = vst.msk [vmem:[%s172 + $0xa8] sm:$0xff] %vm310, %v299
      %333 = vst.msk [vmem:[%s172 + $0xb0] sm:$0xff] %vm310, %v300
      %334 = vst.msk [vmem:[%s172 + $0xb8] sm:$0xff] %vm310, %v301
      %335 = vst.msk [vmem:[%s172 + $0xc0] sm:$0xff] %vm310, %v302
      %336 = vst.msk [vmem:[%s172 + $0xc8] sm:$0xff] %vm310, %v303
      %337 = vst.msk [vmem:[%s172 + $0xd0] sm:$0xff] %vm310, %v304
      %338 = vst.msk [vmem:[%s172 + $0xd8] sm:$0xff] %vm310, %v305
      %339 = vst.msk [vmem:[%s172 + $0xe0] sm:$0xff] %vm310, %v306
      %340 = vst.msk [vmem:[%s172 + $0xe8] sm:$0xff] %vm310, %v307
      %341 = vst.msk [vmem:[%s172 + $0xf0] sm:$0xff] %vm310, %v308
      %342 = vst.msk [vmem:[%s172 + $0xf8] sm:$0xff] %vm310, %v309
      %s343 = smul.u32 32, %s14
      %p344 = scmp.lt.s32.totalorder %s343, 63
      %s345 = scalar_select %p344, %s343, 63
      %s346 = smul.addr %s345, 8
      %s347 = scalar_lea.vmem %s3, %s346
      // Predicated region
      $region33: #{resnet_block_forward.13} parent=31 // pred_check
        %p348 = pneg %p100
      $region34: #{resnet_block_forward.13} parent=31 // pred_check_branch
        %350 = sbr.rel (%p348) target = $region36
      $region35: #{resnet_block_forward.13} parent=31 // pred_region
        %s351 = smul.u32 32, %s14
      $region36: #{resnet_block_forward.13} parent=31 // pred_fallthru
        _
    $region32: #{resnet_block_forward.13} parent=5 // pred_fallthru
      _
    %p352 = scmp.le.s32.totalorder 2, %s9
    // Predicated region
    $region37: #{resnet_block_forward.13} parent=5 // pred_check
      %p353 = pneg %p352
    $region38: #{resnet_block_forward.13} parent=5 // pred_check_branch
      %355 = sbr.rel (%p353) target = $region40
    $region39: #{resnet_block_forward.13} parent=5 // pred_region
      %s356 = ssub.s32 %s9, 2
      // Predicated region
      $region41: #{resnet_block_forward.13} parent=39 // pred_check
        %p357 = pneg %p106
      $region42: #{resnet_block_forward.13} parent=39 // pred_check_branch
        %359 = sbr.rel (%p357) target = $region44
      $region43: #{resnet_block_forward.13} parent=39 // pred_region
        %s360 = smul.u32 32, %s15
        %p361 = scmp.lt.s32.totalorder %s360, 63
        %s362 = scalar_select %p361, %s360, 63
        %s363 = smul.addr %s362, 8
        %s364 = scalar_lea.vmem %s3, %s363
      $region44: #{resnet_block_forward.13} parent=39 // pred_fallthru
        _
    $region40: #{resnet_block_forward.13} parent=5 // pred_fallthru
      _
  $region6: #{resnet_block_forward.13} parent=0 // loop_footer
    %s13 = sadd.s32 1, %s9
  $region7: #{resnet_block_forward.13} parent=0 // loop_footer_branch
    %8 = sbr.rel target = $region3
  $region8: #{resnet_block_forward.13} parent=0 // loop_exit
    _

// kernel: resnet_block_forward.20
$region0: #{resnet_block_forward.20}
  #allocation0 [shape = 'u32[]', space=smem, size = 0x4, offset = 0x4, fixed_abs, tag = 'smem constant byte address 0x4 - core index']
  #allocation1 [shape = 'u32[72,128]{1,0:T(1,128)}', space=vmem, size = 0x9000, scoped, tag = 'internal scratch']
  %s0 = inlined_call_operand.vmem [shape: f32[2,16,16,8], index: 0, kind: input, shape index: {}]
  %s1 = inlined_call_operand.vmem [shape: f32[2,16,8], index: 1, kind: output, shape index: {0}]
  %s2 = inlined_call_operand.vmem [shape: f32[2,16,8], index: 2, kind: output, shape index: {1}]
  %3 = xla_tuple %s1, %s2
  %s4 = sld [smem:[#allocation0]]
  $region53: #{resnet_block_forward.20} parent=0
    _
  %s6 = ssub.s32 1, %s4
  %s7 = scalar_select 0, %s6, %s4
  loop: start=0, step=1, limit=6
  $region2: #{resnet_block_forward.20} parent=0 // loop_pre_header
    _
  $region3: #{resnet_block_forward.20} parent=0 // loop_header
    %s9 = sphi 0, %s13
    %p10 = scmp.ge.s32.totalorder %s9, 6
    %s16 = sphi 0, %s28
    %s17 = sphi 0, %s24
    %s18 = sphi 0, %s16
    %s19 = sphi 0, %s17
    %s20 = sphi 0, %s18
    %s21 = sphi 0, %s19
    %s33 = sphi 0, %s35
    %s36 = sphi 0, %s33
    %s37 = sphi 0, %s36
    %s53 = sphi 0, %s37
    %s61 = sphi 0, %s63
    %s64 = sphi 0, %s61
    %s65 = sphi 0, %s64
    %s81 = sphi 0, %s65
    %s87 = sphi 0, %s89
    %s90 = sphi 0, %s87
    %s91 = sphi 0, %s90
    %s107 = sphi 0, %s91
  $region4: #{resnet_block_forward.20} parent=0 // loop_header_branch
    %12 = sbr.rel (%p10) target = $region8
  $region5: #{resnet_block_forward.20} parent=0 // loop_body
    %s14 = ssub.s32 %s9, 1
    %s15 = ssub.s32 %s9, 2
    %s22 = sadd.s32 1, %s17
    %p23 = scmp.ge.s32.totalorder %s22, 2
    %s24 = scalar_select %p23, 0, %s22
    %s25 = sadd.s32 1, %s16
    %s26 = scalar_select %p23, %s25, %s16
    %p27 = scmp.ge.s32.totalorder %s26, 2
    %s28 = scalar_select %p27, 0, %s26
    %s29 = ssub.s32 %s16, %s28
    %s30 = ssub.s32 %s17, %s24
    %s31 = sor.u32 %s29, %s30
    %p32 = scmp.eq.s32.totalorder %s31, 0
    %s34 = sadd.s32 %s33, 1
    %s35 = scalar_select %p32, %s33, %s34
    %p38 = pneg %p32
    %p39 = scmp.eq.s32.totalorder %s9, 3
    %p40 = por %p38, %p39
    %p41 = scmp.ne.s32.totalorder %s33, %s36
    %p42 = scmp.eq.s32.totalorder %s9, 0
    %p43 = por %p41, %p42
    %p44 = scmp.ne.s32.totalorder %s33, %s36
    %p45 = scmp.eq.s32.totalorder %s14, 3
    %p46 = por %p44, %p45
    %p47 = scmp.ne.s32.totalorder %s36, %s37
    %p48 = scmp.eq.s32.totalorder %s14, 0
    %p49 = por %p47, %p48
    %p50 = scmp.ne.s32.totalorder %s36, %s37
    %p51 = scmp.eq.s32.totalorder %s15, 3
    %p52 = por %p50, %p51
    %p54 = scmp.ne.s32.totalorder %s37, %s53
    %p55 = scmp.eq.s32.totalorder %s15, 0
    %p56 = por %p54, %p55
    %s57 = ssub.s32 %s16, %s28
    %s58 = ssub.s32 %s17, %s24
    %s59 = sor.u32 %s57, %s58
    %p60 = scmp.eq.s32.totalorder %s59, 0
    %s62 = sadd.s32 %s61, 1
    %s63 = scalar_select %p60, %s61, %s62
    %p66 = pneg %p60
    %p67 = scmp.eq.s32.totalorder %s9, 3
    %p68 = por %p66, %p67
    %p69 = scmp.ne.s32.totalorder %s61, %s64
    %p70 = scmp.eq.s32.totalorder %s9, 0
    %p71 = por %p69, %p70
    %p72 = scmp.ne.s32.totalorder %s61, %s64
    %p73 = scmp.eq.s32.totalorder %s14, 3
    %p74 = por %p72, %p73
    %p75 = scmp.ne.s32.totalorder %s64, %s65
    %p76 = scmp.eq.s32.totalorder %s14, 0
    %p77 = por %p75, %p76
    %p78 = scmp.ne.s32.totalorder %s64, %s65
    %p79 = scmp.eq.s32.totalorder %s15, 3
    %p80 = por %p78, %p79
    %p82 = scmp.ne.s32.totalorder %s65, %s81
    %p83 = scmp.eq.s32.totalorder %s15, 0
    %p84 = por %p82, %p83
    %s85 = ssub.s32 %s16, %s28
    %p86 = scmp.eq.s32.totalorder %s85, 0
    %s88 = sadd.s32 %s87, 1
    %s89 = scalar_select %p86, %s87, %s88
    %p92 = pneg %p86
    %p93 = scmp.eq.s32.totalorder %s9, 3
    %p94 = por %p92, %p93
    %p95 = scmp.ne.s32.totalorder %s87, %s90
    %p96 = scmp.eq.s32.totalorder %s9, 0
    %p97 = por %p95, %p96
    %p98 = scmp.ne.s32.totalorder %s87, %s90
    %p99 = scmp.eq.s32.totalorder %s14, 3
    %p100 = por %p98, %p99
    %p101 = scmp.ne.s32.totalorder %s90, %s91
    %p102 = scmp.eq.s32.totalorder %s14, 0
    %p103 = por %p101, %p102
    %p104 = scmp.ne.s32.totalorder %s90, %s91
    %p105 = scmp.eq.s32.totalorder %s15, 3
    %p106 = por %p104, %p105
    %p108 = scmp.ne.s32.totalorder %s91, %s107
    %p109 = scmp.eq.s32.totalorder %s15, 0
    %p110 = por %p108, %p109
    %p111 = scmp.le.s32.totalorder 1, %s9
    %p112 = scmp.lt.s32.totalorder %s9, 5
    %p113 = pnand %p111, %p112
    %p114 = pneg %p113
    // Predicated region
    $region9: #{resnet_block_forward.20} parent=5 // pred_check
      _
    $region10: #{resnet_block_forward.20} parent=5 // pred_check_branch
      %116 = sbr.rel (%p113) target = $region12
    $region11: #{resnet_block_forward.20} parent=5 // pred_region
      %s117 = ssub.s32 %s9, 1
    $region12: #{resnet_block_forward.20} parent=5 // pred_fallthru
      _
    %p118 = scmp.lt.s32.totalorder %s9, 4
    // Predicated region
    $region13: #{resnet_block_forward.20} parent=5 // pred_check
      %p119 = pneg %p118
    $region14: #{resnet_block_forward.20} parent=5 // pred_check_branch
      %121 = sbr.rel (%p119) target = $region16
    $region15: #{resnet_block_forward.20} parent=5 // pred_region
      // Predicated region
      $region17: #{resnet_block_forward.20} parent=15 // pred_check
        %p122 = pneg %p43
      $region18: #{resnet_block_forward.20} parent=15 // pred_check_branch
        %124 = sbr.rel (%p122) target = $region20
      $region19: #{resnet_block_forward.20} parent=15 // pred_region
        %s125 = smul.u32 8, %s17
        %p126 = scmp.lt.s32.totalorder %s16, 1
        %s127 = scalar_select %p126, %s16, 1
        %p128 = scmp.lt.s32.totalorder %s125, 15
        %s129 = scalar_select %p128, %s125, 15
        %s130 = smul.addr %s129, 2
        %s131 = smul.addr %s127, 32
        %s132 = sadd.s32 %s130, %s131
        %s133 = smul.addr %s132, 8
        %s134 = scalar_lea.vmem %s0, %s133
        %s135 = smul.u32 8, %s17
      $region20: #{resnet_block_forward.20} parent=15 // pred_fallthru
        _
    $region16: #{resnet_block_forward.20} parent=5 // pred_fallthru
      _
    %p136 = scmp.le.s32.totalorder 1, %s9
    %p137 = scmp.lt.s32.totalorder %s9, 5
    %p138 = pnand %p136, %p137
    %p139 = pneg %p138
    // Predicated region
    $region21: #{resnet_block_forward.20} parent=5 // pred_check
      _
    $region22: #{resnet_block_forward.20} parent=5 // pred_check_branch
      %141 = sbr.rel (%p138) target = $region24
    $region23: #{resnet_block_forward.20} parent=5 // pred_region
      %s142 = ssub.s32 %s9, 1
      %s143 = smul.u32 8, %s19
      %p144 = scmp.lt.s32.totalorder %s18, 1
      %s145 = scalar_select %p144, %s18, 1
      %p146 = scmp.lt.s32.totalorder %s143, 15
      %s147 = scalar_select %p146, %s143, 15
      %s148 = smul.addr %s147, 2
      %s149 = smul.addr %s145, 32
      %s150 = sadd.s32 %s148, %s149
      %s151 = smul.addr %s150, 8
      %s152 = scalar_lea.vmem %s0, %s151
      %p153 = pneg %p49
      %p154 = pneg %p46
      %p155 = pneg %p77
      %p156 = pneg %p74
      %p157 = scmp.lt.s32.totalorder %s18, 1
      %s158 = scalar_select %p157, %s18, 1
      %p159 = scmp.lt.s32.totalorder %s19, 1
      %s160 = scalar_select %p159, %s19, 1
      %s161 = smul.addr %s158, 2
      %s162 = sadd.s32 %s160, %s161
      %s163 = smul.addr %s162, 8
      %s164 = scalar_lea.vmem %s1, %s163
      %p165 = pneg %p103
      %p166 = pneg %p100
      %p167 = scmp.lt.s32.totalorder %s18, 1
      %s168 = scalar_select %p167, %s18, 1
      %s169 = smul.addr %s168, 2
      %s170 = smul.addr %s169, 8
      %s171 = scalar_lea.vmem %s2, %s170
      %s172 = smul.u32 8, %s19
      %p173 = scmp.lt.s32.totalorder %s18, 1
      %s174 = scalar_select %p173, %s18, 1
      %p175 = scmp.lt.s32.totalorder %s172, 15
      %s176 = scalar_select %p175, %s172, 15
      %s177 = smul.addr %s176, 2
      %s178 = smul.addr %s174, 32
      %s179 = sadd.s32 %s177, %s178
      %s180 = smul.addr %s179, 8
      %s181 = scalar_lea.vmem %s0, %s180
      %s182 = smul.u32 8, %s19
      %p183 = scmp.lt.s32.totalorder %s18, 1
      %s184 = scalar_select %p183, %s18, 1
      %p185 = scmp.lt.s32.totalorder %s19, 1
      %s186 = scalar_select %p185, %s19, 1
      %s187 = smul.addr %s184, 2
      %s188 = sadd.s32 %s186, %s187
      %s189 = smul.addr %s188, 8
      %s190 = scalar_lea.vmem %s1, %s189
      %p191 = scmp.lt.s32.totalorder %s18, 1
      %s192 = scalar_select %p191, %s18, 1
      %s193 = smul.addr %s192, 2
      %s194 = smul.addr %s193, 8
      %s195 = scalar_lea.vmem %s2, %s194
      %v196 = vld [vmem:[%s181] sm:$0xff]
      %v197 = vld [vmem:[%s181 + $0x8] sm:$0xff]
      %v198 = vld [vmem:[%s181 + $0x10] sm:$0xff]
      %v199 = vld [vmem:[%s181 + $0x18] sm:$0xff]
      %v200 = vld [vmem:[%s181 + $0x20] sm:$0xff]
      %v201 = vld [vmem:[%s181 + $0x28] sm:$0xff]
      %v202 = vld [vmem:[%s181 + $0x30] sm:$0xff]
      %v203 = vld [vmem:[%s181 + $0x38] sm:$0xff]
      %v204 = vld [vmem:[%s181 + $0x40] sm:$0xff]
      %v205 = vld [vmem:[%s181 + $0x48] sm:$0xff]
      %v206 = vld [vmem:[%s181 + $0x50] sm:$0xff]
      %v207 = vld [vmem:[%s181 + $0x58] sm:$0xff]
      %v208 = vld [vmem:[%s181 + $0x60] sm:$0xff]
      %v209 = vld [vmem:[%s181 + $0x68] sm:$0xff]
      %v210 = vld [vmem:[%s181 + $0x70] sm:$0xff]
      %v211 = vld [vmem:[%s181 + $0x78] sm:$0xff]
      %vm212 = vcmask 64512
      %v213 = vsel %vm212, %v196, 0.0
      %v214 = vsel %vm212, %v197, 0.0
      %v215 = vadd.f32 %v213, %v214
      %v216 = vrot.slane %v215, 4
      %v217 = vadd.f32 %v215, %v216
      %v218 = vrot.slane %v217, 2
      %v219 = vadd.f32 %v217, %v218
      %v220 = vrot.slane %v219, 1
      %v221 = vadd.f32 %v219, %v220
      %v222 = vsel %vm212, %v198, 0.0
      %v223 = vsel %vm212, %v199, 0.0
      %v224 = vadd.f32 %v222, %v223
      %v225 = vrot.slane %v224, 4
      %v226 = vadd.f32 %v224, %v225
      %v227 = vrot.slane %v226, 2
      %v228 = vadd.f32 %v226, %v227
      %v229 = vrot.slane %v228, 1
      %v230 = vadd.f32 %v228, %v229
      %v231 = vsel %vm212, %v200, 0.0
      %v232 = vsel %vm212, %v201, 0.0
      %v233 = vadd.f32 %v231, %v232
      %v234 = vrot.slane %v233, 4
      %v235 = vadd.f32 %v233, %v234
      %v236 = vrot.slane %v235, 2
      %v237 = vadd.f32 %v235, %v236
      %v238 = vrot.slane %v237, 1
      %v239 = vadd.f32 %v237, %v238
      %v240 = vsel %vm212, %v202, 0.0
      %v241 = vsel %vm212, %v203, 0.0
      %v242 = vadd.f32 %v240, %v241
      %v243 = vrot.slane %v242, 4
      %v244 = vadd.f32 %v242, %v243
      %v245 = vrot.slane %v244, 2
      %v246 = vadd.f32 %v244, %v245
      %v247 = vrot.slane %v246, 1
      %v248 = vadd.f32 %v246, %v247
      %v249 = vsel %vm212, %v204, 0.0
      %v250 = vsel %vm212, %v205, 0.0
      %v251 = vadd.f32 %v249, %v250
      %v252 = vrot.slane %v251, 4
      %v253 = vadd.f32 %v251, %v252
      %v254 = vrot.slane %v253, 2
      %v255 = vadd.f32 %v253, %v254
      %v256 = vrot.slane %v255, 1
      %v257 = vadd.f32 %v255, %v256
      %v258 = vsel %vm212, %v206, 0.0
      %v259 = vsel %vm212, %v207, 0.0
      %v260 = vadd.f32 %v258, %v259
      %v261 = vrot.slane %v260, 4
      %v262 = vadd.f32 %v260, %v261
      %v263 = vrot.slane %v262, 2
      %v264 = vadd.f32 %v262, %v263
      %v265 = vrot.slane %v264, 1
      %v266 = vadd.f32 %v264, %v265
      %v267 = vsel %vm212, %v208, 0.0
      %v268 = vsel %vm212, %v209, 0.0
      %v269 = vadd.f32 %v267, %v268
      %v270 = vrot.slane %v269, 4
      %v271 = vadd.f32 %v269, %v270
      %v272 = vrot.slane %v271, 2
      %v273 = vadd.f32 %v271, %v272
      %v274 = vrot.slane %v273, 1
      %v275 = vadd.f32 %v273, %v274
      %v276 = vsel %vm212, %v210, 0.0
      %v277 = vsel %vm212, %v211, 0.0
      %v278 = vadd.f32 %v276, %v277
      %v279 = vrot.slane %v278, 4
      %v280 = vadd.f32 %v278, %v279
      %v281 = vrot.slane %v280, 2
      %v282 = vadd.f32 %v280, %v281
      %v283 = vrot.slane %v282, 1
      %v284 = vadd.f32 %v282, %v283
      %v285 = vmul.f32 %v221, 0.0625
      %v286 = vmul.f32 %v230, 0.0625
      %v287 = vmul.f32 %v239, 0.0625
      %v288 = vmul.f32 %v248, 0.0625
      %v289 = vmul.f32 %v257, 0.0625
      %v290 = vmul.f32 %v266, 0.0625
      %v291 = vmul.f32 %v275, 0.0625
      %v292 = vmul.f32 %v284, 0.0625
      %vm301 = vcmask 1041409
      %v302 = vsel %vm301, %v286, %v285
      %vm303 = vcmask 1042434
      %v304 = vsel %vm303, %v287, %v302
      %vm305 = vcmask 1043459
      %v306 = vsel %vm305, %v288, %v304
      %vm307 = vcmask 1044484
      %v308 = vsel %vm307, %v289, %v306
      %vm309 = vcmask 1045509
      %v310 = vsel %vm309, %v290, %v308
      %vm311 = vcmask 1046534
      %v312 = vsel %vm311, %v291, %v310
      %vm313 = vcmask 1047559
      %v314 = vsel %vm313, %v292, %v312
      %316 = vst.msk [vmem:[%s190] sm:$0xff] %vm212, %v314
      %p317 = scmp.eq.s32.totalorder %s19, 0
      // Predicated region
      $region25: #{resnet_block_forward.20} parent=23 // pred_check
        %p318 = pneg %p317
      $region26: #{resnet_block_forward.20} parent=23 // pred_check_branch
        %320 = sbr.rel (%p318) target = $region28
      $region27: #{resnet_block_forward.20} parent=23 // pred_region
        %321 = vst.msk [vmem:[%s195] sm:$0xff] %vm212, 0.0
        %322 = vst.msk [vmem:[%s195 + $0x8] sm:$0xff] %vm212, 0.0
      $region28: #{resnet_block_forward.20} parent=23 // pred_fallthru
        _
      %v323 = vld [vmem:[%s195] sm:$0xff]
      %v324 = vld [vmem:[%s195 + $0x8] sm:$0xff]
      %v325 = vadd.f32 %v213, %v222
      %v326 = vadd.f32 %v325, %v231
      %v327 = vadd.f32 %v326, %v240
      %v328 = vadd.f32 %v327, %v249
      %v329 = vadd.f32 %v328, %v258
      %v330 = vadd.f32 %v329, %v267
      %v331 = vadd.f32 %v330, %v276
      %v332 = vadd.f32 %v214, %v223
      %v333 = vadd.f32 %v332, %v232
      %v334 = vadd.f32 %v333, %v241
      %v335 = vadd.f32 %v334, %v250
      %v336 = vadd.f32 %v335, %v259
      %v337 = vadd.f32 %v336, %v268
      %v338 = vadd.f32 %v337, %v277
      %v339 = vadd.f32 %v323, %v331
      %v340 = vadd.f32 %v324, %v338
      %341 = vst.msk [vmem:[%s195] sm:$0xff] %vm212, %v339
      %342 = vst.msk [vmem:[%s195 + $0x8] sm:$0xff] %vm212, %v340
      %p343 = scmp.eq.s32.totalorder %s19, 1
      // Predicated region
      $region29: #{resnet_block_forward.20} parent=23 // pred_check
        %p344 = pneg %p343
      $region30: #{resnet_block_forward.20} parent=23 // pred_check_branch
        %346 = sbr.rel (%p344) target = $region32
      $region31: #{resnet_block_forward.20} parent=23 // pred_region
        %v347 = vld [vmem:[%s195] sm:$0xff]
        %v348 = vld [vmem:[%s195 + $0x8] sm:$0xff]
        %v349 = vmul.f32 %v347, 0.0625
        %v350 = vmul.f32 %v348, 0.0625
        %351 = vst.msk [vmem:[%s195] sm:$0xff] %vm212, %v349
        %352 = vst.msk [vmem:[%s195 + $0x8] sm:$0xff] %vm212, %v350
      $region32: #{resnet_block_forward.20} parent=23 // pred_fallthru
        _
      %p353 = scmp.lt.s32.totalorder %s18, 1
      %s354 = scalar_select %p353, %s18, 1
      %p355 = scmp.lt.s32.totalorder %s19, 1
      %s356 = scalar_select %p355, %s19, 1
      %s357 = smul.addr %s354, 2
      %s358 = sadd.s32 %s356, %s357
      %s359 = smul.addr %s358, 8
      %s360 = scalar_lea.vmem %s1, %s359
      %p361 = scmp.lt.s32.totalorder %s18, 1
      %s362 = scalar_select %p361, %s18, 1
      %s363 = smul.addr %s362, 2
      %s364 = smul.addr %s363, 8
      %s365 = scalar_lea.vmem %s2, %s364
      // Predicated region
      $region33: #{resnet_block_forward.20} parent=23 // pred_check
        %p366 = pneg %p74
      $region34: #{resnet_block_forward.20} parent=23 // pred_check_branch
        %368 = sbr.rel (%p366) target = $region36
      $region35: #{resnet_block_forward.20} parent=23 // pred_region
        _
      $region36: #{resnet_block_forward.20} parent=23 // pred_fallthru
        _
      // Predicated region
      $region37: #{resnet_block_forward.20} parent=23 // pred_check
        %p369 = pneg %p100
      $region38: #{resnet_block_forward.20} parent=23 // pred_check_branch
        %371 = sbr.rel (%p369) target = $region40
      $region39: #{resnet_block_forward.20} parent=23 // pred_region
        _
      $region40: #{resnet_block_forward.20} parent=23 // pred_fallthru
        _
    $region24: #{resnet_block_forward.20} parent=5 // pred_fallthru
      _
    %p372 = scmp.le.s32.totalorder 2, %s9
    // Predicated region
    $region41: #{resnet_block_forward.20} parent=5 // pred_check
      %p373 = pneg %p372
    $region42: #{resnet_block_forward.20} parent=5 // pred_check_branch
      %375 = sbr.rel (%p373) target = $region44
    $region43: #{resnet_block_forward.20} parent=5 // pred_region
      %s376 = ssub.s32 %s9, 2
      // Predicated region
      $region45: #{resnet_block_forward.20} parent=43 // pred_check
        %p377 = pneg %p80
      $region46: #{resnet_block_forward.20} parent=43 // pred_check_branch
        %379 = sbr.rel (%p377) target = $region48
      $region47: #{resnet_block_forward.20} parent=43 // pred_region
        %p380 = scmp.lt.s32.totalorder %s20, 1
        %s381 = scalar_select %p380, %s20, 1
        %p382 = scmp.lt.s32.totalorder %s21, 1
        %s383 = scalar_select %p382, %s21, 1
        %s384 = smul.addr %s381, 2
        %s385 = sadd.s32 %s383, %s384
        %s386 = smul.addr %s385, 8
        %s387 = scalar_lea.vmem %s1, %s386
      $region48: #{resnet_block_forward.20} parent=43 // pred_fallthru
        _
      // Predicated region
      $region49: #{resnet_block_forward.20} parent=43 // pred_check
        %p388 = pneg %p106
      $region50: #{resnet_block_forward.20} parent=43 // pred_check_branch
        %390 = sbr.rel (%p388) target = $region52
      $region51: #{resnet_block_forward.20} parent=43 // pred_region
        %p391 = scmp.lt.s32.totalorder %s20, 1
        %s392 = scalar_select %p391, %s20, 1
        %s393 = smul.addr %s392, 2
        %s394 = smul.addr %s393, 8
        %s395 = scalar_lea.vmem %s2, %s394
      $region52: #{resnet_block_forward.20} parent=43 // pred_fallthru
        _
    $region44: #{resnet_block_forward.20} parent=5 // pred_fallthru
      _
  $region6: #{resnet_block_forward.20} parent=0 // loop_footer
    %s13 = sadd.s32 1, %s9
  $region7: #{resnet_block_forward.20} parent=0 // loop_footer_branch
    %8 = sbr.rel target = $region3
  $region8: #{resnet_block_forward.20} parent=0 // loop_exit
    _

// kernel: resnet_block_forward.19
$region0: #{resnet_block_forward.19}
  #allocation0 [shape = 'u32[]', space=smem, size = 0x4, offset = 0x4, fixed_abs, tag = 'smem constant byte address 0x4 - core index']
  #allocation1 [shape = 'u32[72,128]{1,0:T(1,128)}', space=vmem, size = 0x9000, scoped, tag = 'internal scratch']
  %s0 = inlined_call_operand.vmem [shape: bf16[512,4], index: 0, kind: input, shape index: {}]
  %s1 = inlined_call_operand.vmem [shape: bf16[4,8], index: 1, kind: input, shape index: {}]
  %s2 = inlined_call_operand.vmem [shape: f32[1,8], index: 2, kind: input, shape index: {}]
  %s3 = inlined_call_operand.vmem [shape: f32[1,8], index: 3, kind: input, shape index: {}]
  %s4 = inlined_call_operand.vmem [shape: f32[512,8], index: 4, kind: output, shape index: {}]
  %s5 = sld [smem:[#allocation0]]
  $region49: #{resnet_block_forward.19} parent=0
    _
  %s7 = ssub.s32 1, %s5
  %s8 = scalar_select 0, %s7, %s5
  loop: start=0, step=1, limit=4
  $region2: #{resnet_block_forward.19} parent=0 // loop_pre_header
    _
  $region3: #{resnet_block_forward.19} parent=0 // loop_header
    %s10 = sphi 0, %s14
    %p11 = scmp.ge.s32.totalorder %s10, 4
    %s20 = sphi 0, %s22
    %s23 = sphi 0, %s20
    %s24 = sphi 0, %s23
    %s40 = sphi 0, %s24
    %s44 = sphi 0, %s44
    %s46 = sphi 0, %s44
    %s47 = sphi 0, %s46
    %s61 = sphi 0, %s47
    %s65 = sphi 0, %s65
    %s67 = sphi 0, %s65
    %s68 = sphi 0, %s67
    %s82 = sphi 0, %s68
    %s86 = sphi 0, %s86
    %s88 = sphi 0, %s86
    %s89 = sphi 0, %s88
    %s103 = sphi 0, %s89
    %s109 = sphi 0, %s111
    %s112 = sphi 0, %s109
    %s113 = sphi 0, %s112
    %s129 = sphi 0, %s113
  $region4: #{resnet_block_forward.19} parent=0 // loop_header_branch
    %13 = sbr.rel (%p11) target = $region8
  $region5: #{resnet_block_forward.19} parent=0 // loop_body
    %s15 = ssub.s32 %s10, 1
    %s16 = ssub.s32 %s10, 2
    %s17 = sadd.s32 %s10, 1
    %s18 = ssub.s32 %s10, %s17
    %p19 = scmp.eq.s32.totalorder %s18, 0
    %s21 = sadd.s32 %s20, 1
    %s22 = scalar_select %p19, %s20, %s21
    %p25 = pneg %p19
    %p26 = scmp.eq.s32.totalorder %s10, 1
    %p27 = por %p25, %p26
    %p28 = scmp.ne.s32.totalorder %s20, %s23
    %p29 = scmp.eq.s32.totalorder %s10, 0
    %p30 = por %p28, %p29
    %p31 = scmp.ne.s32.totalorder %s20, %s23
    %p32 = scmp.eq.s32.totalorder %s15, 1
    %p33 = por %p31, %p32
    %p34 = scmp.ne.s32.totalorder %s23, %s24
    %p35 = scmp.eq.s32.totalorder %s15, 0
    %p36 = por %p34, %p35
    %p37 = scmp.ne.s32.totalorder %s23, %s24
    %p38 = scmp.eq.s32.totalorder %s16, 1
    %p39 = por %p37, %p38
    %p41 = scmp.ne.s32.totalorder %s24, %s40
    %p42 = scmp.eq.s32.totalorder %s16, 0
    %p43 = por %p41, %p42
    %s45 = sadd.s32 %s44, 1
    %p48 = scmp.eq.s32.totalorder %s10, 1
    %p49 = scmp.ne.s32.totalorder %s44, %s46
    %p50 = scmp.eq.s32.totalorder %s10, 0
    %p51 = por %p49, %p50
    %p52 = scmp.ne.s32.totalorder %s44, %s46
    %p53 = scmp.eq.s32.totalorder %s15, 1
    %p54 = por %p52, %p53
    %p55 = scmp.ne.s32.totalorder %s46, %s47
    %p56 = scmp.eq.s32.totalorder %s15, 0
    %p57 = por %p55, %p56
    %p58 = scmp.ne.s32.totalorder %s46, %s47
    %p59 = scmp.eq.s32.totalorder %s16, 1
    %p60 = por %p58, %p59
    %p62 = scmp.ne.s32.totalorder %s47, %s61
    %p63 = scmp.eq.s32.totalorder %s16, 0
    %p64 = por %p62, %p63
    %s66 = sadd.s32 %s65, 1
    %p69 = scmp.eq.s32.totalorder %s10, 1
    %p70 = scmp.ne.s32.totalorder %s65, %s67
    %p71 = scmp.eq.s32.totalorder %s10, 0
    %p72 = por %p70, %p71
    %p73 = scmp.ne.s32.totalorder %s65, %s67
    %p74 = scmp.eq.s32.totalorder %s15, 1
    %p75 = por %p73, %p74
    %p76 = scmp.ne.s32.totalorder %s67, %s68
    %p77 = scmp.eq.s32.totalorder %s15, 0
    %p78 = por %p76, %p77
    %p79 = scmp.ne.s32.totalorder %s67, %s68
    %p80 = scmp.eq.s32.totalorder %s16, 1
    %p81 = por %p79, %p80
    %p83 = scmp.ne.s32.totalorder %s68, %s82
    %p84 = scmp.eq.s32.totalorder %s16, 0
    %p85 = por %p83, %p84
    %s87 = sadd.s32 %s86, 1
    %p90 = scmp.eq.s32.totalorder %s10, 1
    %p91 = scmp.ne.s32.totalorder %s86, %s88
    %p92 = scmp.eq.s32.totalorder %s10, 0
    %p93 = por %p91, %p92
    %p94 = scmp.ne.s32.totalorder %s86, %s88
    %p95 = scmp.eq.s32.totalorder %s15, 1
    %p96 = por %p94, %p95
    %p97 = scmp.ne.s32.totalorder %s88, %s89
    %p98 = scmp.eq.s32.totalorder %s15, 0
    %p99 = por %p97, %p98
    %p100 = scmp.ne.s32.totalorder %s88, %s89
    %p101 = scmp.eq.s32.totalorder %s16, 1
    %p102 = por %p100, %p101
    %p104 = scmp.ne.s32.totalorder %s89, %s103
    %p105 = scmp.eq.s32.totalorder %s16, 0
    %p106 = por %p104, %p105
    %s107 = ssub.s32 %s10, %s17
    %p108 = scmp.eq.s32.totalorder %s107, 0
    %s110 = sadd.s32 %s109, 1
    %s111 = scalar_select %p108, %s109, %s110
    %p114 = pneg %p108
    %p115 = scmp.eq.s32.totalorder %s10, 1
    %p116 = por %p114, %p115
    %p117 = scmp.ne.s32.totalorder %s109, %s112
    %p118 = scmp.eq.s32.totalorder %s10, 0
    %p119 = por %p117, %p118
    %p120 = scmp.ne.s32.totalorder %s109, %s112
    %p121 = scmp.eq.s32.totalorder %s15, 1
    %p122 = por %p120, %p121
    %p123 = scmp.ne.s32.totalorder %s112, %s113
    %p124 = scmp.eq.s32.totalorder %s15, 0
    %p125 = por %p123, %p124
    %p126 = scmp.ne.s32.totalorder %s112, %s113
    %p127 = scmp.eq.s32.totalorder %s16, 1
    %p128 = por %p126, %p127
    %p130 = scmp.ne.s32.totalorder %s113, %s129
    %p131 = scmp.eq.s32.totalorder %s16, 0
    %p132 = por %p130, %p131
    %p133 = scmp.le.s32.totalorder 1, %s10
    %p134 = scmp.lt.s32.totalorder %s10, 3
    %p135 = pnand %p133, %p134
    %p136 = pneg %p135
    // Predicated region
    $region9: #{resnet_block_forward.19} parent=5 // pred_check
      _
    $region10: #{resnet_block_forward.19} parent=5 // pred_check_branch
      %138 = sbr.rel (%p135) target = $region12
    $region11: #{resnet_block_forward.19} parent=5 // pred_region
      %s139 = ssub.s32 %s10, 1
      // Predicated region
      $region13: #{resnet_block_forward.19} parent=11 // pred_check
        %p140 = pneg %p57
      $region14: #{resnet_block_forward.19} parent=11 // pred_check_branch
        %142 = sbr.rel (%p140) target = $region16
      $region15: #{resnet_block_forward.19} parent=11 // pred_region
        _
      $region16: #{resnet_block_forward.19} parent=11 // pred_fallthru
        _
      // Predicated region
      $region17: #{resnet_block_forward.19} parent=11 // pred_check
        %p143 = pneg %p78
      $region18: #{resnet_block_forward.19} parent=11 // pred_check_branch
        %145 = sbr.rel (%p143) target = $region20
      $region19: #{resnet_block_forward.19} parent=11 // pred_region
        _
      $region20: #{resnet_block_forward.19} parent=11 // pred_fallthru
        _
      // Predicated region
      $region21: #{resnet_block_forward.19} parent=11 // pred_check
        %p146 = pneg %p99
      $region22: #{resnet_block_forward.19} parent=11 // pred_check_branch
        %148 = sbr.rel (%p146) target = $region24
      $region23: #{resnet_block_forward.19} parent=11 // pred_region
        _
      $region24: #{resnet_block_forward.19} parent=11 // pred_fallthru
        _
    $region12: #{resnet_block_forward.19} parent=5 // pred_fallthru
      _
    %p149 = scmp.lt.s32.totalorder %s10, 2
    // Predicated region
    $region25: #{resnet_block_forward.19} parent=5 // pred_check
      %p150 = pneg %p149
    $region26: #{resnet_block_forward.19} parent=5 // pred_check_branch
      %152 = sbr.rel (%p150) target = $region28
    $region27: #{resnet_block_forward.19} parent=5 // pred_region
      // Predicated region
      $region29: #{resnet_block_forward.19} parent=27 // pred_check
        %p153 = pneg %p30
      $region30: #{resnet_block_forward.19} parent=27 // pred_check_branch
        %155 = sbr.rel (%p153) target = $region32
      $region31: #{resnet_block_forward.19} parent=27 // pred_region
        %s156 = smul.u32 32, %s10
        %p157 = scmp.lt.s32.totalorder %s156, 63
        %s158 = scalar_select %p157, %s156, 63
        %s159 = smul.addr %s158, 4
        %s160 = scalar_lea.vmem %s0, %s159
        %s161 = smul.u32 32, %s10
      $region32: #{resnet_block_forward.19} parent=27 // pred_fallthru
        _
    $region28: #{resnet_block_forward.19} parent=5 // pred_fallthru
      _
    %p162 = scmp.le.s32.totalorder 1, %s10
    %p163 = scmp.lt.s32.totalorder %s10, 3
    %p164 = pnand %p162, %p163
    %p165 = pneg %p164
    // Predicated region
    $region33: #{resnet_block_forward.19} parent=5 // pred_check
      _
    $region34: #{resnet_block_forward.19} parent=5 // pred_check_branch
      %167 = sbr.rel (%p164) target = $region36
    $region35: #{resnet_block_forward.19} parent=5 // pred_region
      %s168 = ssub.s32 %s10, 1
      %s169 = smul.u32 32, %s15
      %p170 = scmp.lt.s32.totalorder %s169, 63
      %s171 = scalar_select %p170, %s169, 63
      %s172 = smul.addr %s171, 4
      %s173 = scalar_lea.vmem %s0, %s172
      %p174 = pneg %p36
      %p175 = pneg %p33
      %p176 = pneg %p57
      %p177 = pneg %p54
      %p178 = pneg %p78
      %p179 = pneg %p75
      %p180 = pneg %p99
      %p181 = pneg %p96
      %p182 = pneg %p125
      %p183 = pneg %p122
      %s184 = smul.u32 32, %s15
      %p185 = scmp.lt.s32.totalorder %s184, 63
      %s186 = scalar_select %p185, %s184, 63
      %s187 = smul.addr %s186, 8
      %s188 = scalar_lea.vmem %s4, %s187
      %s189 = smul.u32 32, %s15
      %p190 = scmp.lt.s32.totalorder %s189, 63
      %s191 = scalar_select %p190, %s189, 63
      %s192 = smul.addr %s191, 4
      %s193 = scalar_lea.vmem %s0, %s192
      %s194 = smul.u32 32, %s15
      %s195 = smul.u32 32, %s15
      %p196 = scmp.lt.s32.totalorder %s195, 63
      %s197 = scalar_select %p196, %s195, 63
      %s198 = smul.addr %s197, 8
      %s199 = scalar_lea.vmem %s4, %s198
      %s200 = smul.u32 32, %s15
      %v202 = vld [vmem:[%s193] sm:$0xf]
      %v203 = vld [vmem:[%s193 + $0x4] sm:$0xf]
      %v204 = vld [vmem:[%s193 + $0x8] sm:$0xf]
      %v205 = vld [vmem:[%s193 + $0xc] sm:$0xf]
      %v206 = vld [vmem:[%s193 + $0x10] sm:$0xf]
      %v207 = vld [vmem:[%s193 + $0x14] sm:$0xf]
      %v208 = vld [vmem:[%s193 + $0x18] sm:$0xf]
      %v209 = vld [vmem:[%s193 + $0x1c] sm:$0xf]
      %v210 = vld [vmem:[%s193 + $0x20] sm:$0xf]
      %v211 = vld [vmem:[%s193 + $0x24] sm:$0xf]
      %v212 = vld [vmem:[%s193 + $0x28] sm:$0xf]
      %v213 = vld [vmem:[%s193 + $0x2c] sm:$0xf]
      %v214 = vld [vmem:[%s193 + $0x30] sm:$0xf]
      %v215 = vld [vmem:[%s193 + $0x34] sm:$0xf]
      %v216 = vld [vmem:[%s193 + $0x38] sm:$0xf]
      %v217 = vld [vmem:[%s193 + $0x3c] sm:$0xf]
      %v218 = vld [vmem:[%s193 + $0x40] sm:$0xf]
      %v219 = vld [vmem:[%s193 + $0x44] sm:$0xf]
      %v220 = vld [vmem:[%s193 + $0x48] sm:$0xf]
      %v221 = vld [vmem:[%s193 + $0x4c] sm:$0xf]
      %v222 = vld [vmem:[%s193 + $0x50] sm:$0xf]
      %v223 = vld [vmem:[%s193 + $0x54] sm:$0xf]
      %v224 = vld [vmem:[%s193 + $0x58] sm:$0xf]
      %v225 = vld [vmem:[%s193 + $0x5c] sm:$0xf]
      %v226 = vld [vmem:[%s193 + $0x60] sm:$0xf]
      %v227 = vld [vmem:[%s193 + $0x64] sm:$0xf]
      %v228 = vld [vmem:[%s193 + $0x68] sm:$0xf]
      %v229 = vld [vmem:[%s193 + $0x6c] sm:$0xf]
      %v230 = vld [vmem:[%s193 + $0x70] sm:$0xf]
      %v231 = vld [vmem:[%s193 + $0x74] sm:$0xf]
      %v232 = vld [vmem:[%s193 + $0x78] sm:$0xf]
      %v233 = vld [vmem:[%s193 + $0x7c] sm:$0xf]
      %v234 = vld [vmem:[%s1] sm:$0x3]
      %v267 = vunpack.c.l.b16 %v202
      %v268 = vunpack.c.l.b16 %v203
      %v269 = vunpack.c.l.b16 %v204
      %v270 = vunpack.c.l.b16 %v205
      %v271 = vunpack.c.l.b16 %v206
      %v272 = vunpack.c.l.b16 %v207
      %v273 = vunpack.c.l.b16 %v208
      %v274 = vunpack.c.l.b16 %v209
      %v275 = vunpack.c.l.b16 %v210
      %v276 = vunpack.c.l.b16 %v211
      %v277 = vunpack.c.l.b16 %v212
      %v278 = vunpack.c.l.b16 %v213
      %v279 = vunpack.c.l.b16 %v214
      %v280 = vunpack.c.l.b16 %v215
      %v281 = vunpack.c.l.b16 %v216
      %v282 = vunpack.c.l.b16 %v217
      %v283 = vunpack.c.l.b16 %v218
      %v284 = vunpack.c.l.b16 %v219
      %v285 = vunpack.c.l.b16 %v220
      %v286 = vunpack.c.l.b16 %v221
      %v287 = vunpack.c.l.b16 %v222
      %v288 = vunpack.c.l.b16 %v223
      %v289 = vunpack.c.l.b16 %v224
      %v290 = vunpack.c.l.b16 %v225
      %v291 = vunpack.c.l.b16 %v226
      %v292 = vunpack.c.l.b16 %v227
      %v293 = vunpack.c.l.b16 %v228
      %v294 = vunpack.c.l.b16 %v229
      %v295 = vunpack.c.l.b16 %v230
      %v296 = vunpack.c.l.b16 %v231
      %v297 = vunpack.c.l.b16 %v232
      %v298 = vunpack.c.l.b16 %v233
      %v299 = vpack.c.b16 %v268, %v267
      %v300 = vpack.c.b16 %v270, %v269
      %v301 = vpack.c.b16 %v272, %v271
      %v302 = vpack.c.b16 %v274, %v273
      %v303 = vpack.c.b16 %v276, %v275
      %v304 = vpack.c.b16 %v278, %v277
      %v305 = vpack.c.b16 %v280, %v279
      %v306 = vpack.c.b16 %v282, %v281
      %v307 = vpack.c.b16 %v284, %v283
      %v308 = vpack.c.b16 %v286, %v285
      %v309 = vpack.c.b16 %v288, %v287
      %v310 = vpack.c.b16 %v290, %v289
      %v311 = vpack.c.b16 %v292, %v291
      %v312 = vpack.c.b16 %v294, %v293
      %v313 = vpack.c.b16 %v296, %v295
      %v314 = vpack.c.b16 %v298, %v297
      %vm315 = vcmask 31744
      %v317 = vsel %vm315, %v299, 0
      %v320 = vsel %vm315, %v300, 0
      %v323 = vsel %vm315, %v301, 0
      %v326 = vsel %vm315, %v302, 0
      %v329 = vsel %vm315, %v303, 0
      %v332 = vsel %vm315, %v304, 0
      %v335 = vsel %vm315, %v305, 0
      %v338 = vsel %vm315, %v306, 0
      %v341 = vsel %vm315, %v307, 0
      %v344 = vsel %vm315, %v308, 0
      %v347 = vsel %vm315, %v309, 0
      %v350 = vsel %vm315, %v310, 0
      %v353 = vsel %vm315, %v311, 0
      %v356 = vsel %vm315, %v312, 0
      %v359 = vsel %vm315, %v313, 0
      %v362 = vsel %vm315, %v314, 0
      %vm364 = vcmask 1041408
      %v366 = vsel %vm364, %v234, 0
      %368 = vmatpush.bf16.msra.mxu0 0
      %369 = vmatpush.bf16.msra.mxu0 0
      %370 = vmatpush.bf16.msra.mxu0 0
      %371 = vmatpush.bf16.msra.mxu0 0
      %372 = vmatpush.bf16.msra.mxu0 0
      %373 = vmatpush.bf16.msra.mxu0 0
      %374 = vmatpush.bf16.msra.mxu0 0
      %375 = vmatpush.bf16.msra.mxu0 %v366
      %376 = vmatmul.bf16.gmra.mxu0 %v317
      %v377 = vpop.f32.mrf.mxu0
      %v378 = vadd.f32 0.0, %v377
      %v379 = vpop.f32.mrf.mxu0
      %v380 = vadd.f32 0.0, %v379
      %381 = vmatmul.bf16.gmra.mxu0 %v320
      %v382 = vpop.f32.mrf.mxu0
      %v383 = vadd.f32 0.0, %v382
      %v384 = vpop.f32.mrf.mxu0
      %v385 = vadd.f32 0.0, %v384
      %386 = vmatmul.bf16.gmra.mxu0 %v323
      %v387 = vpop.f32.mrf.mxu0
      %v388 = vadd.f32 0.0, %v387
      %v389 = vpop.f32.mrf.mxu0
      %v390 = vadd.f32 0.0, %v389
      %391 = vmatmul.bf16.gmra.mxu0 %v326
      %v392 = vpop.f32.mrf.mxu0
      %v393 = vadd.f32 0.0, %v392
      %v394 = vpop.f32.mrf.mxu0
      %v395 = vadd.f32 0.0, %v394
      %396 = vmatmul.bf16.gmra.mxu0 %v329
      %v397 = vpop.f32.mrf.mxu0
      %v398 = vadd.f32 0.0, %v397
      %v399 = vpop.f32.mrf.mxu0
      %v400 = vadd.f32 0.0, %v399
      %401 = vmatmul.bf16.gmra.mxu0 %v332
      %v402 = vpop.f32.mrf.mxu0
      %v403 = vadd.f32 0.0, %v402
      %v404 = vpop.f32.mrf.mxu0
      %v405 = vadd.f32 0.0, %v404
      %406 = vmatmul.bf16.gmra.mxu0 %v335
      %v407 = vpop.f32.mrf.mxu0
      %v408 = vadd.f32 0.0, %v407
      %v409 = vpop.f32.mrf.mxu0
      %v410 = vadd.f32 0.0, %v409
      %411 = vmatmul.bf16.gmra.mxu0 %v338
      %v412 = vpop.f32.mrf.mxu0
      %v413 = vadd.f32 0.0, %v412
      %v414 = vpop.f32.mrf.mxu0
      %v415 = vadd.f32 0.0, %v414
      %416 = vmatmul.bf16.gmra.mxu0 %v341
      %v417 = vpop.f32.mrf.mxu0
      %v418 = vadd.f32 0.0, %v417
      %v419 = vpop.f32.mrf.mxu0
      %v420 = vadd.f32 0.0, %v419
      %421 = vmatmul.bf16.gmra.mxu0 %v344
      %v422 = vpop.f32.mrf.mxu0
      %v423 = vadd.f32 0.0, %v422
      %v424 = vpop.f32.mrf.mxu0
      %v425 = vadd.f32 0.0, %v424
      %426 = vmatmul.bf16.gmra.mxu0 %v347
      %v427 = vpop.f32.mrf.mxu0
      %v428 = vadd.f32 0.0, %v427
      %v429 = vpop.f32.mrf.mxu0
      %v430 = vadd.f32 0.0, %v429
      %431 = vmatmul.bf16.gmra.mxu0 %v350
      %v432 = vpop.f32.mrf.mxu0
      %v433 = vadd.f32 0.0, %v432
      %v434 = vpop.f32.mrf.mxu0
      %v435 = vadd.f32 0.0, %v434
      %436 = vmatmul.bf16.gmra.mxu0 %v353
      %v437 = vpop.f32.mrf.mxu0
      %v438 = vadd.f32 0.0, %v437
      %v439 = vpop.f32.mrf.mxu0
      %v440 = vadd.f32 0.0, %v439
      %441 = vmatmul.bf16.gmra.mxu0 %v356
      %v442 = vpop.f32.mrf.mxu0
      %v443 = vadd.f32 0.0, %v442
      %v444 = vpop.f32.mrf.mxu0
      %v445 = vadd.f32 0.0, %v444
      %446 = vmatmul.bf16.gmra.mxu0 %v359
      %v447 = vpop.f32.mrf.mxu0
      %v448 = vadd.f32 0.0, %v447
      %v449 = vpop.f32.mrf.mxu0
      %v450 = vadd.f32 0.0, %v449
      %451 = vmatmul.bf16.gmra.mxu0 %v362
      %v452 = vpop.f32.mrf.mxu0
      %v453 = vadd.f32 0.0, %v452
      %v454 = vpop.f32.mrf.mxu0
      %v455 = vadd.f32 0.0, %v454
      %456 = vdwg.mxu0
      %v457 = vld [vmem:[%s2] sm:$0x1]
      %v459 = vperm.slane %v457, 0
      %v461 = vmul.f32 %v378, %v459
      %v462 = vmul.f32 %v380, %v459
      %v463 = vmul.f32 %v383, %v459
      %v464 = vmul.f32 %v385, %v459
      %v465 = vmul.f32 %v388, %v459
      %v466 = vmul.f32 %v390, %v459
      %v467 = vmul.f32 %v393, %v459
      %v468 = vmul.f32 %v395, %v459
      %v469 = vmul.f32 %v398, %v459
      %v470 = vmul.f32 %v400, %v459
      %v471 = vmul.f32 %v403, %v459
      %v472 = vmul.f32 %v405, %v459
      %v473 = vmul.f32 %v408, %v459
      %v474 = vmul.f32 %v410, %v459
      %v475 = vmul.f32 %v413, %v459
      %v476 = vmul.f32 %v415, %v459
      %v477 = vmul.f32 %v418, %v459
      %v478 = vmul.f32 %v420, %v459
      %v479 = vmul.f32 %v423, %v459
      %v480 = vmul.f32 %v425, %v459
      %v481 = vmul.f32 %v428, %v459
      %v482 = vmul.f32 %v430, %v459
      %v483 = vmul.f32 %v433, %v459
      %v484 = vmul.f32 %v435, %v459
      %v485 = vmul.f32 %v438, %v459
      %v486 = vmul.f32 %v440, %v459
      %v487 = vmul.f32 %v443, %v459
      %v488 = vmul.f32 %v445, %v459
      %v489 = vmul.f32 %v448, %v459
      %v490 = vmul.f32 %v450, %v459
      %v491 = vmul.f32 %v453, %v459
      %v492 = vmul.f32 %v455, %v459
      %v493 = vld [vmem:[%s3] sm:$0x1]
      %v495 = vperm.slane %v493, 0
      %v497 = vadd.f32 %v461, %v495
      %v498 = vadd.f32 %v462, %v495
      %v499 = vadd.f32 %v463, %v495
      %v500 = vadd.f32 %v464, %v495
      %v501 = vadd.f32 %v465, %v495
      %v502 = vadd.f32 %v466, %v495
      %v503 = vadd.f32 %v467, %v495
      %v504 = vadd.f32 %v468, %v495
      %v505 = vadd.f32 %v469, %v495
      %v506 = vadd.f32 %v470, %v495
      %v507 = vadd.f32 %v471, %v495
      %v508 = vadd.f32 %v472, %v495
      %v509 = vadd.f32 %v473, %v495
      %v510 = vadd.f32 %v474, %v495
      %v511 = vadd.f32 %v475, %v495
      %v512 = vadd.f32 %v476, %v495
      %v513 = vadd.f32 %v477, %v495
      %v514 = vadd.f32 %v478, %v495
      %v515 = vadd.f32 %v479, %v495
      %v516 = vadd.f32 %v480, %v495
      %v517 = vadd.f32 %v481, %v495
      %v518 = vadd.f32 %v482, %v495
      %v519 = vadd.f32 %v483, %v495
      %v520 = vadd.f32 %v484, %v495
      %v521 = vadd.f32 %v485, %v495
      %v522 = vadd.f32 %v486, %v495
      %v523 = vadd.f32 %v487, %v495
      %v524 = vadd.f32 %v488, %v495
      %v525 = vadd.f32 %v489, %v495
      %v526 = vadd.f32 %v490, %v495
      %v527 = vadd.f32 %v491, %v495
      %v528 = vadd.f32 %v492, %v495
      %vm529 = vcmask 64512
      %530 = vst.msk [vmem:[%s199] sm:$0xff] %vm529, %v497
      %531 = vst.msk [vmem:[%s199 + $0x8] sm:$0xff] %vm529, %v498
      %532 = vst.msk [vmem:[%s199 + $0x10] sm:$0xff] %vm529, %v499
      %533 = vst.msk [vmem:[%s199 + $0x18] sm:$0xff] %vm529, %v500
      %534 = vst.msk [vmem:[%s199 + $0x20] sm:$0xff] %vm529, %v501
      %535 = vst.msk [vmem:[%s199 + $0x28] sm:$0xff] %vm529, %v502
      %536 = vst.msk [vmem:[%s199 + $0x30] sm:$0xff] %vm529, %v503
      %537 = vst.msk [vmem:[%s199 + $0x38] sm:$0xff] %vm529, %v504
      %538 = vst.msk [vmem:[%s199 + $0x40] sm:$0xff] %vm529, %v505
      %539 = vst.msk [vmem:[%s199 + $0x48] sm:$0xff] %vm529, %v506
      %540 = vst.msk [vmem:[%s199 + $0x50] sm:$0xff] %vm529, %v507
      %541 = vst.msk [vmem:[%s199 + $0x58] sm:$0xff] %vm529, %v508
      %542 = vst.msk [vmem:[%s199 + $0x60] sm:$0xff] %vm529, %v509
      %543 = vst.msk [vmem:[%s199 + $0x68] sm:$0xff] %vm529, %v510
      %544 = vst.msk [vmem:[%s199 + $0x70] sm:$0xff] %vm529, %v511
      %545 = vst.msk [vmem:[%s199 + $0x78] sm:$0xff] %vm529, %v512
      %546 = vst.msk [vmem:[%s199 + $0x80] sm:$0xff] %vm529, %v513
      %547 = vst.msk [vmem:[%s199 + $0x88] sm:$0xff] %vm529, %v514
      %548 = vst.msk [vmem:[%s199 + $0x90] sm:$0xff] %vm529, %v515
      %549 = vst.msk [vmem:[%s199 + $0x98] sm:$0xff] %vm529, %v516
      %550 = vst.msk [vmem:[%s199 + $0xa0] sm:$0xff] %vm529, %v517
      %551 = vst.msk [vmem:[%s199 + $0xa8] sm:$0xff] %vm529, %v518
      %552 = vst.msk [vmem:[%s199 + $0xb0] sm:$0xff] %vm529, %v519
      %553 = vst.msk [vmem:[%s199 + $0xb8] sm:$0xff] %vm529, %v520
      %554 = vst.msk [vmem:[%s199 + $0xc0] sm:$0xff] %vm529, %v521
      %555 = vst.msk [vmem:[%s199 + $0xc8] sm:$0xff] %vm529, %v522
      %556 = vst.msk [vmem:[%s199 + $0xd0] sm:$0xff] %vm529, %v523
      %557 = vst.msk [vmem:[%s199 + $0xd8] sm:$0xff] %vm529, %v524
      %558 = vst.msk [vmem:[%s199 + $0xe0] sm:$0xff] %vm529, %v525
      %559 = vst.msk [vmem:[%s199 + $0xe8] sm:$0xff] %vm529, %v526
      %560 = vst.msk [vmem:[%s199 + $0xf0] sm:$0xff] %vm529, %v527
      %561 = vst.msk [vmem:[%s199 + $0xf8] sm:$0xff] %vm529, %v528
      %s562 = smul.u32 32, %s15
      %p563 = scmp.lt.s32.totalorder %s562, 63
      %s564 = scalar_select %p563, %s562, 63
      %s565 = smul.addr %s564, 8
      %s566 = scalar_lea.vmem %s4, %s565
      // Predicated region
      $region37: #{resnet_block_forward.19} parent=35 // pred_check
        %p567 = pneg %p122
      $region38: #{resnet_block_forward.19} parent=35 // pred_check_branch
        %569 = sbr.rel (%p567) target = $region40
      $region39: #{resnet_block_forward.19} parent=35 // pred_region
        %s570 = smul.u32 32, %s15
      $region40: #{resnet_block_forward.19} parent=35 // pred_fallthru
        _
    $region36: #{resnet_block_forward.19} parent=5 // pred_fallthru
      _
    %p571 = scmp.le.s32.totalorder 2, %s10
    // Predicated region
    $region41: #{resnet_block_forward.19} parent=5 // pred_check
      %p572 = pneg %p571
    $region42: #{resnet_block_forward.19} parent=5 // pred_check_branch
      %574 = sbr.rel (%p572) target = $region44
    $region43: #{resnet_block_forward.19} parent=5 // pred_region
      %s575 = ssub.s32 %s10, 2
      // Predicated region
      $region45: #{resnet_block_forward.19} parent=43 // pred_check
        %p576 = pneg %p128
      $region46: #{resnet_block_forward.19} parent=43 // pred_check_branch
        %578 = sbr.rel (%p576) target = $region48
      $region47: #{resnet_block_forward.19} parent=43 // pred_region
        %s579 = smul.u32 32, %s16
        %p580 = scmp.lt.s32.totalorder %s579, 63
        %s581 = scalar_select %p580, %s579, 63
        %s582 = smul.addr %s581, 8
        %s583 = scalar_lea.vmem %s4, %s582
      $region48: #{resnet_block_forward.19} parent=43 // pred_fallthru
        _
    $region44: #{resnet_block_forward.19} parent=5 // pred_fallthru
      _
  $region6: #{resnet_block_forward.19} parent=0 // loop_footer
    %s14 = sadd.s32 1, %s10
  $region7: #{resnet_block_forward.19} parent=0 // loop_footer_branch
    %9 = sbr.rel target = $region3
  $region8: #{resnet_block_forward.19} parent=0 // loop_exit
    _

// kernel: resnet_block_forward.21
$region0: #{resnet_block_forward.21}
  #allocation0 [shape = 'u32[]', space=smem, size = 0x4, offset = 0x4, fixed_abs, tag = 'smem constant byte address 0x4 - core index']
  #allocation1 [shape = 'u32[72,128]{1,0:T(1,128)}', space=vmem, size = 0x9000, scoped, tag = 'internal scratch']
  %s0 = inlined_call_operand.vmem [shape: f32[2,16,8], index: 0, kind: input, shape index: {}]
  %s1 = inlined_call_operand.vmem [shape: f32[2,16,8], index: 1, kind: input, shape index: {}]
  %s2 = inlined_call_operand.vmem [shape: f32[8,8], index: 2, kind: input, shape index: {}]
  %s3 = inlined_call_operand.vmem [shape: f32[1,8], index: 3, kind: input, shape index: {}]
  %s4 = inlined_call_operand.vmem [shape: f32[1,8], index: 4, kind: input, shape index: {}]
  %s5 = inlined_call_operand.vmem [shape: f32[8,8], index: 5, kind: input, shape index: {}]
  %s6 = inlined_call_operand.vmem [shape: f32[1,8], index: 6, kind: input, shape index: {}]
  %s7 = inlined_call_operand.vmem [shape: f32[8,8], index: 7, kind: input, shape index: {}]
  %s8 = inlined_call_operand.vmem [shape: f32[1,8], index: 8, kind: input, shape index: {}]
  %s9 = inlined_call_operand.vmem [shape: f32[2,16,8], index: 9, kind: output, shape index: {0}]
  %s10 = inlined_call_operand.vmem [shape: f32[2,16,8], index: 10, kind: output, shape index: {1}]
  %11 = xla_tuple %s9, %s10
  %s12 = sld [smem:[#allocation0]]
  $region77: #{resnet_block_forward.21} parent=0
    _
  %s14 = ssub.s32 1, %s12
  %s15 = scalar_select 0, %s14, %s12
  loop: start=0, step=1, limit=4
  $region2: #{resnet_block_forward.21} parent=0 // loop_pre_header
    _
  $region3: #{resnet_block_forward.21} parent=0 // loop_header
    %s17 = sphi 0, %s21
    %p18 = scmp.ge.s32.totalorder %s17, 4
    %s27 = sphi 0, %s29
    %s30 = sphi 0, %s27
    %s31 = sphi 0, %s30
    %s47 = sphi 0, %s31
    %s53 = sphi 0, %s55
    %s56 = sphi 0, %s53
    %s57 = sphi 0, %s56
    %s73 = sphi 0, %s57
    %s77 = sphi 0, %s77
    %s79 = sphi 0, %s77
    %s80 = sphi 0, %s79
    %s94 = sphi 0, %s80
    %s98 = sphi 0, %s98
    %s100 = sphi 0, %s98
    %s101 = sphi 0, %s100
    %s115 = sphi 0, %s101
    %s119 = sphi 0, %s119
    %s121 = sphi 0, %s119
    %s122 = sphi 0, %s121
    %s136 = sphi 0, %s122
    %s140 = sphi 0, %s140
    %s142 = sphi 0, %s140
    %s143 = sphi 0, %s142
    %s157 = sphi 0, %s143
    %s161 = sphi 0, %s161
    %s163 = sphi 0, %s161
    %s164 = sphi 0, %s163
    %s178 = sphi 0, %s164
    %s182 = sphi 0, %s182
    %s184 = sphi 0, %s182
    %s185 = sphi 0, %s184
    %s199 = sphi 0, %s185
    %s203 = sphi 0, %s203
    %s205 = sphi 0, %s203
    %s206 = sphi 0, %s205
    %s220 = sphi 0, %s206
    %s226 = sphi 0, %s228
    %s229 = sphi 0, %s226
    %s230 = sphi 0, %s229
    %s246 = sphi 0, %s230
    %s252 = sphi 0, %s254
    %s255 = sphi 0, %s252
    %s256 = sphi 0, %s255
    %s272 = sphi 0, %s256
  $region4: #{resnet_block_forward.21} parent=0 // loop_header_branch
    %20 = sbr.rel (%p18) target = $region8
  $region5: #{resnet_block_forward.21} parent=0 // loop_body
    %s22 = ssub.s32 %s17, 1
    %s23 = ssub.s32 %s17, 2
    %s24 = sadd.s32 %s17, 1
    %s25 = ssub.s32 %s17, %s24
    %p26 = scmp.eq.s32.totalorder %s25, 0
    %s28 = sadd.s32 %s27, 1
    %s29 = scalar_select %p26, %s27, %s28
    %p32 = pneg %p26
    %p33 = scmp.eq.s32.totalorder %s17, 1
    %p34 = por %p32, %p33
    %p35 = scmp.ne.s32.totalorder %s27, %s30
    %p36 = scmp.eq.s32.totalorder %s17, 0
    %p37 = por %p35, %p36
    %p38 = scmp.ne.s32.totalorder %s27, %s30
    %p39 = scmp.eq.s32.totalorder %s22, 1
    %p40 = por %p38, %p39
    %p41 = scmp.ne.s32.totalorder %s30, %s31
    %p42 = scmp.eq.s32.totalorder %s22, 0
    %p43 = por %p41, %p42
    %p44 = scmp.ne.s32.totalorder %s30, %s31
    %p45 = scmp.eq.s32.totalorder %s23, 1
    %p46 = por %p44, %p45
    %p48 = scmp.ne.s32.totalorder %s31, %s47
    %p49 = scmp.eq.s32.totalorder %s23, 0
    %p50 = por %p48, %p49
    %s51 = ssub.s32 %s17, %s24
    %p52 = scmp.eq.s32.totalorder %s51, 0
    %s54 = sadd.s32 %s53, 1
    %s55 = scalar_select %p52, %s53, %s54
    %p58 = pneg %p52
    %p59 = scmp.eq.s32.totalorder %s17, 1
    %p60 = por %p58, %p59
    %p61 = scmp.ne.s32.totalorder %s53, %s56
    %p62 = scmp.eq.s32.totalorder %s17, 0
    %p63 = por %p61, %p62
    %p64 = scmp.ne.s32.totalorder %s53, %s56
    %p65 = scmp.eq.s32.totalorder %s22, 1
    %p66 = por %p64, %p65
    %p67 = scmp.ne.s32.totalorder %s56, %s57
    %p68 = scmp.eq.s32.totalorder %s22, 0
    %p69 = por %p67, %p68
    %p70 = scmp.ne.s32.totalorder %s56, %s57
    %p71 = scmp.eq.s32.totalorder %s23, 1
    %p72 = por %p70, %p71
    %p74 = scmp.ne.s32.totalorder %s57, %s73
    %p75 = scmp.eq.s32.totalorder %s23, 0
    %p76 = por %p74, %p75
    %s78 = sadd.s32 %s77, 1
    %p81 = scmp.eq.s32.totalorder %s17, 1
    %p82 = scmp.ne.s32.totalorder %s77, %s79
    %p83 = scmp.eq.s32.totalorder %s17, 0
    %p84 = por %p82, %p83
    %p85 = scmp.ne.s32.totalorder %s77, %s79
    %p86 = scmp.eq.s32.totalorder %s22, 1
    %p87 = por %p85, %p86
    %p88 = scmp.ne.s32.totalorder %s79, %s80
    %p89 = scmp.eq.s32.totalorder %s22, 0
    %p90 = por %p88, %p89
    %p91 = scmp.ne.s32.totalorder %s79, %s80
    %p92 = scmp.eq.s32.totalorder %s23, 1
    %p93 = por %p91, %p92
    %p95 = scmp.ne.s32.totalorder %s80, %s94
    %p96 = scmp.eq.s32.totalorder %s23, 0
    %p97 = por %p95, %p96
    %s99 = sadd.s32 %s98, 1
    %p102 = scmp.eq.s32.totalorder %s17, 1
    %p103 = scmp.ne.s32.totalorder %s98, %s100
    %p104 = scmp.eq.s32.totalorder %s17, 0
    %p105 = por %p103, %p104
    %p106 = scmp.ne.s32.totalorder %s98, %s100
    %p107 = scmp.eq.s32.totalorder %s22, 1
    %p108 = por %p106, %p107
    %p109 = scmp.ne.s32.totalorder %s100, %s101
    %p110 = scmp.eq.s32.totalorder %s22, 0
    %p111 = por %p109, %p110
    %p112 = scmp.ne.s32.totalorder %s100, %s101
    %p113 = scmp.eq.s32.totalorder %s23, 1
    %p114 = por %p112, %p113
    %p116 = scmp.ne.s32.totalorder %s101, %s115
    %p117 = scmp.eq.s32.totalorder %s23, 0
    %p118 = por %p116, %p117
    %s120 = sadd.s32 %s119, 1
    %p123 = scmp.eq.s32.totalorder %s17, 1
    %p124 = scmp.ne.s32.totalorder %s119, %s121
    %p125 = scmp.eq.s32.totalorder %s17, 0
    %p126 = por %p124, %p125
    %p127 = scmp.ne.s32.totalorder %s119, %s121
    %p128 = scmp.eq.s32.totalorder %s22, 1
    %p129 = por %p127, %p128
    %p130 = scmp.ne.s32.totalorder %s121, %s122
    %p131 = scmp.eq.s32.totalorder %s22, 0
    %p132 = por %p130, %p131
    %p133 = scmp.ne.s32.totalorder %s121, %s122
    %p134 = scmp.eq.s32.totalorder %s23, 1
    %p135 = por %p133, %p134
    %p137 = scmp.ne.s32.totalorder %s122, %s136
    %p138 = scmp.eq.s32.totalorder %s23, 0
    %p139 = por %p137, %p138
    %s141 = sadd.s32 %s140, 1
    %p144 = scmp.eq.s32.totalorder %s17, 1
    %p145 = scmp.ne.s32.totalorder %s140, %s142
    %p146 = scmp.eq.s32.totalorder %s17, 0
    %p147 = por %p145, %p146
    %p148 = scmp.ne.s32.totalorder %s140, %s142
    %p149 = scmp.eq.s32.totalorder %s22, 1
    %p150 = por %p148, %p149
    %p151 = scmp.ne.s32.totalorder %s142, %s143
    %p152 = scmp.eq.s32.totalorder %s22, 0
    %p153 = por %p151, %p152
    %p154 = scmp.ne.s32.totalorder %s142, %s143
    %p155 = scmp.eq.s32.totalorder %s23, 1
    %p156 = por %p154, %p155
    %p158 = scmp.ne.s32.totalorder %s143, %s157
    %p159 = scmp.eq.s32.totalorder %s23, 0
    %p160 = por %p158, %p159
    %s162 = sadd.s32 %s161, 1
    %p165 = scmp.eq.s32.totalorder %s17, 1
    %p166 = scmp.ne.s32.totalorder %s161, %s163
    %p167 = scmp.eq.s32.totalorder %s17, 0
    %p168 = por %p166, %p167
    %p169 = scmp.ne.s32.totalorder %s161, %s163
    %p170 = scmp.eq.s32.totalorder %s22, 1
    %p171 = por %p169, %p170
    %p172 = scmp.ne.s32.totalorder %s163, %s164
    %p173 = scmp.eq.s32.totalorder %s22, 0
    %p174 = por %p172, %p173
    %p175 = scmp.ne.s32.totalorder %s163, %s164
    %p176 = scmp.eq.s32.totalorder %s23, 1
    %p177 = por %p175, %p176
    %p179 = scmp.ne.s32.totalorder %s164, %s178
    %p180 = scmp.eq.s32.totalorder %s23, 0
    %p181 = por %p179, %p180
    %s183 = sadd.s32 %s182, 1
    %p186 = scmp.eq.s32.totalorder %s17, 1
    %p187 = scmp.ne.s32.totalorder %s182, %s184
    %p188 = scmp.eq.s32.totalorder %s17, 0
    %p189 = por %p187, %p188
    %p190 = scmp.ne.s32.totalorder %s182, %s184
    %p191 = scmp.eq.s32.totalorder %s22, 1
    %p192 = por %p190, %p191
    %p193 = scmp.ne.s32.totalorder %s184, %s185
    %p194 = scmp.eq.s32.totalorder %s22, 0
    %p195 = por %p193, %p194
    %p196 = scmp.ne.s32.totalorder %s184, %s185
    %p197 = scmp.eq.s32.totalorder %s23, 1
    %p198 = por %p196, %p197
    %p200 = scmp.ne.s32.totalorder %s185, %s199
    %p201 = scmp.eq.s32.totalorder %s23, 0
    %p202 = por %p200, %p201
    %s204 = sadd.s32 %s203, 1
    %p207 = scmp.eq.s32.totalorder %s17, 1
    %p208 = scmp.ne.s32.totalorder %s203, %s205
    %p209 = scmp.eq.s32.totalorder %s17, 0
    %p210 = por %p208, %p209
    %p211 = scmp.ne.s32.totalorder %s203, %s205
    %p212 = scmp.eq.s32.totalorder %s22, 1
    %p213 = por %p211, %p212
    %p214 = scmp.ne.s32.totalorder %s205, %s206
    %p215 = scmp.eq.s32.totalorder %s22, 0
    %p216 = por %p214, %p215
    %p217 = scmp.ne.s32.totalorder %s205, %s206
    %p218 = scmp.eq.s32.totalorder %s23, 1
    %p219 = por %p217, %p218
    %p221 = scmp.ne.s32.totalorder %s206, %s220
    %p222 = scmp.eq.s32.totalorder %s23, 0
    %p223 = por %p221, %p222
    %s224 = ssub.s32 %s17, %s24
    %p225 = scmp.eq.s32.totalorder %s224, 0
    %s227 = sadd.s32 %s226, 1
    %s228 = scalar_select %p225, %s226, %s227
    %p231 = pneg %p225
    %p232 = scmp.eq.s32.totalorder %s17, 1
    %p233 = por %p231, %p232
    %p234 = scmp.ne.s32.totalorder %s226, %s229
    %p235 = scmp.eq.s32.totalorder %s17, 0
    %p236 = por %p234, %p235
    %p237 = scmp.ne.s32.totalorder %s226, %s229
    %p238 = scmp.eq.s32.totalorder %s22, 1
    %p239 = por %p237, %p238
    %p240 = scmp.ne.s32.totalorder %s229, %s230
    %p241 = scmp.eq.s32.totalorder %s22, 0
    %p242 = por %p240, %p241
    %p243 = scmp.ne.s32.totalorder %s229, %s230
    %p244 = scmp.eq.s32.totalorder %s23, 1
    %p245 = por %p243, %p244
    %p247 = scmp.ne.s32.totalorder %s230, %s246
    %p248 = scmp.eq.s32.totalorder %s23, 0
    %p249 = por %p247, %p248
    %s250 = ssub.s32 %s17, %s24
    %p251 = scmp.eq.s32.totalorder %s250, 0
    %s253 = sadd.s32 %s252, 1
    %s254 = scalar_select %p251, %s252, %s253
    %p257 = pneg %p251
    %p258 = scmp.eq.s32.totalorder %s17, 1
    %p259 = por %p257, %p258
    %p260 = scmp.ne.s32.totalorder %s252, %s255
    %p261 = scmp.eq.s32.totalorder %s17, 0
    %p262 = por %p260, %p261
    %p263 = scmp.ne.s32.totalorder %s252, %s255
    %p264 = scmp.eq.s32.totalorder %s22, 1
    %p265 = por %p263, %p264
    %p266 = scmp.ne.s32.totalorder %s255, %s256
    %p267 = scmp.eq.s32.totalorder %s22, 0
    %p268 = por %p266, %p267
    %p269 = scmp.ne.s32.totalorder %s255, %s256
    %p270 = scmp.eq.s32.totalorder %s23, 1
    %p271 = por %p269, %p270
    %p273 = scmp.ne.s32.totalorder %s256, %s272
    %p274 = scmp.eq.s32.totalorder %s23, 0
    %p275 = por %p273, %p274
    %p276 = scmp.le.s32.totalorder 1, %s17
    %p277 = scmp.lt.s32.totalorder %s17, 3
    %p278 = pnand %p276, %p277
    %p279 = pneg %p278
    // Predicated region
    $region9: #{resnet_block_forward.21} parent=5 // pred_check
      _
    $region10: #{resnet_block_forward.21} parent=5 // pred_check_branch
      %281 = sbr.rel (%p278) target = $region12
    $region11: #{resnet_block_forward.21} parent=5 // pred_region
      %s282 = ssub.s32 %s17, 1
      // Predicated region
      $region13: #{resnet_block_forward.21} parent=11 // pred_check
        %p283 = pneg %p90
      $region14: #{resnet_block_forward.21} parent=11 // pred_check_branch
        %285 = sbr.rel (%p283) target = $region16
      $region15: #{resnet_block_forward.21} parent=11 // pred_region
        _
      $region16: #{resnet_block_forward.21} parent=11 // pred_fallthru
        _
      // Predicated region
      $region17: #{resnet_block_forward.21} parent=11 // pred_check
        %p286 = pneg %p111
      $region18: #{resnet_block_forward.21} parent=11 // pred_check_branch
        %288 = sbr.rel (%p286) target = $region20
      $region19: #{resnet_block_forward.21} parent=11 // pred_region
        _
      $region20: #{resnet_block_forward.21} parent=11 // pred_fallthru
        _
      // Predicated region
      $region21: #{resnet_block_forward.21} parent=11 // pred_check
        %p289 = pneg %p132
      $region22: #{resnet_block_forward.21} parent=11 // pred_check_branch
        %291 = sbr.rel (%p289) target = $region24
      $region23: #{resnet_block_forward.21} parent=11 // pred_region
        _
      $region24: #{resnet_block_forward.21} parent=11 // pred_fallthru
        _
      // Predicated region
      $region25: #{resnet_block_forward.21} parent=11 // pred_check
        %p292 = pneg %p153
      $region26: #{resnet_block_forward.21} parent=11 // pred_check_branch
        %294 = sbr.rel (%p292) target = $region28
      $region27: #{resnet_block_forward.21} parent=11 // pred_region
        _
      $region28: #{resnet_block_forward.21} parent=11 // pred_fallthru
        _
      // Predicated region
      $region29: #{resnet_block_forward.21} parent=11 // pred_check
        %p295 = pneg %p174
      $region30: #{resnet_block_forward.21} parent=11 // pred_check_branch
        %297 = sbr.rel (%p295) target = $region32
      $region31: #{resnet_block_forward.21} parent=11 // pred_region
        _
      $region32: #{resnet_block_forward.21} parent=11 // pred_fallthru
        _
      // Predicated region
      $region33: #{resnet_block_forward.21} parent=11 // pred_check
        %p298 = pneg %p195
      $region34: #{resnet_block_forward.21} parent=11 // pred_check_branch
        %300 = sbr.rel (%p298) target = $region36
      $region35: #{resnet_block_forward.21} parent=11 // pred_region
        _
      $region36: #{resnet_block_forward.21} parent=11 // pred_fallthru
        _
      // Predicated region
      $region37: #{resnet_block_forward.21} parent=11 // pred_check
        %p301 = pneg %p216
      $region38: #{resnet_block_forward.21} parent=11 // pred_check_branch
        %303 = sbr.rel (%p301) target = $region40
      $region39: #{resnet_block_forward.21} parent=11 // pred_region
        _
      $region40: #{resnet_block_forward.21} parent=11 // pred_fallthru
        _
    $region12: #{resnet_block_forward.21} parent=5 // pred_fallthru
      _
    %p304 = scmp.lt.s32.totalorder %s17, 2
    // Predicated region
    $region41: #{resnet_block_forward.21} parent=5 // pred_check
      %p305 = pneg %p304
    $region42: #{resnet_block_forward.21} parent=5 // pred_check_branch
      %307 = sbr.rel (%p305) target = $region44
    $region43: #{resnet_block_forward.21} parent=5 // pred_region
      // Predicated region
      $region45: #{resnet_block_forward.21} parent=43 // pred_check
        %p308 = pneg %p37
      $region46: #{resnet_block_forward.21} parent=43 // pred_check_branch
        %310 = sbr.rel (%p308) target = $region48
      $region47: #{resnet_block_forward.21} parent=43 // pred_region
        %p311 = scmp.lt.s32.totalorder %s17, 1
        %s312 = scalar_select %p311, %s17, 1
        %s313 = smul.addr %s312, 2
        %s314 = smul.addr %s313, 8
        %s315 = scalar_lea.vmem %s0, %s314
      $region48: #{resnet_block_forward.21} parent=43 // pred_fallthru
        _
      // Predicated region
      $region49: #{resnet_block_forward.21} parent=43 // pred_check
        %p316 = pneg %p63
      $region50: #{resnet_block_forward.21} parent=43 // pred_check_branch
        %318 = sbr.rel (%p316) target = $region52
      $region51: #{resnet_block_forward.21} parent=43 // pred_region
        %p319 = scmp.lt.s32.totalorder %s17, 1
        %s320 = scalar_select %p319, %s17, 1
        %s321 = smul.addr %s320, 2
        %s322 = smul.addr %s321, 8
        %s323 = scalar_lea.vmem %s1, %s322
      $region52: #{resnet_block_forward.21} parent=43 // pred_fallthru
        _
    $region44: #{resnet_block_forward.21} parent=5 // pred_fallthru
      _
    %p324 = scmp.le.s32.totalorder 1, %s17
    %p325 = scmp.lt.s32.totalorder %s17, 3
    %p326 = pnand %p324, %p325
    %p327 = pneg %p326
    // Predicated region
    $region53: #{resnet_block_forward.21} parent=5 // pred_check
      _
    $region54: #{resnet_block_forward.21} parent=5 // pred_check_branch
      %329 = sbr.rel (%p326) target = $region56
    $region55: #{resnet_block_forward.21} parent=5 // pred_region
      %s330 = ssub.s32 %s17, 1
      %p331 = scmp.lt.s32.totalorder %s22, 1
      %s332 = scalar_select %p331, %s22, 1
      %s333 = smul.addr %s332, 2
      %s334 = smul.addr %s333, 8
      %s335 = scalar_lea.vmem %s0, %s334
      %p336 = pneg %p43
      %p337 = pneg %p40
      %p338 = scmp.lt.s32.totalorder %s22, 1
      %s339 = scalar_select %p338, %s22, 1
      %s340 = smul.addr %s339, 2
      %s341 = smul.addr %s340, 8
      %s342 = scalar_lea.vmem %s1, %s341
      %p343 = pneg %p69
      %p344 = pneg %p66
      %p345 = pneg %p90
      %p346 = pneg %p87
      %p347 = pneg %p111
      %p348 = pneg %p108
      %p349 = pneg %p132
      %p350 = pneg %p129
      %p351 = pneg %p153
      %p352 = pneg %p150
      %p353 = pneg %p174
      %p354 = pneg %p171
      %p355 = pneg %p195
      %p356 = pneg %p192
      %p357 = pneg %p216
      %p358 = pneg %p213
      %p359 = pneg %p242
      %p360 = pneg %p239
      %p361 = scmp.lt.s32.totalorder %s22, 1
      %s362 = scalar_select %p361, %s22, 1
      %s363 = smul.addr %s362, 2
      %s364 = smul.addr %s363, 8
      %s365 = scalar_lea.vmem %s9, %s364
      %p366 = pneg %p268
      %p367 = pneg %p265
      %p368 = scmp.lt.s32.totalorder %s22, 1
      %s369 = scalar_select %p368, %s22, 1
      %s370 = smul.addr %s369, 2
      %s371 = smul.addr %s370, 8
      %s372 = scalar_lea.vmem %s10, %s371
      %p373 = scmp.lt.s32.totalorder %s22, 1
      %s374 = scalar_select %p373, %s22, 1
      %s375 = smul.addr %s374, 2
      %s376 = smul.addr %s375, 8
      %s377 = scalar_lea.vmem %s0, %s376
      %p378 = scmp.lt.s32.totalorder %s22, 1
      %s379 = scalar_select %p378, %s22, 1
      %s380 = smul.addr %s379, 2
      %s381 = smul.addr %s380, 8
      %s382 = scalar_lea.vmem %s1, %s381
      %p383 = scmp.lt.s32.totalorder %s22, 1
      %s384 = scalar_select %p383, %s22, 1
      %s385 = smul.addr %s384, 2
      %s386 = smul.addr %s385, 8
      %s387 = scalar_lea.vmem %s9, %s386
      %p388 = scmp.lt.s32.totalorder %s22, 1
      %s389 = scalar_select %p388, %s22, 1
      %s390 = smul.addr %s389, 2
      %s391 = smul.addr %s390, 8
      %s392 = scalar_lea.vmem %s10, %s391
      %v393 = vld [vmem:[%s2] sm:$0xff]
      %v394 = vld [vmem:[%s3] sm:$0x1]
      %v395 = vld [vmem:[%s4] sm:$0x1]
      %v396 = vld [vmem:[%s377] sm:$0xff]
      %v397 = vld [vmem:[%s377 + $0x8] sm:$0xff]
      %vm398 = vcmask 64512
      %v400 = vsel %vm398, %v396, 0
      %v403 = vsel %vm398, %v397, 0
      %405 = vmatpush.msra.mxu0 0.0
      %406 = vmatpush.msra.mxu0 0.0
      %407 = vmatpush.msra.mxu0 0.0
      %408 = vmatpush.msra.mxu0 0.0
      %409 = vmatpush.msra.mxu0 0.0
      %410 = vmatpush.msra.mxu0 0.0
      %411 = vmatpush.msra.mxu0 0.0
      %412 = vmatpush.msra.mxu0 0.0
      %413 = vmatpush.msra.mxu0 0.0
      %414 = vmatpush.msra.mxu0 0.0
      %415 = vmatpush.msra.mxu0 0.0
      %416 = vmatpush.msra.mxu0 0.0
      %417 = vmatpush.msra.mxu0 0.0
      %418 = vmatpush.msra.mxu0 0.0
      %419 = vmatpush.msra.mxu0 0.0
      %420 = vmatpush.msra.mxu0 %v393
      %421 = vmatmul.f32.gmra.mxu0 %v400
      %v422 = vpop.f32.mrf.mxu0
      %v423 = vadd.f32 0.0, %v422
      %424 = vmatmul.f32.gmra.mxu0 %v403
      %v425 = vpop.f32.mrf.mxu0
      %v426 = vadd.f32 0.0, %v425
      %427 = vdwg.mxu0
      %v429 = vperm.slane %v394, 0
      %v431 = vmul.f32 %v423, %v429
      %v432 = vmul.f32 %v426, %v429
      %v434 = vperm.slane %v395, 0
      %v436 = vadd.f32 %v431, %v434
      %v437 = vadd.f32 %v432, %v434
      %v438 = vadd.f32 %v436, 3.0
      %v439 = vadd.f32 %v437, 3.0
      %v440 = vmax.f32 %v438, 0.0
      %v441 = vmax.f32 %v439, 0.0
      %v442 = vmin.f32 %v440, 6.0
      %v443 = vmin.f32 %v441, 6.0
      %v444 = vmul.f32 %v436, %v442
      %v445 = vmul.f32 %v437, %v443
      %v446 = vmul.f32 %v444, 0.16666667
      %v447 = vmul.f32 %v445, 0.16666667
      %v448 = vld [vmem:[%s382] sm:$0xff]
      %v449 = vld [vmem:[%s382 + $0x8] sm:$0xff]
      %v451 = vsel %vm398, %v448, 0
      %v454 = vsel %vm398, %v449, 0
      %456 = vmatpush.msra.mxu0 0.0
      %457 = vmatpush.msra.mxu0 0.0
      %458 = vmatpush.msra.mxu0 0.0
      %459 = vmatpush.msra.mxu0 0.0
      %460 = vmatpush.msra.mxu0 0.0
      %461 = vmatpush.msra.mxu0 0.0
      %462 = vmatpush.msra.mxu0 0.0
      %463 = vmatpush.msra.mxu0 0.0
      %464 = vmatpush.msra.mxu0 0.0
      %465 = vmatpush.msra.mxu0 0.0
      %466 = vmatpush.msra.mxu0 0.0
      %467 = vmatpush.msra.mxu0 0.0
      %468 = vmatpush.msra.mxu0 0.0
      %469 = vmatpush.msra.mxu0 0.0
      %470 = vmatpush.msra.mxu0 0.0
      %471 = vmatpush.msra.mxu0 %v393
      %472 = vmatmul.f32.gmra.mxu0 %v451
      %v473 = vpop.f32.mrf.mxu0
      %v474 = vadd.f32 0.0, %v473
      %475 = vmatmul.f32.gmra.mxu0 %v454
      %v476 = vpop.f32.mrf.mxu0
      %v477 = vadd.f32 0.0, %v476
      %478 = vdwg.mxu0
      %v479 = vmul.f32 %v474, %v429
      %v480 = vmul.f32 %v477, %v429
      %v481 = vadd.f32 %v479, %v434
      %v482 = vadd.f32 %v480, %v434
      %v483 = vadd.f32 %v481, 3.0
      %v484 = vadd.f32 %v482, 3.0
      %v485 = vmax.f32 %v483, 0.0
      %v486 = vmax.f32 %v484, 0.0
      %v487 = vmin.f32 %v485, 6.0
      %v488 = vmin.f32 %v486, 6.0
      %v489 = vmul.f32 %v481, %v487
      %v490 = vmul.f32 %v482, %v488
      %v491 = vmul.f32 %v489, 0.16666667
      %v492 = vmul.f32 %v490, 0.16666667
      %v493 = vld [vmem:[%s5] sm:$0xff]
      %v494 = vld [vmem:[%s6] sm:$0x1]
      %v496 = vperm.slane %v494, 0
      %v499 = vsel %vm398, %v446, 0
      %v502 = vsel %vm398, %v447, 0
      %504 = vmatpush.msra.mxu0 0.0
      %505 = vmatpush.msra.mxu0 0.0
      %506 = vmatpush.msra.mxu0 0.0
      %507 = vmatpush.msra.mxu0 0.0
      %508 = vmatpush.msra.mxu0 0.0
      %509 = vmatpush.msra.mxu0 0.0
      %510 = vmatpush.msra.mxu0 0.0
      %511 = vmatpush.msra.mxu0 0.0
      %512 = vmatpush.msra.mxu0 0.0
      %513 = vmatpush.msra.mxu0 0.0
      %514 = vmatpush.msra.mxu0 0.0
      %515 = vmatpush.msra.mxu0 0.0
      %516 = vmatpush.msra.mxu0 0.0
      %517 = vmatpush.msra.mxu0 0.0
      %518 = vmatpush.msra.mxu0 0.0
      %519 = vmatpush.msra.mxu0 %v493
      %520 = vmatmul.f32.gmra.mxu0 %v499
      %v521 = vpop.f32.mrf.mxu0
      %v522 = vadd.f32 %v496, %v521
      %523 = vmatmul.f32.gmra.mxu0 %v502
      %v524 = vpop.f32.mrf.mxu0
      %v525 = vadd.f32 %v496, %v524
      %526 = vdwg.mxu0
      %v527 = vsub.f32 0.0, %v522
      %v528 = vsub.f32 0.0, %v525
      %v529 = vmul.f32 %v527, 1.442695
      %v530 = vpow.pop %v529
      %v531 = vmul.f32 %v528, 1.442695
      %v532 = vpow.pop %v531
      %v533 = vadd.f32 %v530, 1.0
      %v534 = vadd.f32 %v532, 1.0
      %v535 = vrcp.pop %v533
      %v536 = vrcp.pop %v534
      %537 = vst.msk [vmem:[%s387] sm:$0xff] %vm398, %v535
      %538 = vst.msk [vmem:[%s387 + $0x8] sm:$0xff] %vm398, %v536
      %v539 = vld [vmem:[%s7] sm:$0xff]
      %v540 = vld [vmem:[%s8] sm:$0x1]
      %v542 = vperm.slane %v540, 0
      %v545 = vsel %vm398, %v491, 0
      %v548 = vsel %vm398, %v492, 0
      %550 = vmatpush.msra.mxu0 0.0
      %551 = vmatpush.msra.mxu0 0.0
      %552 = vmatpush.msra.mxu0 0.0
      %553 = vmatpush.msra.mxu0 0.0
      %554 = vmatpush.msra.mxu0 0.0
      %555 = vmatpush.msra.mxu0 0.0
      %556 = vmatpush.msra.mxu0 0.0
      %557 = vmatpush.msra.mxu0 0.0
      %558 = vmatpush.msra.mxu0 0.0
      %559 = vmatpush.msra.mxu0 0.0
      %560 = vmatpush.msra.mxu0 0.0
      %561 = vmatpush.msra.mxu0 0.0
      %562 = vmatpush.msra.mxu0 0.0
      %563 = vmatpush.msra.mxu0 0.0
      %564 = vmatpush.msra.mxu0 0.0
      %565 = vmatpush.msra.mxu0 %v539
      %566 = vmatmul.f32.gmra.mxu0 %v545
      %v567 = vpop.f32.mrf.mxu0
      %v568 = vadd.f32 %v542, %v567
      %569 = vmatmul.f32.gmra.mxu0 %v548
      %v570 = vpop.f32.mrf.mxu0
      %v571 = vadd.f32 %v542, %v570
      %572 = vdwg.mxu0
      %v573 = vsub.f32 0.0, %v568
      %v574 = vsub.f32 0.0, %v571
      %v575 = vmul.f32 %v573, 1.442695
      %v576 = vpow.pop %v575
      %v577 = vmul.f32 %v574, 1.442695
      %v578 = vpow.pop %v577
      %v579 = vadd.f32 %v576, 1.0
      %v580 = vadd.f32 %v578, 1.0
      %v581 = vrcp.pop %v579
      %v582 = vrcp.pop %v580
      %583 = vst.msk [vmem:[%s392] sm:$0xff] %vm398, %v581
      %584 = vst.msk [vmem:[%s392 + $0x8] sm:$0xff] %vm398, %v582
      %p585 = scmp.lt.s32.totalorder %s22, 1
      %s586 = scalar_select %p585, %s22, 1
      %s587 = smul.addr %s586, 2
      %s588 = smul.addr %s587, 8
      %s589 = scalar_lea.vmem %s9, %s588
      %p590 = scmp.lt.s32.totalorder %s22, 1
      %s591 = scalar_select %p590, %s22, 1
      %s592 = smul.addr %s591, 2
      %s593 = smul.addr %s592, 8
      %s594 = scalar_lea.vmem %s10, %s593
      // Predicated region
      $region57: #{resnet_block_forward.21} parent=55 // pred_check
        %p595 = pneg %p239
      $region58: #{resnet_block_forward.21} parent=55 // pred_check_branch
        %597 = sbr.rel (%p595) target = $region60
      $region59: #{resnet_block_forward.21} parent=55 // pred_region
        _
      $region60: #{resnet_block_forward.21} parent=55 // pred_fallthru
        _
      // Predicated region
      $region61: #{resnet_block_forward.21} parent=55 // pred_check
        %p598 = pneg %p265
      $region62: #{resnet_block_forward.21} parent=55 // pred_check_branch
        %600 = sbr.rel (%p598) target = $region64
      $region63: #{resnet_block_forward.21} parent=55 // pred_region
        _
      $region64: #{resnet_block_forward.21} parent=55 // pred_fallthru
        _
    $region56: #{resnet_block_forward.21} parent=5 // pred_fallthru
      _
    %p601 = scmp.le.s32.totalorder 2, %s17
    // Predicated region
    $region65: #{resnet_block_forward.21} parent=5 // pred_check
      %p602 = pneg %p601
    $region66: #{resnet_block_forward.21} parent=5 // pred_check_branch
      %604 = sbr.rel (%p602) target = $region68
    $region67: #{resnet_block_forward.21} parent=5 // pred_region
      %s605 = ssub.s32 %s17, 2
      // Predicated region
      $region69: #{resnet_block_forward.21} parent=67 // pred_check
        %p606 = pneg %p245
      $region70: #{resnet_block_forward.21} parent=67 // pred_check_branch
        %608 = sbr.rel (%p606) target = $region72
      $region71: #{resnet_block_forward.21} parent=67 // pred_region
        %p609 = scmp.lt.s32.totalorder %s23, 1
        %s610 = scalar_select %p609, %s23, 1
        %s611 = smul.addr %s610, 2
        %s612 = smul.addr %s611, 8
        %s613 = scalar_lea.vmem %s9, %s612
      $region72: #{resnet_block_forward.21} parent=67 // pred_fallthru
        _
      // Predicated region
      $region73: #{resnet_block_forward.21} parent=67 // pred_check
        %p614 = pneg %p271
      $region74: #{resnet_block_forward.21} parent=67 // pred_check_branch
        %616 = sbr.rel (%p614) target = $region76
      $region75: #{resnet_block_forward.21} parent=67 // pred_region
        %p617 = scmp.lt.s32.totalorder %s23, 1
        %s618 = scalar_select %p617, %s23, 1
        %s619 = smul.addr %s618, 2
        %s620 = smul.addr %s619, 8
        %s621 = scalar_lea.vmem %s10, %s620
      $region76: #{resnet_block_forward.21} parent=67 // pred_fallthru
        _
    $region68: #{resnet_block_forward.21} parent=5 // pred_fallthru
      _
  $region6: #{resnet_block_forward.21} parent=0 // loop_footer
    %s21 = sadd.s32 1, %s17
  $region7: #{resnet_block_forward.21} parent=0 // loop_footer_branch
    %16 = sbr.rel target = $region3
  $region8: #{resnet_block_forward.21} parent=0 // loop_exit
    _

// kernel: resnet_block_forward.22
$region0: #{resnet_block_forward.22}
  #allocation0 [shape = 'u32[]', space=smem, size = 0x4, offset = 0x4, fixed_abs, tag = 'smem constant byte address 0x4 - core index']
  #allocation1 [shape = 'u32[72,128]{1,0:T(1,128)}', space=vmem, size = 0x9000, scoped, tag = 'internal scratch']
  %s0 = inlined_call_operand.vmem [shape: f32[2,16,16,8], index: 0, kind: input, shape index: {}]
  %s1 = inlined_call_operand.vmem [shape: f32[2,16,8], index: 1, kind: input, shape index: {}]
  %s2 = inlined_call_operand.vmem [shape: f32[2,16,8], index: 2, kind: input, shape index: {}]
  %s3 = inlined_call_operand.vmem [shape: f32[2,16,16,8], index: 3, kind: output, shape index: {}]
  %s4 = sld [smem:[#allocation0]]
  $region45: #{resnet_block_forward.22} parent=0
    _
  %s6 = ssub.s32 1, %s4
  %s7 = scalar_select 0, %s6, %s4
  loop: start=0, step=1, limit=6
  $region2: #{resnet_block_forward.22} parent=0 // loop_pre_header
    _
  $region3: #{resnet_block_forward.22} parent=0 // loop_header
    %s9 = sphi 0, %s13
    %p10 = scmp.ge.s32.totalorder %s9, 6
    %s16 = sphi 0, %s28
    %s17 = sphi 0, %s24
    %s18 = sphi 0, %s16
    %s19 = sphi 0, %s17
    %s20 = sphi 0, %s18
    %s21 = sphi 0, %s19
    %s33 = sphi 0, %s35
    %s36 = sphi 0, %s33
    %s37 = sphi 0, %s36
    %s53 = sphi 0, %s37
    %s61 = sphi 0, %s63
    %s64 = sphi 0, %s61
    %s65 = sphi 0, %s64
    %s81 = sphi 0, %s65
    %s87 = sphi 0, %s89
    %s90 = sphi 0, %s87
    %s91 = sphi 0, %s90
    %s107 = sphi 0, %s91
    %s115 = sphi 0, %s117
    %s118 = sphi 0, %s115
    %s119 = sphi 0, %s118
    %s135 = sphi 0, %s119
  $region4: #{resnet_block_forward.22} parent=0 // loop_header_branch
    %12 = sbr.rel (%p10) target = $region8
  $region5: #{resnet_block_forward.22} parent=0 // loop_body
    %s14 = ssub.s32 %s9, 1
    %s15 = ssub.s32 %s9, 2
    %s22 = sadd.s32 1, %s17
    %p23 = scmp.ge.s32.totalorder %s22, 2
    %s24 = scalar_select %p23, 0, %s22
    %s25 = sadd.s32 1, %s16
    %s26 = scalar_select %p23, %s25, %s16
    %p27 = scmp.ge.s32.totalorder %s26, 2
    %s28 = scalar_select %p27, 0, %s26
    %s29 = ssub.s32 %s16, %s28
    %s30 = ssub.s32 %s17, %s24
    %s31 = sor.u32 %s29, %s30
    %p32 = scmp.eq.s32.totalorder %s31, 0
    %s34 = sadd.s32 %s33, 1
    %s35 = scalar_select %p32, %s33, %s34
    %p38 = pneg %p32
    %p39 = scmp.eq.s32.totalorder %s9, 3
    %p40 = por %p38, %p39
    %p41 = scmp.ne.s32.totalorder %s33, %s36
    %p42 = scmp.eq.s32.totalorder %s9, 0
    %p43 = por %p41, %p42
    %p44 = scmp.ne.s32.totalorder %s33, %s36
    %p45 = scmp.eq.s32.totalorder %s14, 3
    %p46 = por %p44, %p45
    %p47 = scmp.ne.s32.totalorder %s36, %s37
    %p48 = scmp.eq.s32.totalorder %s14, 0
    %p49 = por %p47, %p48
    %p50 = scmp.ne.s32.totalorder %s36, %s37
    %p51 = scmp.eq.s32.totalorder %s15, 3
    %p52 = por %p50, %p51
    %p54 = scmp.ne.s32.totalorder %s37, %s53
    %p55 = scmp.eq.s32.totalorder %s15, 0
    %p56 = por %p54, %p55
    %s57 = ssub.s32 %s16, %s28
    %s58 = ssub.s32 %s17, %s24
    %s59 = sor.u32 %s57, %s58
    %p60 = scmp.eq.s32.totalorder %s59, 0
    %s62 = sadd.s32 %s61, 1
    %s63 = scalar_select %p60, %s61, %s62
    %p66 = pneg %p60
    %p67 = scmp.eq.s32.totalorder %s9, 3
    %p68 = por %p66, %p67
    %p69 = scmp.ne.s32.totalorder %s61, %s64
    %p70 = scmp.eq.s32.totalorder %s9, 0
    %p71 = por %p69, %p70
    %p72 = scmp.ne.s32.totalorder %s61, %s64
    %p73 = scmp.eq.s32.totalorder %s14, 3
    %p74 = por %p72, %p73
    %p75 = scmp.ne.s32.totalorder %s64, %s65
    %p76 = scmp.eq.s32.totalorder %s14, 0
    %p77 = por %p75, %p76
    %p78 = scmp.ne.s32.totalorder %s64, %s65
    %p79 = scmp.eq.s32.totalorder %s15, 3
    %p80 = por %p78, %p79
    %p82 = scmp.ne.s32.totalorder %s65, %s81
    %p83 = scmp.eq.s32.totalorder %s15, 0
    %p84 = por %p82, %p83
    %s85 = ssub.s32 %s16, %s28
    %p86 = scmp.eq.s32.totalorder %s85, 0
    %s88 = sadd.s32 %s87, 1
    %s89 = scalar_select %p86, %s87, %s88
    %p92 = pneg %p86
    %p93 = scmp.eq.s32.totalorder %s9, 3
    %p94 = por %p92, %p93
    %p95 = scmp.ne.s32.totalorder %s87, %s90
    %p96 = scmp.eq.s32.totalorder %s9, 0
    %p97 = por %p95, %p96
    %p98 = scmp.ne.s32.totalorder %s87, %s90
    %p99 = scmp.eq.s32.totalorder %s14, 3
    %p100 = por %p98, %p99
    %p101 = scmp.ne.s32.totalorder %s90, %s91
    %p102 = scmp.eq.s32.totalorder %s14, 0
    %p103 = por %p101, %p102
    %p104 = scmp.ne.s32.totalorder %s90, %s91
    %p105 = scmp.eq.s32.totalorder %s15, 3
    %p106 = por %p104, %p105
    %p108 = scmp.ne.s32.totalorder %s91, %s107
    %p109 = scmp.eq.s32.totalorder %s15, 0
    %p110 = por %p108, %p109
    %s111 = ssub.s32 %s16, %s28
    %s112 = ssub.s32 %s17, %s24
    %s113 = sor.u32 %s111, %s112
    %p114 = scmp.eq.s32.totalorder %s113, 0
    %s116 = sadd.s32 %s115, 1
    %s117 = scalar_select %p114, %s115, %s116
    %p120 = pneg %p114
    %p121 = scmp.eq.s32.totalorder %s9, 3
    %p122 = por %p120, %p121
    %p123 = scmp.ne.s32.totalorder %s115, %s118
    %p124 = scmp.eq.s32.totalorder %s9, 0
    %p125 = por %p123, %p124
    %p126 = scmp.ne.s32.totalorder %s115, %s118
    %p127 = scmp.eq.s32.totalorder %s14, 3
    %p128 = por %p126, %p127
    %p129 = scmp.ne.s32.totalorder %s118, %s119
    %p130 = scmp.eq.s32.totalorder %s14, 0
    %p131 = por %p129, %p130
    %p132 = scmp.ne.s32.totalorder %s118, %s119
    %p133 = scmp.eq.s32.totalorder %s15, 3
    %p134 = por %p132, %p133
    %p136 = scmp.ne.s32.totalorder %s119, %s135
    %p137 = scmp.eq.s32.totalorder %s15, 0
    %p138 = por %p136, %p137
    %p139 = scmp.le.s32.totalorder 1, %s9
    %p140 = scmp.lt.s32.totalorder %s9, 5
    %p141 = pnand %p139, %p140
    %p142 = pneg %p141
    // Predicated region
    $region9: #{resnet_block_forward.22} parent=5 // pred_check
      _
    $region10: #{resnet_block_forward.22} parent=5 // pred_check_branch
      %144 = sbr.rel (%p141) target = $region12
    $region11: #{resnet_block_forward.22} parent=5 // pred_region
      %s145 = ssub.s32 %s9, 1
    $region12: #{resnet_block_forward.22} parent=5 // pred_fallthru
      _
    %p146 = scmp.lt.s32.totalorder %s9, 4
    // Predicated region
    $region13: #{resnet_block_forward.22} parent=5 // pred_check
      %p147 = pneg %p146
    $region14: #{resnet_block_forward.22} parent=5 // pred_check_branch
      %149 = sbr.rel (%p147) target = $region16
    $region15: #{resnet_block_forward.22} parent=5 // pred_region
      // Predicated region
      $region17: #{resnet_block_forward.22} parent=15 // pred_check
        %p150 = pneg %p43
      $region18: #{resnet_block_forward.22} parent=15 // pred_check_branch
        %152 = sbr.rel (%p150) target = $region20
      $region19: #{resnet_block_forward.22} parent=15 // pred_region
        %s153 = smul.u32 8, %s17
        %p154 = scmp.lt.s32.totalorder %s16, 1
        %s155 = scalar_select %p154, %s16, 1
        %p156 = scmp.lt.s32.totalorder %s153, 15
        %s157 = scalar_select %p156, %s153, 15
        %s158 = smul.addr %s157, 2
        %s159 = smul.addr %s155, 32
        %s160 = sadd.s32 %s158, %s159
        %s161 = smul.addr %s160, 8
        %s162 = scalar_lea.vmem %s0, %s161
        %s163 = smul.u32 8, %s17
      $region20: #{resnet_block_forward.22} parent=15 // pred_fallthru
        _
      // Predicated region
      $region21: #{resnet_block_forward.22} parent=15 // pred_check
        %p164 = pneg %p71
      $region22: #{resnet_block_forward.22} parent=15 // pred_check_branch
        %166 = sbr.rel (%p164) target = $region24
      $region23: #{resnet_block_forward.22} parent=15 // pred_region
        %p167 = scmp.lt.s32.totalorder %s16, 1
        %s168 = scalar_select %p167, %s16, 1
        %p169 = scmp.lt.s32.totalorder %s17, 1
        %s170 = scalar_select %p169, %s17, 1
        %s171 = smul.addr %s168, 2
        %s172 = sadd.s32 %s170, %s171
        %s173 = smul.addr %s172, 8
        %s174 = scalar_lea.vmem %s1, %s173
      $region24: #{resnet_block_forward.22} parent=15 // pred_fallthru
        _
      // Predicated region
      $region25: #{resnet_block_forward.22} parent=15 // pred_check
        %p175 = pneg %p97
      $region26: #{resnet_block_forward.22} parent=15 // pred_check_branch
        %177 = sbr.rel (%p175) target = $region28
      $region27: #{resnet_block_forward.22} parent=15 // pred_region
        %p178 = scmp.lt.s32.totalorder %s16, 1
        %s179 = scalar_select %p178, %s16, 1
        %s180 = smul.addr %s179, 2
        %s181 = smul.addr %s180, 8
        %s182 = scalar_lea.vmem %s2, %s181
      $region28: #{resnet_block_forward.22} parent=15 // pred_fallthru
        _
    $region16: #{resnet_block_forward.22} parent=5 // pred_fallthru
      _
    %p183 = scmp.le.s32.totalorder 1, %s9
    %p184 = scmp.lt.s32.totalorder %s9, 5
    %p185 = pnand %p183, %p184
    %p186 = pneg %p185
    // Predicated region
    $region29: #{resnet_block_forward.22} parent=5 // pred_check
      _
    $region30: #{resnet_block_forward.22} parent=5 // pred_check_branch
      %188 = sbr.rel (%p185) target = $region32
    $region31: #{resnet_block_forward.22} parent=5 // pred_region
      %s189 = ssub.s32 %s9, 1
      %s190 = smul.u32 8, %s19
      %p191 = scmp.lt.s32.totalorder %s18, 1
      %s192 = scalar_select %p191, %s18, 1
      %p193 = scmp.lt.s32.totalorder %s190, 15
      %s194 = scalar_select %p193, %s190, 15
      %s195 = smul.addr %s194, 2
      %s196 = smul.addr %s192, 32
      %s197 = sadd.s32 %s195, %s196
      %s198 = smul.addr %s197, 8
      %s199 = scalar_lea.vmem %s0, %s198
      %p200 = pneg %p49
      %p201 = pneg %p46
      %p202 = scmp.lt.s32.totalorder %s18, 1
      %s203 = scalar_select %p202, %s18, 1
      %p204 = scmp.lt.s32.totalorder %s19, 1
      %s205 = scalar_select %p204, %s19, 1
      %s206 = smul.addr %s203, 2
      %s207 = sadd.s32 %s205, %s206
      %s208 = smul.addr %s207, 8
      %s209 = scalar_lea.vmem %s1, %s208
      %p210 = pneg %p77
      %p211 = pneg %p74
      %p212 = scmp.lt.s32.totalorder %s18, 1
      %s213 = scalar_select %p212, %s18, 1
      %s214 = smul.addr %s213, 2
      %s215 = smul.addr %s214, 8
      %s216 = scalar_lea.vmem %s2, %s215
      %p217 = pneg %p103
      %p218 = pneg %p100
      %p219 = pneg %p131
      %p220 = pneg %p128
      %s221 = smul.u32 8, %s19
      %p222 = scmp.lt.s32.totalorder %s18, 1
      %s223 = scalar_select %p222, %s18, 1
      %p224 = scmp.lt.s32.totalorder %s221, 15
      %s225 = scalar_select %p224, %s221, 15
      %s226 = smul.addr %s225, 2
      %s227 = smul.addr %s223, 32
      %s228 = sadd.s32 %s226, %s227
      %s229 = smul.addr %s228, 8
      %s230 = scalar_lea.vmem %s3, %s229
      %s231 = smul.u32 8, %s19
      %p232 = scmp.lt.s32.totalorder %s18, 1
      %s233 = scalar_select %p232, %s18, 1
      %p234 = scmp.lt.s32.totalorder %s231, 15
      %s235 = scalar_select %p234, %s231, 15
      %s236 = smul.addr %s235, 2
      %s237 = smul.addr %s233, 32
      %s238 = sadd.s32 %s236, %s237
      %s239 = smul.addr %s238, 8
      %s240 = scalar_lea.vmem %s0, %s239
      %s241 = smul.u32 8, %s19
      %p242 = scmp.lt.s32.totalorder %s18, 1
      %s243 = scalar_select %p242, %s18, 1
      %p244 = scmp.lt.s32.totalorder %s19, 1
      %s245 = scalar_select %p244, %s19, 1
      %s246 = smul.addr %s243, 2
      %s247 = sadd.s32 %s245, %s246
      %s248 = smul.addr %s247, 8
      %s249 = scalar_lea.vmem %s1, %s248
      %p250 = scmp.lt.s32.totalorder %s18, 1
      %s251 = scalar_select %p250, %s18, 1
      %s252 = smul.addr %s251, 2
      %s253 = smul.addr %s252, 8
      %s254 = scalar_lea.vmem %s2, %s253
      %s255 = smul.u32 8, %s19
      %p256 = scmp.lt.s32.totalorder %s18, 1
      %s257 = scalar_select %p256, %s18, 1
      %p258 = scmp.lt.s32.totalorder %s255, 15
      %s259 = scalar_select %p258, %s255, 15
      %s260 = smul.addr %s259, 2
      %s261 = smul.addr %s257, 32
      %s262 = sadd.s32 %s260, %s261
      %s263 = smul.addr %s262, 8
      %s264 = scalar_lea.vmem %s3, %s263
      %s265 = smul.u32 8, %s19
      %v266 = vld [vmem:[%s249] sm:$0xff]
      %v267 = vld [vmem:[%s254] sm:$0xff]
      %v268 = vld [vmem:[%s254 + $0x8] sm:$0xff]
      %v269 = vld [vmem:[%s240] sm:$0xff]
      %v270 = vld [vmem:[%s240 + $0x8] sm:$0xff]
      %v271 = vld [vmem:[%s240 + $0x10] sm:$0xff]
      %v272 = vld [vmem:[%s240 + $0x18] sm:$0xff]
      %v273 = vld [vmem:[%s240 + $0x20] sm:$0xff]
      %v274 = vld [vmem:[%s240 + $0x28] sm:$0xff]
      %v275 = vld [vmem:[%s240 + $0x30] sm:$0xff]
      %v276 = vld [vmem:[%s240 + $0x38] sm:$0xff]
      %v277 = vld [vmem:[%s240 + $0x40] sm:$0xff]
      %v278 = vld [vmem:[%s240 + $0x48] sm:$0xff]
      %v279 = vld [vmem:[%s240 + $0x50] sm:$0xff]
      %v280 = vld [vmem:[%s240 + $0x58] sm:$0xff]
      %v281 = vld [vmem:[%s240 + $0x60] sm:$0xff]
      %v282 = vld [vmem:[%s240 + $0x68] sm:$0xff]
      %v283 = vld [vmem:[%s240 + $0x70] sm:$0xff]
      %v284 = vld [vmem:[%s240 + $0x78] sm:$0xff]
      %v285 = vmul.f32 %v269, %v267
      %v286 = vmul.f32 %v270, %v268
      %v287 = vmul.f32 %v271, %v267
      %v288 = vmul.f32 %v272, %v268
      %v289 = vmul.f32 %v273, %v267
      %v290 = vmul.f32 %v274, %v268
      %v291 = vmul.f32 %v275, %v267
      %v292 = vmul.f32 %v276, %v268
      %v293 = vmul.f32 %v277, %v267
      %v294 = vmul.f32 %v278, %v268
      %v295 = vmul.f32 %v279, %v267
      %v296 = vmul.f32 %v280, %v268
      %v297 = vmul.f32 %v281, %v267
      %v298 = vmul.f32 %v282, %v268
      %v299 = vmul.f32 %v283, %v267
      %v300 = vmul.f32 %v284, %v268
      %v302 = vrot.slane %v266, 1
      %v303 = vrot.slane %v266, 2
      %v304 = vrot.slane %v266, 3
      %v305 = vrot.slane %v266, 4
      %v306 = vrot.slane %v266, 5
      %v307 = vrot.slane %v266, 6
      %v308 = vrot.slane %v266, 7
      %v309 = vperm.slane %v266, 0
      %v310 = vperm.slane %v302, 0
      %v311 = vperm.slane %v303, 0
      %v312 = vperm.slane %v304, 0
      %v313 = vperm.slane %v305, 0
      %v314 = vperm.slane %v306, 0
      %v315 = vperm.slane %v307, 0
      %v316 = vperm.slane %v308, 0
      %v325 = vmul.f32 %v285, %v309
      %v326 = vmul.f32 %v286, %v309
      %v327 = vmul.f32 %v287, %v310
      %v328 = vmul.f32 %v288, %v310
      %v329 = vmul.f32 %v289, %v311
      %v330 = vmul.f32 %v290, %v311
      %v331 = vmul.f32 %v291, %v312
      %v332 = vmul.f32 %v292, %v312
      %v333 = vmul.f32 %v293, %v313
      %v334 = vmul.f32 %v294, %v313
      %v335 = vmul.f32 %v295, %v314
      %v336 = vmul.f32 %v296, %v314
      %v337 = vmul.f32 %v297, %v315
      %v338 = vmul.f32 %v298, %v315
      %v339 = vmul.f32 %v299, %v316
      %v340 = vmul.f32 %v300, %v316
      %vm341 = vcmask 64512
      %342 = vst.msk [vmem:[%s264] sm:$0xff] %vm341, %v325
      %343 = vst.msk [vmem:[%s264 + $0x8] sm:$0xff] %vm341, %v326
      %344 = vst.msk [vmem:[%s264 + $0x10] sm:$0xff] %vm341, %v327
      %345 = vst.msk [vmem:[%s264 + $0x18] sm:$0xff] %vm341, %v328
      %346 = vst.msk [vmem:[%s264 + $0x20] sm:$0xff] %vm341, %v329
      %347 = vst.msk [vmem:[%s264 + $0x28] sm:$0xff] %vm341, %v330
      %348 = vst.msk [vmem:[%s264 + $0x30] sm:$0xff] %vm341, %v331
      %349 = vst.msk [vmem:[%s264 + $0x38] sm:$0xff] %vm341, %v332
      %350 = vst.msk [vmem:[%s264 + $0x40] sm:$0xff] %vm341, %v333
      %351 = vst.msk [vmem:[%s264 + $0x48] sm:$0xff] %vm341, %v334
      %352 = vst.msk [vmem:[%s264 + $0x50] sm:$0xff] %vm341, %v335
      %353 = vst.msk [vmem:[%s264 + $0x58] sm:$0xff] %vm341, %v336
      %354 = vst.msk [vmem:[%s264 + $0x60] sm:$0xff] %vm341, %v337
      %355 = vst.msk [vmem:[%s264 + $0x68] sm:$0xff] %vm341, %v338
      %356 = vst.msk [vmem:[%s264 + $0x70] sm:$0xff] %vm341, %v339
      %357 = vst.msk [vmem:[%s264 + $0x78] sm:$0xff] %vm341, %v340
      %s358 = smul.u32 8, %s19
      %p359 = scmp.lt.s32.totalorder %s18, 1
      %s360 = scalar_select %p359, %s18, 1
      %p361 = scmp.lt.s32.totalorder %s358, 15
      %s362 = scalar_select %p361, %s358, 15
      %s363 = smul.addr %s362, 2
      %s364 = smul.addr %s360, 32
      %s365 = sadd.s32 %s363, %s364
      %s366 = smul.addr %s365, 8
      %s367 = scalar_lea.vmem %s3, %s366
      // Predicated region
      $region33: #{resnet_block_forward.22} parent=31 // pred_check
        %p368 = pneg %p128
      $region34: #{resnet_block_forward.22} parent=31 // pred_check_branch
        %370 = sbr.rel (%p368) target = $region36
      $region35: #{resnet_block_forward.22} parent=31 // pred_region
        %s371 = smul.u32 8, %s19
      $region36: #{resnet_block_forward.22} parent=31 // pred_fallthru
        _
    $region32: #{resnet_block_forward.22} parent=5 // pred_fallthru
      _
    %p372 = scmp.le.s32.totalorder 2, %s9
    // Predicated region
    $region37: #{resnet_block_forward.22} parent=5 // pred_check
      %p373 = pneg %p372
    $region38: #{resnet_block_forward.22} parent=5 // pred_check_branch
      %375 = sbr.rel (%p373) target = $region40
    $region39: #{resnet_block_forward.22} parent=5 // pred_region
      %s376 = ssub.s32 %s9, 2
      // Predicated region
      $region41: #{resnet_block_forward.22} parent=39 // pred_check
        %p377 = pneg %p134
      $region42: #{resnet_block_forward.22} parent=39 // pred_check_branch
        %379 = sbr.rel (%p377) target = $region44
      $region43: #{resnet_block_forward.22} parent=39 // pred_region
        %s380 = smul.u32 8, %s21
        %p381 = scmp.lt.s32.totalorder %s20, 1
        %s382 = scalar_select %p381, %s20, 1
        %p383 = scmp.lt.s32.totalorder %s380, 15
        %s384 = scalar_select %p383, %s380, 15
        %s385 = smul.addr %s384, 2
        %s386 = smul.addr %s382, 32
        %s387 = sadd.s32 %s385, %s386
        %s388 = smul.addr %s387, 8
        %s389 = scalar_lea.vmem %s3, %s388
      $region44: #{resnet_block_forward.22} parent=39 // pred_fallthru
        _
    $region40: #{resnet_block_forward.22} parent=5 // pred_fallthru
      _
  $region6: #{resnet_block_forward.22} parent=0 // loop_footer
    %s13 = sadd.s32 1, %s9
  $region7: #{resnet_block_forward.22} parent=0 // loop_footer_branch
    %8 = sbr.rel target = $region3
  $region8: #{resnet_block_forward.22} parent=0 // loop_exit
    _

// kernel: resnet_block_forward.14
$region0: #{resnet_block_forward.14}
  #allocation0 [shape = 'u32[]', space=smem, size = 0x4, offset = 0x4, fixed_abs, tag = 'smem constant byte address 0x4 - core index']
  #allocation1 [shape = 'u32[72,128]{1,0:T(1,128)}', space=vmem, size = 0x9000, scoped, tag = 'internal scratch']
  %s0 = inlined_call_operand.vmem [shape: bf16[512,36], index: 0, kind: input, shape index: {}]
  %s1 = inlined_call_operand.vmem [shape: bf16[36,8], index: 1, kind: input, shape index: {}]
  %s2 = inlined_call_operand.vmem [shape: f32[1,8], index: 2, kind: input, shape index: {}]
  %s3 = inlined_call_operand.vmem [shape: f32[1,8], index: 3, kind: input, shape index: {}]
  %s4 = inlined_call_operand.vmem [shape: f32[512,8], index: 4, kind: output, shape index: {}]
  %s5 = sld [smem:[#allocation0]]
  $region49: #{resnet_block_forward.14} parent=0
    _
  %s7 = ssub.s32 1, %s5
  %s8 = scalar_select 0, %s7, %s5
  loop: start=0, step=1, limit=4
  $region2: #{resnet_block_forward.14} parent=0 // loop_pre_header
    _
  $region3: #{resnet_block_forward.14} parent=0 // loop_header
    %s10 = sphi 0, %s14
    %p11 = scmp.ge.s32.totalorder %s10, 4
    %s20 = sphi 0, %s22
    %s23 = sphi 0, %s20
    %s24 = sphi 0, %s23
    %s40 = sphi 0, %s24
    %s44 = sphi 0, %s44
    %s46 = sphi 0, %s44
    %s47 = sphi 0, %s46
    %s61 = sphi 0, %s47
    %s65 = sphi 0, %s65
    %s67 = sphi 0, %s65
    %s68 = sphi 0, %s67
    %s82 = sphi 0, %s68
    %s86 = sphi 0, %s86
    %s88 = sphi 0, %s86
    %s89 = sphi 0, %s88
    %s103 = sphi 0, %s89
    %s109 = sphi 0, %s111
    %s112 = sphi 0, %s109
    %s113 = sphi 0, %s112
    %s129 = sphi 0, %s113
  $region4: #{resnet_block_forward.14} parent=0 // loop_header_branch
    %13 = sbr.rel (%p11) target = $region8
  $region5: #{resnet_block_forward.14} parent=0 // loop_body
    %s15 = ssub.s32 %s10, 1
    %s16 = ssub.s32 %s10, 2
    %s17 = sadd.s32 %s10, 1
    %s18 = ssub.s32 %s10, %s17
    %p19 = scmp.eq.s32.totalorder %s18, 0
    %s21 = sadd.s32 %s20, 1
    %s22 = scalar_select %p19, %s20, %s21
    %p25 = pneg %p19
    %p26 = scmp.eq.s32.totalorder %s10, 1
    %p27 = por %p25, %p26
    %p28 = scmp.ne.s32.totalorder %s20, %s23
    %p29 = scmp.eq.s32.totalorder %s10, 0
    %p30 = por %p28, %p29
    %p31 = scmp.ne.s32.totalorder %s20, %s23
    %p32 = scmp.eq.s32.totalorder %s15, 1
    %p33 = por %p31, %p32
    %p34 = scmp.ne.s32.totalorder %s23, %s24
    %p35 = scmp.eq.s32.totalorder %s15, 0
    %p36 = por %p34, %p35
    %p37 = scmp.ne.s32.totalorder %s23, %s24
    %p38 = scmp.eq.s32.totalorder %s16, 1
    %p39 = por %p37, %p38
    %p41 = scmp.ne.s32.totalorder %s24, %s40
    %p42 = scmp.eq.s32.totalorder %s16, 0
    %p43 = por %p41, %p42
    %s45 = sadd.s32 %s44, 1
    %p48 = scmp.eq.s32.totalorder %s10, 1
    %p49 = scmp.ne.s32.totalorder %s44, %s46
    %p50 = scmp.eq.s32.totalorder %s10, 0
    %p51 = por %p49, %p50
    %p52 = scmp.ne.s32.totalorder %s44, %s46
    %p53 = scmp.eq.s32.totalorder %s15, 1
    %p54 = por %p52, %p53
    %p55 = scmp.ne.s32.totalorder %s46, %s47
    %p56 = scmp.eq.s32.totalorder %s15, 0
    %p57 = por %p55, %p56
    %p58 = scmp.ne.s32.totalorder %s46, %s47
    %p59 = scmp.eq.s32.totalorder %s16, 1
    %p60 = por %p58, %p59
    %p62 = scmp.ne.s32.totalorder %s47, %s61
    %p63 = scmp.eq.s32.totalorder %s16, 0
    %p64 = por %p62, %p63
    %s66 = sadd.s32 %s65, 1
    %p69 = scmp.eq.s32.totalorder %s10, 1
    %p70 = scmp.ne.s32.totalorder %s65, %s67
    %p71 = scmp.eq.s32.totalorder %s10, 0
    %p72 = por %p70, %p71
    %p73 = scmp.ne.s32.totalorder %s65, %s67
    %p74 = scmp.eq.s32.totalorder %s15, 1
    %p75 = por %p73, %p74
    %p76 = scmp.ne.s32.totalorder %s67, %s68
    %p77 = scmp.eq.s32.totalorder %s15, 0
    %p78 = por %p76, %p77
    %p79 = scmp.ne.s32.totalorder %s67, %s68
    %p80 = scmp.eq.s32.totalorder %s16, 1
    %p81 = por %p79, %p80
    %p83 = scmp.ne.s32.totalorder %s68, %s82
    %p84 = scmp.eq.s32.totalorder %s16, 0
    %p85 = por %p83, %p84
    %s87 = sadd.s32 %s86, 1
    %p90 = scmp.eq.s32.totalorder %s10, 1
    %p91 = scmp.ne.s32.totalorder %s86, %s88
    %p92 = scmp.eq.s32.totalorder %s10, 0
    %p93 = por %p91, %p92
    %p94 = scmp.ne.s32.totalorder %s86, %s88
    %p95 = scmp.eq.s32.totalorder %s15, 1
    %p96 = por %p94, %p95
    %p97 = scmp.ne.s32.totalorder %s88, %s89
    %p98 = scmp.eq.s32.totalorder %s15, 0
    %p99 = por %p97, %p98
    %p100 = scmp.ne.s32.totalorder %s88, %s89
    %p101 = scmp.eq.s32.totalorder %s16, 1
    %p102 = por %p100, %p101
    %p104 = scmp.ne.s32.totalorder %s89, %s103
    %p105 = scmp.eq.s32.totalorder %s16, 0
    %p106 = por %p104, %p105
    %s107 = ssub.s32 %s10, %s17
    %p108 = scmp.eq.s32.totalorder %s107, 0
    %s110 = sadd.s32 %s109, 1
    %s111 = scalar_select %p108, %s109, %s110
    %p114 = pneg %p108
    %p115 = scmp.eq.s32.totalorder %s10, 1
    %p116 = por %p114, %p115
    %p117 = scmp.ne.s32.totalorder %s109, %s112
    %p118 = scmp.eq.s32.totalorder %s10, 0
    %p119 = por %p117, %p118
    %p120 = scmp.ne.s32.totalorder %s109, %s112
    %p121 = scmp.eq.s32.totalorder %s15, 1
    %p122 = por %p120, %p121
    %p123 = scmp.ne.s32.totalorder %s112, %s113
    %p124 = scmp.eq.s32.totalorder %s15, 0
    %p125 = por %p123, %p124
    %p126 = scmp.ne.s32.totalorder %s112, %s113
    %p127 = scmp.eq.s32.totalorder %s16, 1
    %p128 = por %p126, %p127
    %p130 = scmp.ne.s32.totalorder %s113, %s129
    %p131 = scmp.eq.s32.totalorder %s16, 0
    %p132 = por %p130, %p131
    %p133 = scmp.le.s32.totalorder 1, %s10
    %p134 = scmp.lt.s32.totalorder %s10, 3
    %p135 = pnand %p133, %p134
    %p136 = pneg %p135
    // Predicated region
    $region9: #{resnet_block_forward.14} parent=5 // pred_check
      _
    $region10: #{resnet_block_forward.14} parent=5 // pred_check_branch
      %138 = sbr.rel (%p135) target = $region12
    $region11: #{resnet_block_forward.14} parent=5 // pred_region
      %s139 = ssub.s32 %s10, 1
      // Predicated region
      $region13: #{resnet_block_forward.14} parent=11 // pred_check
        %p140 = pneg %p57
      $region14: #{resnet_block_forward.14} parent=11 // pred_check_branch
        %142 = sbr.rel (%p140) target = $region16
      $region15: #{resnet_block_forward.14} parent=11 // pred_region
        _
      $region16: #{resnet_block_forward.14} parent=11 // pred_fallthru
        _
      // Predicated region
      $region17: #{resnet_block_forward.14} parent=11 // pred_check
        %p143 = pneg %p78
      $region18: #{resnet_block_forward.14} parent=11 // pred_check_branch
        %145 = sbr.rel (%p143) target = $region20
      $region19: #{resnet_block_forward.14} parent=11 // pred_region
        _
      $region20: #{resnet_block_forward.14} parent=11 // pred_fallthru
        _
      // Predicated region
      $region21: #{resnet_block_forward.14} parent=11 // pred_check
        %p146 = pneg %p99
      $region22: #{resnet_block_forward.14} parent=11 // pred_check_branch
        %148 = sbr.rel (%p146) target = $region24
      $region23: #{resnet_block_forward.14} parent=11 // pred_region
        _
      $region24: #{resnet_block_forward.14} parent=11 // pred_fallthru
        _
    $region12: #{resnet_block_forward.14} parent=5 // pred_fallthru
      _
    %p149 = scmp.lt.s32.totalorder %s10, 2
    // Predicated region
    $region25: #{resnet_block_forward.14} parent=5 // pred_check
      %p150 = pneg %p149
    $region26: #{resnet_block_forward.14} parent=5 // pred_check_branch
      %152 = sbr.rel (%p150) target = $region28
    $region27: #{resnet_block_forward.14} parent=5 // pred_region
      // Predicated region
      $region29: #{resnet_block_forward.14} parent=27 // pred_check
        %p153 = pneg %p30
      $region30: #{resnet_block_forward.14} parent=27 // pred_check_branch
        %155 = sbr.rel (%p153) target = $region32
      $region31: #{resnet_block_forward.14} parent=27 // pred_region
        %s156 = smul.u32 32, %s10
        %p157 = scmp.lt.s32.totalorder %s156, 63
        %s158 = scalar_select %p157, %s156, 63
        %s159 = smul.addr %s158, 4
        %s160 = scalar_lea.vmem %s0, %s159
        %s161 = smul.u32 32, %s10
      $region32: #{resnet_block_forward.14} parent=27 // pred_fallthru
        _
    $region28: #{resnet_block_forward.14} parent=5 // pred_fallthru
      _
    %p162 = scmp.le.s32.totalorder 1, %s10
    %p163 = scmp.lt.s32.totalorder %s10, 3
    %p164 = pnand %p162, %p163
    %p165 = pneg %p164
    // Predicated region
    $region33: #{resnet_block_forward.14} parent=5 // pred_check
      _
    $region34: #{resnet_block_forward.14} parent=5 // pred_check_branch
      %167 = sbr.rel (%p164) target = $region36
    $region35: #{resnet_block_forward.14} parent=5 // pred_region
      %s168 = ssub.s32 %s10, 1
      %s169 = smul.u32 32, %s15
      %p170 = scmp.lt.s32.totalorder %s169, 63
      %s171 = scalar_select %p170, %s169, 63
      %s172 = smul.addr %s171, 4
      %s173 = scalar_lea.vmem %s0, %s172
      %p174 = pneg %p36
      %p175 = pneg %p33
      %p176 = pneg %p57
      %p177 = pneg %p54
      %p178 = pneg %p78
      %p179 = pneg %p75
      %p180 = pneg %p99
      %p181 = pneg %p96
      %p182 = pneg %p125
      %p183 = pneg %p122
      %s184 = smul.u32 32, %s15
      %p185 = scmp.lt.s32.totalorder %s184, 63
      %s186 = scalar_select %p185, %s184, 63
      %s187 = smul.addr %s186, 8
      %s188 = scalar_lea.vmem %s4, %s187
      %s189 = smul.u32 32, %s15
      %p190 = scmp.lt.s32.totalorder %s189, 63
      %s191 = scalar_select %p190, %s189, 63
      %s192 = smul.addr %s191, 4
      %s193 = scalar_lea.vmem %s0, %s192
      %s194 = smul.u32 32, %s15
      %s195 = smul.u32 32, %s15
      %p196 = scmp.lt.s32.totalorder %s195, 63
      %s197 = scalar_select %p196, %s195, 63
      %s198 = smul.addr %s197, 8
      %s199 = scalar_lea.vmem %s4, %s198
      %s200 = smul.u32 32, %s15
      %v202 = vld [vmem:[%s193] sm:$0xf]
      %v203 = vld [vmem:[%s193 + $0x4] sm:$0xf]
      %v204 = vld [vmem:[%s193 + $0x8] sm:$0xf]
      %v205 = vld [vmem:[%s193 + $0xc] sm:$0xf]
      %v206 = vld [vmem:[%s193 + $0x10] sm:$0xf]
      %v207 = vld [vmem:[%s193 + $0x14] sm:$0xf]
      %v208 = vld [vmem:[%s193 + $0x18] sm:$0xf]
      %v209 = vld [vmem:[%s193 + $0x1c] sm:$0xf]
      %v210 = vld [vmem:[%s193 + $0x20] sm:$0xf]
      %v211 = vld [vmem:[%s193 + $0x24] sm:$0xf]
      %v212 = vld [vmem:[%s193 + $0x28] sm:$0xf]
      %v213 = vld [vmem:[%s193 + $0x2c] sm:$0xf]
      %v214 = vld [vmem:[%s193 + $0x30] sm:$0xf]
      %v215 = vld [vmem:[%s193 + $0x34] sm:$0xf]
      %v216 = vld [vmem:[%s193 + $0x38] sm:$0xf]
      %v217 = vld [vmem:[%s193 + $0x3c] sm:$0xf]
      %v218 = vld [vmem:[%s193 + $0x40] sm:$0xf]
      %v219 = vld [vmem:[%s193 + $0x44] sm:$0xf]
      %v220 = vld [vmem:[%s193 + $0x48] sm:$0xf]
      %v221 = vld [vmem:[%s193 + $0x4c] sm:$0xf]
      %v222 = vld [vmem:[%s193 + $0x50] sm:$0xf]
      %v223 = vld [vmem:[%s193 + $0x54] sm:$0xf]
      %v224 = vld [vmem:[%s193 + $0x58] sm:$0xf]
      %v225 = vld [vmem:[%s193 + $0x5c] sm:$0xf]
      %v226 = vld [vmem:[%s193 + $0x60] sm:$0xf]
      %v227 = vld [vmem:[%s193 + $0x64] sm:$0xf]
      %v228 = vld [vmem:[%s193 + $0x68] sm:$0xf]
      %v229 = vld [vmem:[%s193 + $0x6c] sm:$0xf]
      %v230 = vld [vmem:[%s193 + $0x70] sm:$0xf]
      %v231 = vld [vmem:[%s193 + $0x74] sm:$0xf]
      %v232 = vld [vmem:[%s193 + $0x78] sm:$0xf]
      %v233 = vld [vmem:[%s193 + $0x7c] sm:$0xf]
      %v234 = vld [vmem:[%s1] sm:$0xf]
      %v235 = vld [vmem:[%s1 + $0x4] sm:$0xf]
      %v236 = vld [vmem:[%s1 + $0x8] sm:$0xf]
      %v237 = vld [vmem:[%s1 + $0xc] sm:$0xf]
      %v238 = vld [vmem:[%s1 + $0x10] sm:$0x3]
      %v271 = vunpack.c.l.b16 %v202
      %v272 = vunpack.c.l.b16 %v203
      %v273 = vunpack.c.l.b16 %v204
      %v274 = vunpack.c.l.b16 %v205
      %v275 = vunpack.c.l.b16 %v206
      %v276 = vunpack.c.l.b16 %v207
      %v277 = vunpack.c.l.b16 %v208
      %v278 = vunpack.c.l.b16 %v209
      %v279 = vunpack.c.l.b16 %v210
      %v280 = vunpack.c.l.b16 %v211
      %v281 = vunpack.c.l.b16 %v212
      %v282 = vunpack.c.l.b16 %v213
      %v283 = vunpack.c.l.b16 %v214
      %v284 = vunpack.c.l.b16 %v215
      %v285 = vunpack.c.l.b16 %v216
      %v286 = vunpack.c.l.b16 %v217
      %v287 = vunpack.c.l.b16 %v218
      %v288 = vunpack.c.l.b16 %v219
      %v289 = vunpack.c.l.b16 %v220
      %v290 = vunpack.c.l.b16 %v221
      %v291 = vunpack.c.l.b16 %v222
      %v292 = vunpack.c.l.b16 %v223
      %v293 = vunpack.c.l.b16 %v224
      %v294 = vunpack.c.l.b16 %v225
      %v295 = vunpack.c.l.b16 %v226
      %v296 = vunpack.c.l.b16 %v227
      %v297 = vunpack.c.l.b16 %v228
      %v298 = vunpack.c.l.b16 %v229
      %v299 = vunpack.c.l.b16 %v230
      %v300 = vunpack.c.l.b16 %v231
      %v301 = vunpack.c.l.b16 %v232
      %v302 = vunpack.c.l.b16 %v233
      %v303 = vpack.c.b16 %v272, %v271
      %v304 = vpack.c.b16 %v274, %v273
      %v305 = vpack.c.b16 %v276, %v275
      %v306 = vpack.c.b16 %v278, %v277
      %v307 = vpack.c.b16 %v280, %v279
      %v308 = vpack.c.b16 %v282, %v281
      %v309 = vpack.c.b16 %v284, %v283
      %v310 = vpack.c.b16 %v286, %v285
      %v311 = vpack.c.b16 %v288, %v287
      %v312 = vpack.c.b16 %v290, %v289
      %v313 = vpack.c.b16 %v292, %v291
      %v314 = vpack.c.b16 %v294, %v293
      %v315 = vpack.c.b16 %v296, %v295
      %v316 = vpack.c.b16 %v298, %v297
      %v317 = vpack.c.b16 %v300, %v299
      %v318 = vpack.c.b16 %v302, %v301
      %v324 = vunpack.c.l.b16 %v234
      %v325 = vunpack.c.l.b16 %v235
      %v326 = vunpack.c.l.b16 %v236
      %v327 = vunpack.c.l.b16 %v237
      %v328 = vunpack.c.l.b16 %v238
      %v329 = vpack.c.b16 %v325, %v324
      %v330 = vpack.c.b16 %v327, %v326
      %v331 = vpack.c.b16 %v328, %v328
      %vm334 = vcmask 293888
      %v336 = vsel %vm334, %v303, 0
      %v339 = vsel %vm334, %v304, 0
      %v342 = vsel %vm334, %v305, 0
      %v345 = vsel %vm334, %v306, 0
      %v348 = vsel %vm334, %v307, 0
      %v351 = vsel %vm334, %v308, 0
      %v354 = vsel %vm334, %v309, 0
      %v357 = vsel %vm334, %v310, 0
      %v360 = vsel %vm334, %v311, 0
      %v363 = vsel %vm334, %v312, 0
      %v366 = vsel %vm334, %v313, 0
      %v369 = vsel %vm334, %v314, 0
      %v372 = vsel %vm334, %v315, 0
      %v375 = vsel %vm334, %v316, 0
      %v378 = vsel %vm334, %v317, 0
      %v381 = vsel %vm334, %v318, 0
      %vm383 = vcmask 1041408
      %v385 = vsel %vm383, %v331, 0
      %387 = vmatpush.bf16.msra.mxu0 0
      %388 = vmatpush.bf16.msra.mxu0 0
      %389 = vmatpush.bf16.msra.mxu0 0
      %390 = vmatpush.bf16.msra.mxu0 0
      %391 = vmatpush.bf16.msra.mxu0 0
      %392 = vmatpush.bf16.msra.mxu0 %v385
      %393 = vmatpush.bf16.msra.mxu0 %v330
      %394 = vmatpush.bf16.msra.mxu0 %v329
      %395 = vmatmul.bf16.gmra.mxu0 %v336
      %v396 = vpop.f32.mrf.mxu0
      %v397 = vadd.f32 0.0, %v396
      %v398 = vpop.f32.mrf.mxu0
      %v399 = vadd.f32 0.0, %v398
      %400 = vmatmul.bf16.gmra.mxu0 %v339
      %v401 = vpop.f32.mrf.mxu0
      %v402 = vadd.f32 0.0, %v401
      %v403 = vpop.f32.mrf.mxu0
      %v404 = vadd.f32 0.0, %v403
      %405 = vmatmul.bf16.gmra.mxu0 %v342
      %v406 = vpop.f32.mrf.mxu0
      %v407 = vadd.f32 0.0, %v406
      %v408 = vpop.f32.mrf.mxu0
      %v409 = vadd.f32 0.0, %v408
      %410 = vmatmul.bf16.gmra.mxu0 %v345
      %v411 = vpop.f32.mrf.mxu0
      %v412 = vadd.f32 0.0, %v411
      %v413 = vpop.f32.mrf.mxu0
      %v414 = vadd.f32 0.0, %v413
      %415 = vmatmul.bf16.gmra.mxu0 %v348
      %v416 = vpop.f32.mrf.mxu0
      %v417 = vadd.f32 0.0, %v416
      %v418 = vpop.f32.mrf.mxu0
      %v419 = vadd.f32 0.0, %v418
      %420 = vmatmul.bf16.gmra.mxu0 %v351
      %v421 = vpop.f32.mrf.mxu0
      %v422 = vadd.f32 0.0, %v421
      %v423 = vpop.f32.mrf.mxu0
      %v424 = vadd.f32 0.0, %v423
      %425 = vmatmul.bf16.gmra.mxu0 %v354
      %v426 = vpop.f32.mrf.mxu0
      %v427 = vadd.f32 0.0, %v426
      %v428 = vpop.f32.mrf.mxu0
      %v429 = vadd.f32 0.0, %v428
      %430 = vmatmul.bf16.gmra.mxu0 %v357
      %v431 = vpop.f32.mrf.mxu0
      %v432 = vadd.f32 0.0, %v431
      %v433 = vpop.f32.mrf.mxu0
      %v434 = vadd.f32 0.0, %v433
      %435 = vmatmul.bf16.gmra.mxu0 %v360
      %v436 = vpop.f32.mrf.mxu0
      %v437 = vadd.f32 0.0, %v436
      %v438 = vpop.f32.mrf.mxu0
      %v439 = vadd.f32 0.0, %v438
      %440 = vmatmul.bf16.gmra.mxu0 %v363
      %v441 = vpop.f32.mrf.mxu0
      %v442 = vadd.f32 0.0, %v441
      %v443 = vpop.f32.mrf.mxu0
      %v444 = vadd.f32 0.0, %v443
      %445 = vmatmul.bf16.gmra.mxu0 %v366
      %v446 = vpop.f32.mrf.mxu0
      %v447 = vadd.f32 0.0, %v446
      %v448 = vpop.f32.mrf.mxu0
      %v449 = vadd.f32 0.0, %v448
      %450 = vmatmul.bf16.gmra.mxu0 %v369
      %v451 = vpop.f32.mrf.mxu0
      %v452 = vadd.f32 0.0, %v451
      %v453 = vpop.f32.mrf.mxu0
      %v454 = vadd.f32 0.0, %v453
      %455 = vmatmul.bf16.gmra.mxu0 %v372
      %v456 = vpop.f32.mrf.mxu0
      %v457 = vadd.f32 0.0, %v456
      %v458 = vpop.f32.mrf.mxu0
      %v459 = vadd.f32 0.0, %v458
      %460 = vmatmul.bf16.gmra.mxu0 %v375
      %v461 = vpop.f32.mrf.mxu0
      %v462 = vadd.f32 0.0, %v461
      %v463 = vpop.f32.mrf.mxu0
      %v464 = vadd.f32 0.0, %v463
      %465 = vmatmul.bf16.gmra.mxu0 %v378
      %v466 = vpop.f32.mrf.mxu0
      %v467 = vadd.f32 0.0, %v466
      %v468 = vpop.f32.mrf.mxu0
      %v469 = vadd.f32 0.0, %v468
      %470 = vmatmul.bf16.gmra.mxu0 %v381
      %v471 = vpop.f32.mrf.mxu0
      %v472 = vadd.f32 0.0, %v471
      %v473 = vpop.f32.mrf.mxu0
      %v474 = vadd.f32 0.0, %v473
      %475 = vdwg.mxu0
      %v476 = vld [vmem:[%s2] sm:$0x1]
      %v478 = vperm.slane %v476, 0
      %v480 = vmul.f32 %v397, %v478
      %v481 = vmul.f32 %v399, %v478
      %v482 = vmul.f32 %v402, %v478
      %v483 = vmul.f32 %v404, %v478
      %v484 = vmul.f32 %v407, %v478
      %v485 = vmul.f32 %v409, %v478
      %v486 = vmul.f32 %v412, %v478
      %v487 = vmul.f32 %v414, %v478
      %v488 = vmul.f32 %v417, %v478
      %v489 = vmul.f32 %v419, %v478
      %v490 = vmul.f32 %v422, %v478
      %v491 = vmul.f32 %v424, %v478
      %v492 = vmul.f32 %v427, %v478
      %v493 = vmul.f32 %v429, %v478
      %v494 = vmul.f32 %v432, %v478
      %v495 = vmul.f32 %v434, %v478
      %v496 = vmul.f32 %v437, %v478
      %v497 = vmul.f32 %v439, %v478
      %v498 = vmul.f32 %v442, %v478
      %v499 = vmul.f32 %v444, %v478
      %v500 = vmul.f32 %v447, %v478
      %v501 = vmul.f32 %v449, %v478
      %v502 = vmul.f32 %v452, %v478
      %v503 = vmul.f32 %v454, %v478
      %v504 = vmul.f32 %v457, %v478
      %v505 = vmul.f32 %v459, %v478
      %v506 = vmul.f32 %v462, %v478
      %v507 = vmul.f32 %v464, %v478
      %v508 = vmul.f32 %v467, %v478
      %v509 = vmul.f32 %v469, %v478
      %v510 = vmul.f32 %v472, %v478
      %v511 = vmul.f32 %v474, %v478
      %v512 = vld [vmem:[%s3] sm:$0x1]
      %v514 = vperm.slane %v512, 0
      %v516 = vadd.f32 %v480, %v514
      %v517 = vadd.f32 %v481, %v514
      %v518 = vadd.f32 %v482, %v514
      %v519 = vadd.f32 %v483, %v514
      %v520 = vadd.f32 %v484, %v514
      %v521 = vadd.f32 %v485, %v514
      %v522 = vadd.f32 %v486, %v514
      %v523 = vadd.f32 %v487, %v514
      %v524 = vadd.f32 %v488, %v514
      %v525 = vadd.f32 %v489, %v514
      %v526 = vadd.f32 %v490, %v514
      %v527 = vadd.f32 %v491, %v514
      %v528 = vadd.f32 %v492, %v514
      %v529 = vadd.f32 %v493, %v514
      %v530 = vadd.f32 %v494, %v514
      %v531 = vadd.f32 %v495, %v514
      %v532 = vadd.f32 %v496, %v514
      %v533 = vadd.f32 %v497, %v514
      %v534 = vadd.f32 %v498, %v514
      %v535 = vadd.f32 %v499, %v514
      %v536 = vadd.f32 %v500, %v514
      %v537 = vadd.f32 %v501, %v514
      %v538 = vadd.f32 %v502, %v514
      %v539 = vadd.f32 %v503, %v514
      %v540 = vadd.f32 %v504, %v514
      %v541 = vadd.f32 %v505, %v514
      %v542 = vadd.f32 %v506, %v514
      %v543 = vadd.f32 %v507, %v514
      %v544 = vadd.f32 %v508, %v514
      %v545 = vadd.f32 %v509, %v514
      %v546 = vadd.f32 %v510, %v514
      %v547 = vadd.f32 %v511, %v514
      %v548 = vmax.f32 %v516, 0.0
      %v549 = vmax.f32 %v517, 0.0
      %v550 = vmax.f32 %v518, 0.0
      %v551 = vmax.f32 %v519, 0.0
      %v552 = vmax.f32 %v520, 0.0
      %v553 = vmax.f32 %v521, 0.0
      %v554 = vmax.f32 %v522, 0.0
      %v555 = vmax.f32 %v523, 0.0
      %v556 = vmax.f32 %v524, 0.0
      %v557 = vmax.f32 %v525, 0.0
      %v558 = vmax.f32 %v526, 0.0
      %v559 = vmax.f32 %v527, 0.0
      %v560 = vmax.f32 %v528, 0.0
      %v561 = vmax.f32 %v529, 0.0
      %v562 = vmax.f32 %v530, 0.0
      %v563 = vmax.f32 %v531, 0.0
      %v564 = vmax.f32 %v532, 0.0
      %v565 = vmax.f32 %v533, 0.0
      %v566 = vmax.f32 %v534, 0.0
      %v567 = vmax.f32 %v535, 0.0
      %v568 = vmax.f32 %v536, 0.0
      %v569 = vmax.f32 %v537, 0.0
      %v570 = vmax.f32 %v538, 0.0
      %v571 = vmax.f32 %v539, 0.0
      %v572 = vmax.f32 %v540, 0.0
      %v573 = vmax.f32 %v541, 0.0
      %v574 = vmax.f32 %v542, 0.0
      %v575 = vmax.f32 %v543, 0.0
      %v576 = vmax.f32 %v544, 0.0
      %v577 = vmax.f32 %v545, 0.0
      %v578 = vmax.f32 %v546, 0.0
      %v579 = vmax.f32 %v547, 0.0
      %vm580 = vcmask 64512
      %581 = vst.msk [vmem:[%s199] sm:$0xff] %vm580, %v548
      %582 = vst.msk [vmem:[%s199 + $0x8] sm:$0xff] %vm580, %v549
      %583 = vst.msk [vmem:[%s199 + $0x10] sm:$0xff] %vm580, %v550
      %584 = vst.msk [vmem:[%s199 + $0x18] sm:$0xff] %vm580, %v551
      %585 = vst.msk [vmem:[%s199 + $0x20] sm:$0xff] %vm580, %v552
      %586 = vst.msk [vmem:[%s199 + $0x28] sm:$0xff] %vm580, %v553
      %587 = vst.msk [vmem:[%s199 + $0x30] sm:$0xff] %vm580, %v554
      %588 = vst.msk [vmem:[%s199 + $0x38] sm:$0xff] %vm580, %v555
      %589 = vst.msk [vmem:[%s199 + $0x40] sm:$0xff] %vm580, %v556
      %590 = vst.msk [vmem:[%s199 + $0x48] sm:$0xff] %vm580, %v557
      %591 = vst.msk [vmem:[%s199 + $0x50] sm:$0xff] %vm580, %v558
      %592 = vst.msk [vmem:[%s199 + $0x58] sm:$0xff] %vm580, %v559
      %593 = vst.msk [vmem:[%s199 + $0x60] sm:$0xff] %vm580, %v560
      %594 = vst.msk [vmem:[%s199 + $0x68] sm:$0xff] %vm580, %v561
      %595 = vst.msk [vmem:[%s199 + $0x70] sm:$0xff] %vm580, %v562
      %596 = vst.msk [vmem:[%s199 + $0x78] sm:$0xff] %vm580, %v563
      %597 = vst.msk [vmem:[%s199 + $0x80] sm:$0xff] %vm580, %v564
      %598 = vst.msk [vmem:[%s199 + $0x88] sm:$0xff] %vm580, %v565
      %599 = vst.msk [vmem:[%s199 + $0x90] sm:$0xff] %vm580, %v566
      %600 = vst.msk [vmem:[%s199 + $0x98] sm:$0xff] %vm580, %v567
      %601 = vst.msk [vmem:[%s199 + $0xa0] sm:$0xff] %vm580, %v568
      %602 = vst.msk [vmem:[%s199 + $0xa8] sm:$0xff] %vm580, %v569
      %603 = vst.msk [vmem:[%s199 + $0xb0] sm:$0xff] %vm580, %v570
      %604 = vst.msk [vmem:[%s199 + $0xb8] sm:$0xff] %vm580, %v571
      %605 = vst.msk [vmem:[%s199 + $0xc0] sm:$0xff] %vm580, %v572
      %606 = vst.msk [vmem:[%s199 + $0xc8] sm:$0xff] %vm580, %v573
      %607 = vst.msk [vmem:[%s199 + $0xd0] sm:$0xff] %vm580, %v574
      %608 = vst.msk [vmem:[%s199 + $0xd8] sm:$0xff] %vm580, %v575
      %609 = vst.msk [vmem:[%s199 + $0xe0] sm:$0xff] %vm580, %v576
      %610 = vst.msk [vmem:[%s199 + $0xe8] sm:$0xff] %vm580, %v577
      %611 = vst.msk [vmem:[%s199 + $0xf0] sm:$0xff] %vm580, %v578
      %612 = vst.msk [vmem:[%s199 + $0xf8] sm:$0xff] %vm580, %v579
      %s613 = smul.u32 32, %s15
      %p614 = scmp.lt.s32.totalorder %s613, 63
      %s615 = scalar_select %p614, %s613, 63
      %s616 = smul.addr %s615, 8
      %s617 = scalar_lea.vmem %s4, %s616
      // Predicated region
      $region37: #{resnet_block_forward.14} parent=35 // pred_check
        %p618 = pneg %p122
      $region38: #{resnet_block_forward.14} parent=35 // pred_check_branch
        %620 = sbr.rel (%p618) target = $region40
      $region39: #{resnet_block_forward.14} parent=35 // pred_region
        %s621 = smul.u32 32, %s15
      $region40: #{resnet_block_forward.14} parent=35 // pred_fallthru
        _
    $region36: #{resnet_block_forward.14} parent=5 // pred_fallthru
      _
    %p622 = scmp.le.s32.totalorder 2, %s10
    // Predicated region
    $region41: #{resnet_block_forward.14} parent=5 // pred_check
      %p623 = pneg %p622
    $region42: #{resnet_block_forward.14} parent=5 // pred_check_branch
      %625 = sbr.rel (%p623) target = $region44
    $region43: #{resnet_block_forward.14} parent=5 // pred_region
      %s626 = ssub.s32 %s10, 2
      // Predicated region
      $region45: #{resnet_block_forward.14} parent=43 // pred_check
        %p627 = pneg %p128
      $region46: #{resnet_block_forward.14} parent=43 // pred_check_branch
        %629 = sbr.rel (%p627) target = $region48
      $region47: #{resnet_block_forward.14} parent=43 // pred_region
        %s630 = smul.u32 32, %s16
        %p631 = scmp.lt.s32.totalorder %s630, 63
        %s632 = scalar_select %p631, %s630, 63
        %s633 = smul.addr %s632, 8
        %s634 = scalar_lea.vmem %s4, %s633
      $region48: #{resnet_block_forward.14} parent=43 // pred_fallthru
        _
    $region44: #{resnet_block_forward.14} parent=5 // pred_fallthru
      _
  $region6: #{resnet_block_forward.14} parent=0 // loop_footer
    %s14 = sadd.s32 1, %s10
  $region7: #{resnet_block_forward.14} parent=0 // loop_footer_branch
    %9 = sbr.rel target = $region3
  $region8: #{resnet_block_forward.14} parent=0 // loop_exit
    _

// kernel: resnet_block_forward.23
$region0: #{resnet_block_forward.23}
  #allocation0 [shape = 'u32[]', space=smem, size = 0x4, offset = 0x4, fixed_abs, tag = 'smem constant byte address 0x4 - core index']
  #allocation1 [shape = 'u32[72,128]{1,0:T(1,128)}', space=vmem, size = 0x9000, scoped, tag = 'internal scratch']
  %s0 = inlined_call_operand.vmem [shape: f32[2,16,16,8], index: 0, kind: input, shape index: {}]
  %s1 = inlined_call_operand.vmem [shape: f32[2,16,16,8], index: 1, kind: input, shape index: {}]
  %s2 = inlined_call_operand.vmem [shape: f32[2,1,8], index: 2, kind: output, shape index: {}]
  %s3 = sld [smem:[#allocation0]]
  $region49: #{resnet_block_forward.23} parent=0
    _
  %s5 = ssub.s32 1, %s3
  %s6 = scalar_select 0, %s5, %s3
  loop: start=0, step=1, limit=6
  $region2: #{resnet_block_forward.23} parent=0 // loop_pre_header
    _
  $region3: #{resnet_block_forward.23} parent=0 // loop_header
    %s8 = sphi 0, %s12
    %p9 = scmp.ge.s32.totalorder %s8, 6
    %s15 = sphi 0, %s27
    %s16 = sphi 0, %s23
    %s17 = sphi 0, %s15
    %s18 = sphi 0, %s16
    %s19 = sphi 0, %s17
    %s20 = sphi 0, %s18
    %s32 = sphi 0, %s34
    %s35 = sphi 0, %s32
    %s36 = sphi 0, %s35
    %s52 = sphi 0, %s36
    %s60 = sphi 0, %s62
    %s63 = sphi 0, %s60
    %s64 = sphi 0, %s63
    %s80 = sphi 0, %s64
    %s86 = sphi 0, %s88
    %s89 = sphi 0, %s86
    %s90 = sphi 0, %s89
    %s106 = sphi 0, %s90
  $region4: #{resnet_block_forward.23} parent=0 // loop_header_branch
    %11 = sbr.rel (%p9) target = $region8
  $region5: #{resnet_block_forward.23} parent=0 // loop_body
    %s13 = ssub.s32 %s8, 1
    %s14 = ssub.s32 %s8, 2
    %s21 = sadd.s32 1, %s16
    %p22 = scmp.ge.s32.totalorder %s21, 2
    %s23 = scalar_select %p22, 0, %s21
    %s24 = sadd.s32 1, %s15
    %s25 = scalar_select %p22, %s24, %s15
    %p26 = scmp.ge.s32.totalorder %s25, 2
    %s27 = scalar_select %p26, 0, %s25
    %s28 = ssub.s32 %s15, %s27
    %s29 = ssub.s32 %s16, %s23
    %s30 = sor.u32 %s28, %s29
    %p31 = scmp.eq.s32.totalorder %s30, 0
    %s33 = sadd.s32 %s32, 1
    %s34 = scalar_select %p31, %s32, %s33
    %p37 = pneg %p31
    %p38 = scmp.eq.s32.totalorder %s8, 3
    %p39 = por %p37, %p38
    %p40 = scmp.ne.s32.totalorder %s32, %s35
    %p41 = scmp.eq.s32.totalorder %s8, 0
    %p42 = por %p40, %p41
    %p43 = scmp.ne.s32.totalorder %s32, %s35
    %p44 = scmp.eq.s32.totalorder %s13, 3
    %p45 = por %p43, %p44
    %p46 = scmp.ne.s32.totalorder %s35, %s36
    %p47 = scmp.eq.s32.totalorder %s13, 0
    %p48 = por %p46, %p47
    %p49 = scmp.ne.s32.totalorder %s35, %s36
    %p50 = scmp.eq.s32.totalorder %s14, 3
    %p51 = por %p49, %p50
    %p53 = scmp.ne.s32.totalorder %s36, %s52
    %p54 = scmp.eq.s32.totalorder %s14, 0
    %p55 = por %p53, %p54
    %s56 = ssub.s32 %s15, %s27
    %s57 = ssub.s32 %s16, %s23
    %s58 = sor.u32 %s56, %s57
    %p59 = scmp.eq.s32.totalorder %s58, 0
    %s61 = sadd.s32 %s60, 1
    %s62 = scalar_select %p59, %s60, %s61
    %p65 = pneg %p59
    %p66 = scmp.eq.s32.totalorder %s8, 3
    %p67 = por %p65, %p66
    %p68 = scmp.ne.s32.totalorder %s60, %s63
    %p69 = scmp.eq.s32.totalorder %s8, 0
    %p70 = por %p68, %p69
    %p71 = scmp.ne.s32.totalorder %s60, %s63
    %p72 = scmp.eq.s32.totalorder %s13, 3
    %p73 = por %p71, %p72
    %p74 = scmp.ne.s32.totalorder %s63, %s64
    %p75 = scmp.eq.s32.totalorder %s13, 0
    %p76 = por %p74, %p75
    %p77 = scmp.ne.s32.totalorder %s63, %s64
    %p78 = scmp.eq.s32.totalorder %s14, 3
    %p79 = por %p77, %p78
    %p81 = scmp.ne.s32.totalorder %s64, %s80
    %p82 = scmp.eq.s32.totalorder %s14, 0
    %p83 = por %p81, %p82
    %s84 = ssub.s32 %s15, %s27
    %p85 = scmp.eq.s32.totalorder %s84, 0
    %s87 = sadd.s32 %s86, 1
    %s88 = scalar_select %p85, %s86, %s87
    %p91 = pneg %p85
    %p92 = scmp.eq.s32.totalorder %s8, 3
    %p93 = por %p91, %p92
    %p94 = scmp.ne.s32.totalorder %s86, %s89
    %p95 = scmp.eq.s32.totalorder %s8, 0
    %p96 = por %p94, %p95
    %p97 = scmp.ne.s32.totalorder %s86, %s89
    %p98 = scmp.eq.s32.totalorder %s13, 3
    %p99 = por %p97, %p98
    %p100 = scmp.ne.s32.totalorder %s89, %s90
    %p101 = scmp.eq.s32.totalorder %s13, 0
    %p102 = por %p100, %p101
    %p103 = scmp.ne.s32.totalorder %s89, %s90
    %p104 = scmp.eq.s32.totalorder %s14, 3
    %p105 = por %p103, %p104
    %p107 = scmp.ne.s32.totalorder %s90, %s106
    %p108 = scmp.eq.s32.totalorder %s14, 0
    %p109 = por %p107, %p108
    %p110 = scmp.le.s32.totalorder 1, %s8
    %p111 = scmp.lt.s32.totalorder %s8, 5
    %p112 = pnand %p110, %p111
    %p113 = pneg %p112
    // Predicated region
    $region9: #{resnet_block_forward.23} parent=5 // pred_check
      _
    $region10: #{resnet_block_forward.23} parent=5 // pred_check_branch
      %115 = sbr.rel (%p112) target = $region12
    $region11: #{resnet_block_forward.23} parent=5 // pred_region
      %s116 = ssub.s32 %s8, 1
    $region12: #{resnet_block_forward.23} parent=5 // pred_fallthru
      _
    %p117 = scmp.lt.s32.totalorder %s8, 4
    // Predicated region
    $region13: #{resnet_block_forward.23} parent=5 // pred_check
      %p118 = pneg %p117
    $region14: #{resnet_block_forward.23} parent=5 // pred_check_branch
      %120 = sbr.rel (%p118) target = $region16
    $region15: #{resnet_block_forward.23} parent=5 // pred_region
      // Predicated region
      $region17: #{resnet_block_forward.23} parent=15 // pred_check
        %p121 = pneg %p42
      $region18: #{resnet_block_forward.23} parent=15 // pred_check_branch
        %123 = sbr.rel (%p121) target = $region20
      $region19: #{resnet_block_forward.23} parent=15 // pred_region
        %s124 = smul.u32 8, %s16
        %p125 = scmp.lt.s32.totalorder %s15, 1
        %s126 = scalar_select %p125, %s15, 1
        %p127 = scmp.lt.s32.totalorder %s124, 15
        %s128 = scalar_select %p127, %s124, 15
        %s129 = smul.addr %s128, 2
        %s130 = smul.addr %s126, 32
        %s131 = sadd.s32 %s129, %s130
        %s132 = smul.addr %s131, 8
        %s133 = scalar_lea.vmem %s0, %s132
        %s134 = smul.u32 8, %s16
      $region20: #{resnet_block_forward.23} parent=15 // pred_fallthru
        _
      // Predicated region
      $region21: #{resnet_block_forward.23} parent=15 // pred_check
        %p135 = pneg %p70
      $region22: #{resnet_block_forward.23} parent=15 // pred_check_branch
        %137 = sbr.rel (%p135) target = $region24
      $region23: #{resnet_block_forward.23} parent=15 // pred_region
        %s138 = smul.u32 8, %s16
        %p139 = scmp.lt.s32.totalorder %s15, 1
        %s140 = scalar_select %p139, %s15, 1
        %p141 = scmp.lt.s32.totalorder %s138, 15
        %s142 = scalar_select %p141, %s138, 15
        %s143 = smul.addr %s142, 2
        %s144 = smul.addr %s140, 32
        %s145 = sadd.s32 %s143, %s144
        %s146 = smul.addr %s145, 8
        %s147 = scalar_lea.vmem %s1, %s146
        %s148 = smul.u32 8, %s16
      $region24: #{resnet_block_forward.23} parent=15 // pred_fallthru
        _
    $region16: #{resnet_block_forward.23} parent=5 // pred_fallthru
      _
    %p149 = scmp.le.s32.totalorder 1, %s8
    %p150 = scmp.lt.s32.totalorder %s8, 5
    %p151 = pnand %p149, %p150
    %p152 = pneg %p151
    // Predicated region
    $region25: #{resnet_block_forward.23} parent=5 // pred_check
      _
    $region26: #{resnet_block_forward.23} parent=5 // pred_check_branch
      %154 = sbr.rel (%p151) target = $region28
    $region27: #{resnet_block_forward.23} parent=5 // pred_region
      %s155 = ssub.s32 %s8, 1
      %s156 = smul.u32 8, %s18
      %p157 = scmp.lt.s32.totalorder %s17, 1
      %s158 = scalar_select %p157, %s17, 1
      %p159 = scmp.lt.s32.totalorder %s156, 15
      %s160 = scalar_select %p159, %s156, 15
      %s161 = smul.addr %s160, 2
      %s162 = smul.addr %s158, 32
      %s163 = sadd.s32 %s161, %s162
      %s164 = smul.addr %s163, 8
      %s165 = scalar_lea.vmem %s0, %s164
      %p166 = pneg %p48
      %p167 = pneg %p45
      %s168 = smul.u32 8, %s18
      %p169 = scmp.lt.s32.totalorder %s17, 1
      %s170 = scalar_select %p169, %s17, 1
      %p171 = scmp.lt.s32.totalorder %s168, 15
      %s172 = scalar_select %p171, %s168, 15
      %s173 = smul.addr %s172, 2
      %s174 = smul.addr %s170, 32
      %s175 = sadd.s32 %s173, %s174
      %s176 = smul.addr %s175, 8
      %s177 = scalar_lea.vmem %s1, %s176
      %p178 = pneg %p76
      %p179 = pneg %p73
      %p180 = pneg %p102
      %p181 = pneg %p99
      %p182 = scmp.lt.s32.totalorder %s17, 1
      %s183 = scalar_select %p182, %s17, 1
      %s184 = scalar_lea.vmem %s2, %s183
      %s185 = smul.u32 8, %s18
      %p186 = scmp.lt.s32.totalorder %s17, 1
      %s187 = scalar_select %p186, %s17, 1
      %p188 = scmp.lt.s32.totalorder %s185, 15
      %s189 = scalar_select %p188, %s185, 15
      %s190 = smul.addr %s189, 2
      %s191 = smul.addr %s187, 32
      %s192 = sadd.s32 %s190, %s191
      %s193 = smul.addr %s192, 8
      %s194 = scalar_lea.vmem %s0, %s193
      %s195 = smul.u32 8, %s18
      %s196 = smul.u32 8, %s18
      %p197 = scmp.lt.s32.totalorder %s17, 1
      %s198 = scalar_select %p197, %s17, 1
      %p199 = scmp.lt.s32.totalorder %s196, 15
      %s200 = scalar_select %p199, %s196, 15
      %s201 = smul.addr %s200, 2
      %s202 = smul.addr %s198, 32
      %s203 = sadd.s32 %s201, %s202
      %s204 = smul.addr %s203, 8
      %s205 = scalar_lea.vmem %s1, %s204
      %s206 = smul.u32 8, %s18
      %p207 = scmp.lt.s32.totalorder %s17, 1
      %s208 = scalar_select %p207, %s17, 1
      %s209 = scalar_lea.vmem %s2, %s208
      %p210 = scmp.eq.s32.totalorder %s18, 0
      // Predicated region
      $region29: #{resnet_block_forward.23} parent=27 // pred_check
        %p211 = pneg %p210
      $region30: #{resnet_block_forward.23} parent=27 // pred_check_branch
        %213 = sbr.rel (%p211) target = $region32
      $region31: #{resnet_block_forward.23} parent=27 // pred_region
        %vm214 = vcmask 57344
        %215 = vst.msk [vmem:[%s209] sm:$0x1] %vm214, 0.0
      $region32: #{resnet_block_forward.23} parent=27 // pred_fallthru
        _
      %v216 = vld [vmem:[%s194] sm:$0xff]
      %v217 = vld [vmem:[%s194 + $0x8] sm:$0xff]
      %v218 = vld [vmem:[%s194 + $0x10] sm:$0xff]
      %v219 = vld [vmem:[%s194 + $0x18] sm:$0xff]
      %v220 = vld [vmem:[%s194 + $0x20] sm:$0xff]
      %v221 = vld [vmem:[%s194 + $0x28] sm:$0xff]
      %v222 = vld [vmem:[%s194 + $0x30] sm:$0xff]
      %v223 = vld [vmem:[%s194 + $0x38] sm:$0xff]
      %v224 = vld [vmem:[%s194 + $0x40] sm:$0xff]
      %v225 = vld [vmem:[%s194 + $0x48] sm:$0xff]
      %v226 = vld [vmem:[%s194 + $0x50] sm:$0xff]
      %v227 = vld [vmem:[%s194 + $0x58] sm:$0xff]
      %v228 = vld [vmem:[%s194 + $0x60] sm:$0xff]
      %v229 = vld [vmem:[%s194 + $0x68] sm:$0xff]
      %v230 = vld [vmem:[%s194 + $0x70] sm:$0xff]
      %v231 = vld [vmem:[%s194 + $0x78] sm:$0xff]
      %v232 = vld [vmem:[%s205] sm:$0xff]
      %v233 = vld [vmem:[%s205 + $0x8] sm:$0xff]
      %v234 = vld [vmem:[%s205 + $0x10] sm:$0xff]
      %v235 = vld [vmem:[%s205 + $0x18] sm:$0xff]
      %v236 = vld [vmem:[%s205 + $0x20] sm:$0xff]
      %v237 = vld [vmem:[%s205 + $0x28] sm:$0xff]
      %v238 = vld [vmem:[%s205 + $0x30] sm:$0xff]
      %v239 = vld [vmem:[%s205 + $0x38] sm:$0xff]
      %v240 = vld [vmem:[%s205 + $0x40] sm:$0xff]
      %v241 = vld [vmem:[%s205 + $0x48] sm:$0xff]
      %v242 = vld [vmem:[%s205 + $0x50] sm:$0xff]
      %v243 = vld [vmem:[%s205 + $0x58] sm:$0xff]
      %v244 = vld [vmem:[%s205 + $0x60] sm:$0xff]
      %v245 = vld [vmem:[%s205 + $0x68] sm:$0xff]
      %v246 = vld [vmem:[%s205 + $0x70] sm:$0xff]
      %v247 = vld [vmem:[%s205 + $0x78] sm:$0xff]
      %v248 = vadd.f32 %v216, %v232
      %v249 = vadd.f32 %v217, %v233
      %v250 = vadd.f32 %v218, %v234
      %v251 = vadd.f32 %v219, %v235
      %v252 = vadd.f32 %v220, %v236
      %v253 = vadd.f32 %v221, %v237
      %v254 = vadd.f32 %v222, %v238
      %v255 = vadd.f32 %v223, %v239
      %v256 = vadd.f32 %v224, %v240
      %v257 = vadd.f32 %v225, %v241
      %v258 = vadd.f32 %v226, %v242
      %v259 = vadd.f32 %v227, %v243
      %v260 = vadd.f32 %v228, %v244
      %v261 = vadd.f32 %v229, %v245
      %v262 = vadd.f32 %v230, %v246
      %v263 = vadd.f32 %v231, %v247
      %v264 = vld [vmem:[%s209] sm:$0x1]
      %vm265 = vcmask 64512
      %v266 = vsel %vm265, %v248, 0.0
      %v267 = vsel %vm265, %v249, 0.0
      %v268 = vadd.f32 %v266, %v267
      %v269 = vsel %vm265, %v250, 0.0
      %v270 = vadd.f32 %v268, %v269
      %v271 = vsel %vm265, %v251, 0.0
      %v272 = vadd.f32 %v270, %v271
      %v273 = vsel %vm265, %v252, 0.0
      %v274 = vadd.f32 %v272, %v273
      %v275 = vsel %vm265, %v253, 0.0
      %v276 = vadd.f32 %v274, %v275
      %v277 = vsel %vm265, %v254, 0.0
      %v278 = vadd.f32 %v276, %v277
      %v279 = vsel %vm265, %v255, 0.0
      %v280 = vadd.f32 %v278, %v279
      %v281 = vsel %vm265, %v256, 0.0
      %v282 = vadd.f32 %v280, %v281
      %v283 = vsel %vm265, %v257, 0.0
      %v284 = vadd.f32 %v282, %v283
      %v285 = vsel %vm265, %v258, 0.0
      %v286 = vadd.f32 %v284, %v285
      %v287 = vsel %vm265, %v259, 0.0
      %v288 = vadd.f32 %v286, %v287
      %v289 = vsel %vm265, %v260, 0.0
      %v290 = vadd.f32 %v288, %v289
      %v291 = vsel %vm265, %v261, 0.0
      %v292 = vadd.f32 %v290, %v291
      %v293 = vsel %vm265, %v262, 0.0
      %v294 = vadd.f32 %v292, %v293
      %v295 = vsel %vm265, %v263, 0.0
      %v296 = vadd.f32 %v294, %v295
      %v297 = vrot.slane %v296, 4
      %v298 = vadd.f32 %v296, %v297
      %v299 = vrot.slane %v298, 2
      %v300 = vadd.f32 %v298, %v299
      %v301 = vrot.slane %v300, 1
      %v302 = vadd.f32 %v300, %v301
      %v303 = vadd.f32 %v264, %v302
      %vm304 = vcmask 57344
      %305 = vst.msk [vmem:[%s209] sm:$0x1] %vm304, %v303
      %p306 = scmp.eq.s32.totalorder %s18, 1
      // Predicated region
      $region33: #{resnet_block_forward.23} parent=27 // pred_check
        %p307 = pneg %p306
      $region34: #{resnet_block_forward.23} parent=27 // pred_check_branch
        %309 = sbr.rel (%p307) target = $region36
      $region35: #{resnet_block_forward.23} parent=27 // pred_region
        %v310 = vld [vmem:[%s209] sm:$0x1]
        %v311 = vmul.f32 %v310, 0.00390625
        %312 = vst.msk [vmem:[%s209] sm:$0x1] %vm304, %v311
      $region36: #{resnet_block_forward.23} parent=27 // pred_fallthru
        _
      %p313 = scmp.lt.s32.totalorder %s17, 1
      %s314 = scalar_select %p313, %s17, 1
      %s315 = scalar_lea.vmem %s2, %s314
      // Predicated region
      $region37: #{resnet_block_forward.23} parent=27 // pred_check
        %p316 = pneg %p99
      $region38: #{resnet_block_forward.23} parent=27 // pred_check_branch
        %318 = sbr.rel (%p316) target = $region40
      $region39: #{resnet_block_forward.23} parent=27 // pred_region
        _
      $region40: #{resnet_block_forward.23} parent=27 // pred_fallthru
        _
    $region28: #{resnet_block_forward.23} parent=5 // pred_fallthru
      _
    %p319 = scmp.le.s32.totalorder 2, %s8
    // Predicated region
    $region41: #{resnet_block_forward.23} parent=5 // pred_check
      %p320 = pneg %p319
    $region42: #{resnet_block_forward.23} parent=5 // pred_check_branch
      %322 = sbr.rel (%p320) target = $region44
    $region43: #{resnet_block_forward.23} parent=5 // pred_region
      %s323 = ssub.s32 %s8, 2
      // Predicated region
      $region45: #{resnet_block_forward.23} parent=43 // pred_check
        %p324 = pneg %p105
      $region46: #{resnet_block_forward.23} parent=43 // pred_check_branch
        %326 = sbr.rel (%p324) target = $region48
      $region47: #{resnet_block_forward.23} parent=43 // pred_region
        %p327 = scmp.lt.s32.totalorder %s19, 1
        %s328 = scalar_select %p327, %s19, 1
        %s329 = scalar_lea.vmem %s2, %s328
      $region48: #{resnet_block_forward.23} parent=43 // pred_fallthru
        _
    $region44: #{resnet_block_forward.23} parent=5 // pred_fallthru
      _
  $region6: #{resnet_block_forward.23} parent=0 // loop_footer
    %s12 = sadd.s32 1, %s8
  $region7: #{resnet_block_forward.23} parent=0 // loop_footer_branch
    %7 = sbr.rel target = $region3
  $region8: #{resnet_block_forward.23} parent=0 // loop_exit
    _

// kernel: resnet_block_forward.15
$region0: #{resnet_block_forward.15}
  #allocation0 [shape = 'u32[]', space=smem, size = 0x4, offset = 0x4, fixed_abs, tag = 'smem constant byte address 0x4 - core index']
  #allocation1 [shape = 'u32[72,128]{1,0:T(1,128)}', space=vmem, size = 0x9000, scoped, tag = 'internal scratch']
  %s0 = inlined_call_operand.vmem [shape: bf16[512,72], index: 0, kind: input, shape index: {}]
  %s1 = inlined_call_operand.vmem [shape: bf16[72,8], index: 1, kind: input, shape index: {}]
  %s2 = inlined_call_operand.vmem [shape: f32[1,8], index: 2, kind: input, shape index: {}]
  %s3 = inlined_call_operand.vmem [shape: f32[1,8], index: 3, kind: input, shape index: {}]
  %s4 = inlined_call_operand.vmem [shape: f32[512,8], index: 4, kind: output, shape index: {}]
  %s5 = sld [smem:[#allocation0]]
  $region49: #{resnet_block_forward.15} parent=0
    _
  %s7 = ssub.s32 1, %s5
  %s8 = scalar_select 0, %s7, %s5
  loop: start=0, step=1, limit=4
  $region2: #{resnet_block_forward.15} parent=0 // loop_pre_header
    _
  $region3: #{resnet_block_forward.15} parent=0 // loop_header
    %s10 = sphi 0, %s14
    %p11 = scmp.ge.s32.totalorder %s10, 4
    %s20 = sphi 0, %s22
    %s23 = sphi 0, %s20
    %s24 = sphi 0, %s23
    %s40 = sphi 0, %s24
    %s44 = sphi 0, %s44
    %s46 = sphi 0, %s44
    %s47 = sphi 0, %s46
    %s61 = sphi 0, %s47
    %s65 = sphi 0, %s65
    %s67 = sphi 0, %s65
    %s68 = sphi 0, %s67
    %s82 = sphi 0, %s68
    %s86 = sphi 0, %s86
    %s88 = sphi 0, %s86
    %s89 = sphi 0, %s88
    %s103 = sphi 0, %s89
    %s109 = sphi 0, %s111
    %s112 = sphi 0, %s109
    %s113 = sphi 0, %s112
    %s129 = sphi 0, %s113
  $region4: #{resnet_block_forward.15} parent=0 // loop_header_branch
    %13 = sbr.rel (%p11) target = $region8
  $region5: #{resnet_block_forward.15} parent=0 // loop_body
    %s15 = ssub.s32 %s10, 1
    %s16 = ssub.s32 %s10, 2
    %s17 = sadd.s32 %s10, 1
    %s18 = ssub.s32 %s10, %s17
    %p19 = scmp.eq.s32.totalorder %s18, 0
    %s21 = sadd.s32 %s20, 1
    %s22 = scalar_select %p19, %s20, %s21
    %p25 = pneg %p19
    %p26 = scmp.eq.s32.totalorder %s10, 1
    %p27 = por %p25, %p26
    %p28 = scmp.ne.s32.totalorder %s20, %s23
    %p29 = scmp.eq.s32.totalorder %s10, 0
    %p30 = por %p28, %p29
    %p31 = scmp.ne.s32.totalorder %s20, %s23
    %p32 = scmp.eq.s32.totalorder %s15, 1
    %p33 = por %p31, %p32
    %p34 = scmp.ne.s32.totalorder %s23, %s24
    %p35 = scmp.eq.s32.totalorder %s15, 0
    %p36 = por %p34, %p35
    %p37 = scmp.ne.s32.totalorder %s23, %s24
    %p38 = scmp.eq.s32.totalorder %s16, 1
    %p39 = por %p37, %p38
    %p41 = scmp.ne.s32.totalorder %s24, %s40
    %p42 = scmp.eq.s32.totalorder %s16, 0
    %p43 = por %p41, %p42
    %s45 = sadd.s32 %s44, 1
    %p48 = scmp.eq.s32.totalorder %s10, 1
    %p49 = scmp.ne.s32.totalorder %s44, %s46
    %p50 = scmp.eq.s32.totalorder %s10, 0
    %p51 = por %p49, %p50
    %p52 = scmp.ne.s32.totalorder %s44, %s46
    %p53 = scmp.eq.s32.totalorder %s15, 1
    %p54 = por %p52, %p53
    %p55 = scmp.ne.s32.totalorder %s46, %s47
    %p56 = scmp.eq.s32.totalorder %s15, 0
    %p57 = por %p55, %p56
    %p58 = scmp.ne.s32.totalorder %s46, %s47
    %p59 = scmp.eq.s32.totalorder %s16, 1
    %p60 = por %p58, %p59
    %p62 = scmp.ne.s32.totalorder %s47, %s61
    %p63 = scmp.eq.s32.totalorder %s16, 0
    %p64 = por %p62, %p63
    %s66 = sadd.s32 %s65, 1
    %p69 = scmp.eq.s32.totalorder %s10, 1
    %p70 = scmp.ne.s32.totalorder %s65, %s67
    %p71 = scmp.eq.s32.totalorder %s10, 0
    %p72 = por %p70, %p71
    %p73 = scmp.ne.s32.totalorder %s65, %s67
    %p74 = scmp.eq.s32.totalorder %s15, 1
    %p75 = por %p73, %p74
    %p76 = scmp.ne.s32.totalorder %s67, %s68
    %p77 = scmp.eq.s32.totalorder %s15, 0
    %p78 = por %p76, %p77
    %p79 = scmp.ne.s32.totalorder %s67, %s68
    %p80 = scmp.eq.s32.totalorder %s16, 1
    %p81 = por %p79, %p80
    %p83 = scmp.ne.s32.totalorder %s68, %s82
    %p84 = scmp.eq.s32.totalorder %s16, 0
    %p85 = por %p83, %p84
    %s87 = sadd.s32 %s86, 1
    %p90 = scmp.eq.s32.totalorder %s10, 1
    %p91 = scmp.ne.s32.totalorder %s86, %s88
    %p92 = scmp.eq.s32.totalorder %s10, 0
    %p93 = por %p91, %p92
    %p94 = scmp.ne.s32.totalorder %s86, %s88
    %p95 = scmp.eq.s32.totalorder %s15, 1
    %p96 = por %p94, %p95
    %p97 = scmp.ne.s32.totalorder %s88, %s89
    %p98 = scmp.eq.s32.totalorder %s15, 0
    %p99 = por %p97, %p98
    %p100 = scmp.ne.s32.totalorder %s88, %s89
    %p101 = scmp.eq.s32.totalorder %s16, 1
    %p102 = por %p100, %p101
    %p104 = scmp.ne.s32.totalorder %s89, %s103
    %p105 = scmp.eq.s32.totalorder %s16, 0
    %p106 = por %p104, %p105
    %s107 = ssub.s32 %s10, %s17
    %p108 = scmp.eq.s32.totalorder %s107, 0
    %s110 = sadd.s32 %s109, 1
    %s111 = scalar_select %p108, %s109, %s110
    %p114 = pneg %p108
    %p115 = scmp.eq.s32.totalorder %s10, 1
    %p116 = por %p114, %p115
    %p117 = scmp.ne.s32.totalorder %s109, %s112
    %p118 = scmp.eq.s32.totalorder %s10, 0
    %p119 = por %p117, %p118
    %p120 = scmp.ne.s32.totalorder %s109, %s112
    %p121 = scmp.eq.s32.totalorder %s15, 1
    %p122 = por %p120, %p121
    %p123 = scmp.ne.s32.totalorder %s112, %s113
    %p124 = scmp.eq.s32.totalorder %s15, 0
    %p125 = por %p123, %p124
    %p126 = scmp.ne.s32.totalorder %s112, %s113
    %p127 = scmp.eq.s32.totalorder %s16, 1
    %p128 = por %p126, %p127
    %p130 = scmp.ne.s32.totalorder %s113, %s129
    %p131 = scmp.eq.s32.totalorder %s16, 0
    %p132 = por %p130, %p131
    %p133 = scmp.le.s32.totalorder 1, %s10
    %p134 = scmp.lt.s32.totalorder %s10, 3
    %p135 = pnand %p133, %p134
    %p136 = pneg %p135
    // Predicated region
    $region9: #{resnet_block_forward.15} parent=5 // pred_check
      _
    $region10: #{resnet_block_forward.15} parent=5 // pred_check_branch
      %138 = sbr.rel (%p135) target = $region12
    $region11: #{resnet_block_forward.15} parent=5 // pred_region
      %s139 = ssub.s32 %s10, 1
      // Predicated region
      $region13: #{resnet_block_forward.15} parent=11 // pred_check
        %p140 = pneg %p57
      $region14: #{resnet_block_forward.15} parent=11 // pred_check_branch
        %142 = sbr.rel (%p140) target = $region16
      $region15: #{resnet_block_forward.15} parent=11 // pred_region
        _
      $region16: #{resnet_block_forward.15} parent=11 // pred_fallthru
        _
      // Predicated region
      $region17: #{resnet_block_forward.15} parent=11 // pred_check
        %p143 = pneg %p78
      $region18: #{resnet_block_forward.15} parent=11 // pred_check_branch
        %145 = sbr.rel (%p143) target = $region20
      $region19: #{resnet_block_forward.15} parent=11 // pred_region
        _
      $region20: #{resnet_block_forward.15} parent=11 // pred_fallthru
        _
      // Predicated region
      $region21: #{resnet_block_forward.15} parent=11 // pred_check
        %p146 = pneg %p99
      $region22: #{resnet_block_forward.15} parent=11 // pred_check_branch
        %148 = sbr.rel (%p146) target = $region24
      $region23: #{resnet_block_forward.15} parent=11 // pred_region
        _
      $region24: #{resnet_block_forward.15} parent=11 // pred_fallthru
        _
    $region12: #{resnet_block_forward.15} parent=5 // pred_fallthru
      _
    %p149 = scmp.lt.s32.totalorder %s10, 2
    // Predicated region
    $region25: #{resnet_block_forward.15} parent=5 // pred_check
      %p150 = pneg %p149
    $region26: #{resnet_block_forward.15} parent=5 // pred_check_branch
      %152 = sbr.rel (%p150) target = $region28
    $region27: #{resnet_block_forward.15} parent=5 // pred_region
      // Predicated region
      $region29: #{resnet_block_forward.15} parent=27 // pred_check
        %p153 = pneg %p30
      $region30: #{resnet_block_forward.15} parent=27 // pred_check_branch
        %155 = sbr.rel (%p153) target = $region32
      $region31: #{resnet_block_forward.15} parent=27 // pred_region
        %s156 = smul.u32 32, %s10
        %p157 = scmp.lt.s32.totalorder %s156, 63
        %s158 = scalar_select %p157, %s156, 63
        %s159 = smul.addr %s158, 4
        %s160 = scalar_lea.vmem %s0, %s159
        %s161 = smul.u32 32, %s10
      $region32: #{resnet_block_forward.15} parent=27 // pred_fallthru
        _
    $region28: #{resnet_block_forward.15} parent=5 // pred_fallthru
      _
    %p162 = scmp.le.s32.totalorder 1, %s10
    %p163 = scmp.lt.s32.totalorder %s10, 3
    %p164 = pnand %p162, %p163
    %p165 = pneg %p164
    // Predicated region
    $region33: #{resnet_block_forward.15} parent=5 // pred_check
      _
    $region34: #{resnet_block_forward.15} parent=5 // pred_check_branch
      %167 = sbr.rel (%p164) target = $region36
    $region35: #{resnet_block_forward.15} parent=5 // pred_region
      %s168 = ssub.s32 %s10, 1
      %s169 = smul.u32 32, %s15
      %p170 = scmp.lt.s32.totalorder %s169, 63
      %s171 = scalar_select %p170, %s169, 63
      %s172 = smul.addr %s171, 4
      %s173 = scalar_lea.vmem %s0, %s172
      %p174 = pneg %p36
      %p175 = pneg %p33
      %p176 = pneg %p57
      %p177 = pneg %p54
      %p178 = pneg %p78
      %p179 = pneg %p75
      %p180 = pneg %p99
      %p181 = pneg %p96
      %p182 = pneg %p125
      %p183 = pneg %p122
      %s184 = smul.u32 32, %s15
      %p185 = scmp.lt.s32.totalorder %s184, 63
      %s186 = scalar_select %p185, %s184, 63
      %s187 = smul.addr %s186, 8
      %s188 = scalar_lea.vmem %s4, %s187
      %s189 = smul.u32 32, %s15
      %p190 = scmp.lt.s32.totalorder %s189, 63
      %s191 = scalar_select %p190, %s189, 63
      %s192 = smul.addr %s191, 4
      %s193 = scalar_lea.vmem %s0, %s192
      %s194 = smul.u32 32, %s15
      %s195 = smul.u32 32, %s15
      %p196 = scmp.lt.s32.totalorder %s195, 63
      %s197 = scalar_select %p196, %s195, 63
      %s198 = smul.addr %s197, 8
      %s199 = scalar_lea.vmem %s4, %s198
      %s200 = smul.u32 32, %s15
      %v202 = vld [vmem:[%s193] sm:$0xf]
      %v203 = vld [vmem:[%s193 + $0x4] sm:$0xf]
      %v204 = vld [vmem:[%s193 + $0x8] sm:$0xf]
      %v205 = vld [vmem:[%s193 + $0xc] sm:$0xf]
      %v206 = vld [vmem:[%s193 + $0x10] sm:$0xf]
      %v207 = vld [vmem:[%s193 + $0x14] sm:$0xf]
      %v208 = vld [vmem:[%s193 + $0x18] sm:$0xf]
      %v209 = vld [vmem:[%s193 + $0x1c] sm:$0xf]
      %v210 = vld [vmem:[%s193 + $0x20] sm:$0xf]
      %v211 = vld [vmem:[%s193 + $0x24] sm:$0xf]
      %v212 = vld [vmem:[%s193 + $0x28] sm:$0xf]
      %v213 = vld [vmem:[%s193 + $0x2c] sm:$0xf]
      %v214 = vld [vmem:[%s193 + $0x30] sm:$0xf]
      %v215 = vld [vmem:[%s193 + $0x34] sm:$0xf]
      %v216 = vld [vmem:[%s193 + $0x38] sm:$0xf]
      %v217 = vld [vmem:[%s193 + $0x3c] sm:$0xf]
      %v218 = vld [vmem:[%s193 + $0x40] sm:$0xf]
      %v219 = vld [vmem:[%s193 + $0x44] sm:$0xf]
      %v220 = vld [vmem:[%s193 + $0x48] sm:$0xf]
      %v221 = vld [vmem:[%s193 + $0x4c] sm:$0xf]
      %v222 = vld [vmem:[%s193 + $0x50] sm:$0xf]
      %v223 = vld [vmem:[%s193 + $0x54] sm:$0xf]
      %v224 = vld [vmem:[%s193 + $0x58] sm:$0xf]
      %v225 = vld [vmem:[%s193 + $0x5c] sm:$0xf]
      %v226 = vld [vmem:[%s193 + $0x60] sm:$0xf]
      %v227 = vld [vmem:[%s193 + $0x64] sm:$0xf]
      %v228 = vld [vmem:[%s193 + $0x68] sm:$0xf]
      %v229 = vld [vmem:[%s193 + $0x6c] sm:$0xf]
      %v230 = vld [vmem:[%s193 + $0x70] sm:$0xf]
      %v231 = vld [vmem:[%s193 + $0x74] sm:$0xf]
      %v232 = vld [vmem:[%s193 + $0x78] sm:$0xf]
      %v233 = vld [vmem:[%s193 + $0x7c] sm:$0xf]
      %v234 = vld [vmem:[%s1] sm:$0xf]
      %v235 = vld [vmem:[%s1 + $0x4] sm:$0xf]
      %v236 = vld [vmem:[%s1 + $0x8] sm:$0xf]
      %v237 = vld [vmem:[%s1 + $0xc] sm:$0xf]
      %v238 = vld [vmem:[%s1 + $0x10] sm:$0xf]
      %v239 = vld [vmem:[%s1 + $0x14] sm:$0xf]
      %v240 = vld [vmem:[%s1 + $0x18] sm:$0xf]
      %v241 = vld [vmem:[%s1 + $0x1c] sm:$0xf]
      %v242 = vld [vmem:[%s1 + $0x20] sm:$0xf]
      %v275 = vunpack.c.l.b16 %v202
      %v276 = vunpack.c.l.b16 %v203
      %v277 = vunpack.c.l.b16 %v204
      %v278 = vunpack.c.l.b16 %v205
      %v279 = vunpack.c.l.b16 %v206
      %v280 = vunpack.c.l.b16 %v207
      %v281 = vunpack.c.l.b16 %v208
      %v282 = vunpack.c.l.b16 %v209
      %v283 = vunpack.c.l.b16 %v210
      %v284 = vunpack.c.l.b16 %v211
      %v285 = vunpack.c.l.b16 %v212
      %v286 = vunpack.c.l.b16 %v213
      %v287 = vunpack.c.l.b16 %v214
      %v288 = vunpack.c.l.b16 %v215
      %v289 = vunpack.c.l.b16 %v216
      %v290 = vunpack.c.l.b16 %v217
      %v291 = vunpack.c.l.b16 %v218
      %v292 = vunpack.c.l.b16 %v219
      %v293 = vunpack.c.l.b16 %v220
      %v294 = vunpack.c.l.b16 %v221
      %v295 = vunpack.c.l.b16 %v222
      %v296 = vunpack.c.l.b16 %v223
      %v297 = vunpack.c.l.b16 %v224
      %v298 = vunpack.c.l.b16 %v225
      %v299 = vunpack.c.l.b16 %v226
      %v300 = vunpack.c.l.b16 %v227
      %v301 = vunpack.c.l.b16 %v228
      %v302 = vunpack.c.l.b16 %v229
      %v303 = vunpack.c.l.b16 %v230
      %v304 = vunpack.c.l.b16 %v231
      %v305 = vunpack.c.l.b16 %v232
      %v306 = vunpack.c.l.b16 %v233
      %v307 = vpack.c.b16 %v276, %v275
      %v308 = vpack.c.b16 %v278, %v277
      %v309 = vpack.c.b16 %v280, %v279
      %v310 = vpack.c.b16 %v282, %v281
      %v311 = vpack.c.b16 %v284, %v283
      %v312 = vpack.c.b16 %v286, %v285
      %v313 = vpack.c.b16 %v288, %v287
      %v314 = vpack.c.b16 %v290, %v289
      %v315 = vpack.c.b16 %v292, %v291
      %v316 = vpack.c.b16 %v294, %v293
      %v317 = vpack.c.b16 %v296, %v295
      %v318 = vpack.c.b16 %v298, %v297
      %v319 = vpack.c.b16 %v300, %v299
      %v320 = vpack.c.b16 %v302, %v301
      %v321 = vpack.c.b16 %v304, %v303
      %v322 = vpack.c.b16 %v306, %v305
      %v332 = vunpack.c.l.b16 %v234
      %v333 = vunpack.c.l.b16 %v235
      %v334 = vunpack.c.l.b16 %v236
      %v335 = vunpack.c.l.b16 %v237
      %v336 = vunpack.c.l.b16 %v238
      %v337 = vunpack.c.l.b16 %v239
      %v338 = vunpack.c.l.b16 %v240
      %v339 = vunpack.c.l.b16 %v241
      %v340 = vunpack.c.l.b16 %v242
      %v341 = vpack.c.b16 %v333, %v332
      %v342 = vpack.c.b16 %v335, %v334
      %v343 = vpack.c.b16 %v337, %v336
      %v344 = vpack.c.b16 %v339, %v338
      %v345 = vpack.c.b16 %v340, %v340
      %vm350 = vcmask 588800
      %v352 = vsel %vm350, %v307, 0
      %v355 = vsel %vm350, %v308, 0
      %v358 = vsel %vm350, %v309, 0
      %v361 = vsel %vm350, %v310, 0
      %v364 = vsel %vm350, %v311, 0
      %v367 = vsel %vm350, %v312, 0
      %v370 = vsel %vm350, %v313, 0
      %v373 = vsel %vm350, %v314, 0
      %v376 = vsel %vm350, %v315, 0
      %v379 = vsel %vm350, %v316, 0
      %v382 = vsel %vm350, %v317, 0
      %v385 = vsel %vm350, %v318, 0
      %v388 = vsel %vm350, %v319, 0
      %v391 = vsel %vm350, %v320, 0
      %v394 = vsel %vm350, %v321, 0
      %v397 = vsel %vm350, %v322, 0
      %vm399 = vcmask 1043456
      %v401 = vsel %vm399, %v345, 0
      %403 = vmatpush.bf16.msra.mxu0 0
      %404 = vmatpush.bf16.msra.mxu0 0
      %405 = vmatpush.bf16.msra.mxu0 0
      %406 = vmatpush.bf16.msra.mxu0 %v401
      %407 = vmatpush.bf16.msra.mxu0 %v344
      %408 = vmatpush.bf16.msra.mxu0 %v343
      %409 = vmatpush.bf16.msra.mxu0 %v342
      %410 = vmatpush.bf16.msra.mxu0 %v341
      %411 = vmatmul.bf16.gmra.mxu0 %v352
      %v412 = vpop.f32.mrf.mxu0
      %v413 = vadd.f32 0.0, %v412
      %v414 = vpop.f32.mrf.mxu0
      %v415 = vadd.f32 0.0, %v414
      %416 = vmatmul.bf16.gmra.mxu0 %v355
      %v417 = vpop.f32.mrf.mxu0
      %v418 = vadd.f32 0.0, %v417
      %v419 = vpop.f32.mrf.mxu0
      %v420 = vadd.f32 0.0, %v419
      %421 = vmatmul.bf16.gmra.mxu0 %v358
      %v422 = vpop.f32.mrf.mxu0
      %v423 = vadd.f32 0.0, %v422
      %v424 = vpop.f32.mrf.mxu0
      %v425 = vadd.f32 0.0, %v424
      %426 = vmatmul.bf16.gmra.mxu0 %v361
      %v427 = vpop.f32.mrf.mxu0
      %v428 = vadd.f32 0.0, %v427
      %v429 = vpop.f32.mrf.mxu0
      %v430 = vadd.f32 0.0, %v429
      %431 = vmatmul.bf16.gmra.mxu0 %v364
      %v432 = vpop.f32.mrf.mxu0
      %v433 = vadd.f32 0.0, %v432
      %v434 = vpop.f32.mrf.mxu0
      %v435 = vadd.f32 0.0, %v434
      %436 = vmatmul.bf16.gmra.mxu0 %v367
      %v437 = vpop.f32.mrf.mxu0
      %v438 = vadd.f32 0.0, %v437
      %v439 = vpop.f32.mrf.mxu0
      %v440 = vadd.f32 0.0, %v439
      %441 = vmatmul.bf16.gmra.mxu0 %v370
      %v442 = vpop.f32.mrf.mxu0
      %v443 = vadd.f32 0.0, %v442
      %v444 = vpop.f32.mrf.mxu0
      %v445 = vadd.f32 0.0, %v444
      %446 = vmatmul.bf16.gmra.mxu0 %v373
      %v447 = vpop.f32.mrf.mxu0
      %v448 = vadd.f32 0.0, %v447
      %v449 = vpop.f32.mrf.mxu0
      %v450 = vadd.f32 0.0, %v449
      %451 = vmatmul.bf16.gmra.mxu0 %v376
      %v452 = vpop.f32.mrf.mxu0
      %v453 = vadd.f32 0.0, %v452
      %v454 = vpop.f32.mrf.mxu0
      %v455 = vadd.f32 0.0, %v454
      %456 = vmatmul.bf16.gmra.mxu0 %v379
      %v457 = vpop.f32.mrf.mxu0
      %v458 = vadd.f32 0.0, %v457
      %v459 = vpop.f32.mrf.mxu0
      %v460 = vadd.f32 0.0, %v459
      %461 = vmatmul.bf16.gmra.mxu0 %v382
      %v462 = vpop.f32.mrf.mxu0
      %v463 = vadd.f32 0.0, %v462
      %v464 = vpop.f32.mrf.mxu0
      %v465 = vadd.f32 0.0, %v464
      %466 = vmatmul.bf16.gmra.mxu0 %v385
      %v467 = vpop.f32.mrf.mxu0
      %v468 = vadd.f32 0.0, %v467
      %v469 = vpop.f32.mrf.mxu0
      %v470 = vadd.f32 0.0, %v469
      %471 = vmatmul.bf16.gmra.mxu0 %v388
      %v472 = vpop.f32.mrf.mxu0
      %v473 = vadd.f32 0.0, %v472
      %v474 = vpop.f32.mrf.mxu0
      %v475 = vadd.f32 0.0, %v474
      %476 = vmatmul.bf16.gmra.mxu0 %v391
      %v477 = vpop.f32.mrf.mxu0
      %v478 = vadd.f32 0.0, %v477
      %v479 = vpop.f32.mrf.mxu0
      %v480 = vadd.f32 0.0, %v479
      %481 = vmatmul.bf16.gmra.mxu0 %v394
      %v482 = vpop.f32.mrf.mxu0
      %v483 = vadd.f32 0.0, %v482
      %v484 = vpop.f32.mrf.mxu0
      %v485 = vadd.f32 0.0, %v484
      %486 = vmatmul.bf16.gmra.mxu0 %v397
      %v487 = vpop.f32.mrf.mxu0
      %v488 = vadd.f32 0.0, %v487
      %v489 = vpop.f32.mrf.mxu0
      %v490 = vadd.f32 0.0, %v489
      %491 = vdwg.mxu0
      %v492 = vld [vmem:[%s2] sm:$0x1]
      %v494 = vperm.slane %v492, 0
      %v496 = vmul.f32 %v413, %v494
      %v497 = vmul.f32 %v415, %v494
      %v498 = vmul.f32 %v418, %v494
      %v499 = vmul.f32 %v420, %v494
      %v500 = vmul.f32 %v423, %v494
      %v501 = vmul.f32 %v425, %v494
      %v502 = vmul.f32 %v428, %v494
      %v503 = vmul.f32 %v430, %v494
      %v504 = vmul.f32 %v433, %v494
      %v505 = vmul.f32 %v435, %v494
      %v506 = vmul.f32 %v438, %v494
      %v507 = vmul.f32 %v440, %v494
      %v508 = vmul.f32 %v443, %v494
      %v509 = vmul.f32 %v445, %v494
      %v510 = vmul.f32 %v448, %v494
      %v511 = vmul.f32 %v450, %v494
      %v512 = vmul.f32 %v453, %v494
      %v513 = vmul.f32 %v455, %v494
      %v514 = vmul.f32 %v458, %v494
      %v515 = vmul.f32 %v460, %v494
      %v516 = vmul.f32 %v463, %v494
      %v517 = vmul.f32 %v465, %v494
      %v518 = vmul.f32 %v468, %v494
      %v519 = vmul.f32 %v470, %v494
      %v520 = vmul.f32 %v473, %v494
      %v521 = vmul.f32 %v475, %v494
      %v522 = vmul.f32 %v478, %v494
      %v523 = vmul.f32 %v480, %v494
      %v524 = vmul.f32 %v483, %v494
      %v525 = vmul.f32 %v485, %v494
      %v526 = vmul.f32 %v488, %v494
      %v527 = vmul.f32 %v490, %v494
      %v528 = vld [vmem:[%s3] sm:$0x1]
      %v530 = vperm.slane %v528, 0
      %v532 = vadd.f32 %v496, %v530
      %v533 = vadd.f32 %v497, %v530
      %v534 = vadd.f32 %v498, %v530
      %v535 = vadd.f32 %v499, %v530
      %v536 = vadd.f32 %v500, %v530
      %v537 = vadd.f32 %v501, %v530
      %v538 = vadd.f32 %v502, %v530
      %v539 = vadd.f32 %v503, %v530
      %v540 = vadd.f32 %v504, %v530
      %v541 = vadd.f32 %v505, %v530
      %v542 = vadd.f32 %v506, %v530
      %v543 = vadd.f32 %v507, %v530
      %v544 = vadd.f32 %v508, %v530
      %v545 = vadd.f32 %v509, %v530
      %v546 = vadd.f32 %v510, %v530
      %v547 = vadd.f32 %v511, %v530
      %v548 = vadd.f32 %v512, %v530
      %v549 = vadd.f32 %v513, %v530
      %v550 = vadd.f32 %v514, %v530
      %v551 = vadd.f32 %v515, %v530
      %v552 = vadd.f32 %v516, %v530
      %v553 = vadd.f32 %v517, %v530
      %v554 = vadd.f32 %v518, %v530
      %v555 = vadd.f32 %v519, %v530
      %v556 = vadd.f32 %v520, %v530
      %v557 = vadd.f32 %v521, %v530
      %v558 = vadd.f32 %v522, %v530
      %v559 = vadd.f32 %v523, %v530
      %v560 = vadd.f32 %v524, %v530
      %v561 = vadd.f32 %v525, %v530
      %v562 = vadd.f32 %v526, %v530
      %v563 = vadd.f32 %v527, %v530
      %vm564 = vcmask 64512
      %565 = vst.msk [vmem:[%s199] sm:$0xff] %vm564, %v532
      %566 = vst.msk [vmem:[%s199 + $0x8] sm:$0xff] %vm564, %v533
      %567 = vst.msk [vmem:[%s199 + $0x10] sm:$0xff] %vm564, %v534
      %568 = vst.msk [vmem:[%s199 + $0x18] sm:$0xff] %vm564, %v535
      %569 = vst.msk [vmem:[%s199 + $0x20] sm:$0xff] %vm564, %v536
      %570 = vst.msk [vmem:[%s199 + $0x28] sm:$0xff] %vm564, %v537
      %571 = vst.msk [vmem:[%s199 + $0x30] sm:$0xff] %vm564, %v538
      %572 = vst.msk [vmem:[%s199 + $0x38] sm:$0xff] %vm564, %v539
      %573 = vst.msk [vmem:[%s199 + $0x40] sm:$0xff] %vm564, %v540
      %574 = vst.msk [vmem:[%s199 + $0x48] sm:$0xff] %vm564, %v541
      %575 = vst.msk [vmem:[%s199 + $0x50] sm:$0xff] %vm564, %v542
      %576 = vst.msk [vmem:[%s199 + $0x58] sm:$0xff] %vm564, %v543
      %577 = vst.msk [vmem:[%s199 + $0x60] sm:$0xff] %vm564, %v544
      %578 = vst.msk [vmem:[%s199 + $0x68] sm:$0xff] %vm564, %v545
      %579 = vst.msk [vmem:[%s199 + $0x70] sm:$0xff] %vm564, %v546
      %580 = vst.msk [vmem:[%s199 + $0x78] sm:$0xff] %vm564, %v547
      %581 = vst.msk [vmem:[%s199 + $0x80] sm:$0xff] %vm564, %v548
      %582 = vst.msk [vmem:[%s199 + $0x88] sm:$0xff] %vm564, %v549
      %583 = vst.msk [vmem:[%s199 + $0x90] sm:$0xff] %vm564, %v550
      %584 = vst.msk [vmem:[%s199 + $0x98] sm:$0xff] %vm564, %v551
      %585 = vst.msk [vmem:[%s199 + $0xa0] sm:$0xff] %vm564, %v552
      %586 = vst.msk [vmem:[%s199 + $0xa8] sm:$0xff] %vm564, %v553
      %587 = vst.msk [vmem:[%s199 + $0xb0] sm:$0xff] %vm564, %v554
      %588 = vst.msk [vmem:[%s199 + $0xb8] sm:$0xff] %vm564, %v555
      %589 = vst.msk [vmem:[%s199 + $0xc0] sm:$0xff] %vm564, %v556
      %590 = vst.msk [vmem:[%s199 + $0xc8] sm:$0xff] %vm564, %v557
      %591 = vst.msk [vmem:[%s199 + $0xd0] sm:$0xff] %vm564, %v558
      %592 = vst.msk [vmem:[%s199 + $0xd8] sm:$0xff] %vm564, %v559
      %593 = vst.msk [vmem:[%s199 + $0xe0] sm:$0xff] %vm564, %v560
      %594 = vst.msk [vmem:[%s199 + $0xe8] sm:$0xff] %vm564, %v561
      %595 = vst.msk [vmem:[%s199 + $0xf0] sm:$0xff] %vm564, %v562
      %596 = vst.msk [vmem:[%s199 + $0xf8] sm:$0xff] %vm564, %v563
      %s597 = smul.u32 32, %s15
      %p598 = scmp.lt.s32.totalorder %s597, 63
      %s599 = scalar_select %p598, %s597, 63
      %s600 = smul.addr %s599, 8
      %s601 = scalar_lea.vmem %s4, %s600
      // Predicated region
      $region37: #{resnet_block_forward.15} parent=35 // pred_check
        %p602 = pneg %p122
      $region38: #{resnet_block_forward.15} parent=35 // pred_check_branch
        %604 = sbr.rel (%p602) target = $region40
      $region39: #{resnet_block_forward.15} parent=35 // pred_region
        %s605 = smul.u32 32, %s15
      $region40: #{resnet_block_forward.15} parent=35 // pred_fallthru
        _
    $region36: #{resnet_block_forward.15} parent=5 // pred_fallthru
      _
    %p606 = scmp.le.s32.totalorder 2, %s10
    // Predicated region
    $region41: #{resnet_block_forward.15} parent=5 // pred_check
      %p607 = pneg %p606
    $region42: #{resnet_block_forward.15} parent=5 // pred_check_branch
      %609 = sbr.rel (%p607) target = $region44
    $region43: #{resnet_block_forward.15} parent=5 // pred_region
      %s610 = ssub.s32 %s10, 2
      // Predicated region
      $region45: #{resnet_block_forward.15} parent=43 // pred_check
        %p611 = pneg %p128
      $region46: #{resnet_block_forward.15} parent=43 // pred_check_branch
        %613 = sbr.rel (%p611) target = $region48
      $region47: #{resnet_block_forward.15} parent=43 // pred_region
        %s614 = smul.u32 32, %s16
        %p615 = scmp.lt.s32.totalorder %s614, 63
        %s616 = scalar_select %p615, %s614, 63
        %s617 = smul.addr %s616, 8
        %s618 = scalar_lea.vmem %s4, %s617
      $region48: #{resnet_block_forward.15} parent=43 // pred_fallthru
        _
    $region44: #{resnet_block_forward.15} parent=5 // pred_fallthru
      _
  $region6: #{resnet_block_forward.15} parent=0 // loop_footer
    %s14 = sadd.s32 1, %s10
  $region7: #{resnet_block_forward.15} parent=0 // loop_footer_branch
    %9 = sbr.rel target = $region3
  $region8: #{resnet_block_forward.15} parent=0 // loop_exit
    _

// kernel: resnet_block_forward.24
$region0: #{resnet_block_forward.24}
  #allocation0 [shape = 'u32[]', space=smem, size = 0x4, offset = 0x4, fixed_abs, tag = 'smem constant byte address 0x4 - core index']
  #allocation1 [shape = 'u32[72,128]{1,0:T(1,128)}', space=vmem, size = 0x9000, scoped, tag = 'internal scratch']
  %s0 = inlined_call_operand.vmem [shape: f32[2,1,8], index: 0, kind: input, shape index: {}]
  %s1 = inlined_call_operand.vmem [shape: f32[8,1], index: 1, kind: input, shape index: {}]
  %s2 = inlined_call_operand.vmem [shape: f32[1,8], index: 2, kind: input, shape index: {}]
  %s3 = inlined_call_operand.vmem [shape: f32[2,1,8], index: 3, kind: output, shape index: {}]
  %s4 = sld [smem:[#allocation0]]
  $region22: #{resnet_block_forward.24} parent=0
    _
  %s6 = ssub.s32 1, %s4
  %s7 = scalar_select 0, %s6, %s4
  // Predicated region
  $region2: #{resnet_block_forward.24} parent=0 // pred_check
    _
  $region3: #{resnet_block_forward.24} parent=0 // pred_check_branch
    %9 = sbr.rel (0) target = $region5
  $region4: #{resnet_block_forward.24} parent=0 // pred_region
    _
  $region5: #{resnet_block_forward.24} parent=0 // pred_fallthru
    _
  // Predicated region
  $region6: #{resnet_block_forward.24} parent=0 // pred_check
    _
  $region7: #{resnet_block_forward.24} parent=0 // pred_check_branch
    %11 = sbr.rel (0) target = $region9
  $region8: #{resnet_block_forward.24} parent=0 // pred_region
    _
  $region9: #{resnet_block_forward.24} parent=0 // pred_fallthru
    _
  // Predicated region
  $region10: #{resnet_block_forward.24} parent=0 // pred_check
    _
  $region11: #{resnet_block_forward.24} parent=0 // pred_check_branch
    %13 = sbr.rel (0) target = $region13
  $region12: #{resnet_block_forward.24} parent=0 // pred_region
    _
  $region13: #{resnet_block_forward.24} parent=0 // pred_fallthru
    _
  %v14 = vld [vmem:[%s0] sm:$0x1]
  %v15 = vld [vmem:[%s0 + $0x1] sm:$0x1]
  %v16 = vld [vmem:[%s1] sm:$0xff]
  %19 = vst [vmem:[#allocation1] ss:$9 sm:$0xff] %v14
  %s20 = scalar_lea.vmem [#allocation1], 1
  %21 = vst [vmem:[%s20] ss:$9 sm:$0xff] %v15
  %v22 = vld [vmem:[#allocation1] sm:$0xff]
  %vm23 = vcmask 64512
  %v24 = vsel %vm23, %v22, 0
  %26 = vmatpush.msra.mxu0 0.0
  %27 = vmatpush.msra.mxu0 0.0
  %28 = vmatpush.msra.mxu0 0.0
  %29 = vmatpush.msra.mxu0 0.0
  %30 = vmatpush.msra.mxu0 0.0
  %31 = vmatpush.msra.mxu0 0.0
  %32 = vmatpush.msra.mxu0 0.0
  %33 = vmatpush.msra.mxu0 0.0
  %34 = vmatpush.msra.mxu0 0.0
  %35 = vmatpush.msra.mxu0 0.0
  %36 = vmatpush.msra.mxu0 0.0
  %37 = vmatpush.msra.mxu0 0.0
  %38 = vmatpush.msra.mxu0 0.0
  %39 = vmatpush.msra.mxu0 0.0
  %40 = vmatpush.msra.mxu0 0.0
  %41 = vmatpush.msra.mxu0 %v16
  %42 = vmatmul.f32.gmra.mxu0 %v24
  %v43 = vpop.f32.mrf.mxu0
  %v44 = vadd.f32 0.0, %v43
  %45 = vdwg.mxu0
  %v46 = vmax.f32 %v44, 0.0
  %v47 = vld [vmem:[%s2] sm:$0x1]
  %vm48 = vcmask 7168
  %v50 = vsel %vm48, %v46, 0
  %vm52 = vcmask 1040384
  %v54 = vsel %vm52, %v47, 0
  %56 = vmatpush.msra.mxu0 0.0
  %57 = vmatpush.msra.mxu0 0.0
  %58 = vmatpush.msra.mxu0 0.0
  %59 = vmatpush.msra.mxu0 0.0
  %60 = vmatpush.msra.mxu0 0.0
  %61 = vmatpush.msra.mxu0 0.0
  %62 = vmatpush.msra.mxu0 0.0
  %63 = vmatpush.msra.mxu0 0.0
  %64 = vmatpush.msra.mxu0 0.0
  %65 = vmatpush.msra.mxu0 0.0
  %66 = vmatpush.msra.mxu0 0.0
  %67 = vmatpush.msra.mxu0 0.0
  %68 = vmatpush.msra.mxu0 0.0
  %69 = vmatpush.msra.mxu0 0.0
  %70 = vmatpush.msra.mxu0 0.0
  %71 = vmatpush.msra.mxu0 %v54
  %72 = vmatmul.f32.gmra.mxu0 %v50
  %v73 = vpop.f32.mrf.mxu0
  %v74 = vadd.f32 0.0, %v73
  %75 = vdwg.mxu0
  %v76 = vsub.f32 0.0, %v74
  %v77 = vmul.f32 %v76, 1.442695
  %v78 = vpow.pop %v77
  %v79 = vadd.f32 %v78, 1.0
  %v80 = vrcp.pop %v79
  %v82 = vrot.slane %v80, 1
  %vm84 = vcmask 57344
  %85 = vst.msk [vmem:[%s3] sm:$0x1] %vm84, %v80
  %86 = vst.msk [vmem:[%s3 + $0x1] sm:$0x1] %vm84, %v82
  // Predicated region
  $region14: #{resnet_block_forward.24} parent=0 // pred_check
    _
  $region15: #{resnet_block_forward.24} parent=0 // pred_check_branch
    %88 = sbr.rel (0) target = $region17
  $region16: #{resnet_block_forward.24} parent=0 // pred_region
    _
  $region17: #{resnet_block_forward.24} parent=0 // pred_fallthru
    _
  // Predicated region
  $region18: #{resnet_block_forward.24} parent=0 // pred_check
    _
  $region19: #{resnet_block_forward.24} parent=0 // pred_check_branch
    %90 = sbr.rel (0) target = $region21
  $region20: #{resnet_block_forward.24} parent=0 // pred_region
    _
  $region21: #{resnet_block_forward.24} parent=0 // pred_fallthru
    _

// kernel: resnet_block_forward.25
$region0: #{resnet_block_forward.25}
  #allocation0 [shape = 'u32[]', space=smem, size = 0x4, offset = 0x4, fixed_abs, tag = 'smem constant byte address 0x4 - core index']
  #allocation1 [shape = 'u32[72,128]{1,0:T(1,128)}', space=vmem, size = 0x9000, scoped, tag = 'internal scratch']
  %s0 = inlined_call_operand.vmem [shape: f32[2,16,16,8], index: 0, kind: input, shape index: {}]
  %s1 = inlined_call_operand.vmem [shape: f32[2,16,16,8], index: 1, kind: input, shape index: {}]
  %s2 = inlined_call_operand.vmem [shape: f32[2,1,8], index: 2, kind: input, shape index: {}]
  %s3 = inlined_call_operand.vmem [shape: f32[2,16,16,8], index: 3, kind: output, shape index: {}]
  %s4 = sld [smem:[#allocation0]]
  $region45: #{resnet_block_forward.25} parent=0
    _
  %s6 = ssub.s32 1, %s4
  %s7 = scalar_select 0, %s6, %s4
  loop: start=0, step=1, limit=6
  $region2: #{resnet_block_forward.25} parent=0 // loop_pre_header
    _
  $region3: #{resnet_block_forward.25} parent=0 // loop_header
    %s9 = sphi 0, %s13
    %p10 = scmp.ge.s32.totalorder %s9, 6
    %s16 = sphi 0, %s28
    %s17 = sphi 0, %s24
    %s18 = sphi 0, %s16
    %s19 = sphi 0, %s17
    %s20 = sphi 0, %s18
    %s21 = sphi 0, %s19
    %s33 = sphi 0, %s35
    %s36 = sphi 0, %s33
    %s37 = sphi 0, %s36
    %s53 = sphi 0, %s37
    %s61 = sphi 0, %s63
    %s64 = sphi 0, %s61
    %s65 = sphi 0, %s64
    %s81 = sphi 0, %s65
    %s87 = sphi 0, %s89
    %s90 = sphi 0, %s87
    %s91 = sphi 0, %s90
    %s107 = sphi 0, %s91
    %s115 = sphi 0, %s117
    %s118 = sphi 0, %s115
    %s119 = sphi 0, %s118
    %s135 = sphi 0, %s119
  $region4: #{resnet_block_forward.25} parent=0 // loop_header_branch
    %12 = sbr.rel (%p10) target = $region8
  $region5: #{resnet_block_forward.25} parent=0 // loop_body
    %s14 = ssub.s32 %s9, 1
    %s15 = ssub.s32 %s9, 2
    %s22 = sadd.s32 1, %s17
    %p23 = scmp.ge.s32.totalorder %s22, 2
    %s24 = scalar_select %p23, 0, %s22
    %s25 = sadd.s32 1, %s16
    %s26 = scalar_select %p23, %s25, %s16
    %p27 = scmp.ge.s32.totalorder %s26, 2
    %s28 = scalar_select %p27, 0, %s26
    %s29 = ssub.s32 %s16, %s28
    %s30 = ssub.s32 %s17, %s24
    %s31 = sor.u32 %s29, %s30
    %p32 = scmp.eq.s32.totalorder %s31, 0
    %s34 = sadd.s32 %s33, 1
    %s35 = scalar_select %p32, %s33, %s34
    %p38 = pneg %p32
    %p39 = scmp.eq.s32.totalorder %s9, 3
    %p40 = por %p38, %p39
    %p41 = scmp.ne.s32.totalorder %s33, %s36
    %p42 = scmp.eq.s32.totalorder %s9, 0
    %p43 = por %p41, %p42
    %p44 = scmp.ne.s32.totalorder %s33, %s36
    %p45 = scmp.eq.s32.totalorder %s14, 3
    %p46 = por %p44, %p45
    %p47 = scmp.ne.s32.totalorder %s36, %s37
    %p48 = scmp.eq.s32.totalorder %s14, 0
    %p49 = por %p47, %p48
    %p50 = scmp.ne.s32.totalorder %s36, %s37
    %p51 = scmp.eq.s32.totalorder %s15, 3
    %p52 = por %p50, %p51
    %p54 = scmp.ne.s32.totalorder %s37, %s53
    %p55 = scmp.eq.s32.totalorder %s15, 0
    %p56 = por %p54, %p55
    %s57 = ssub.s32 %s16, %s28
    %s58 = ssub.s32 %s17, %s24
    %s59 = sor.u32 %s57, %s58
    %p60 = scmp.eq.s32.totalorder %s59, 0
    %s62 = sadd.s32 %s61, 1
    %s63 = scalar_select %p60, %s61, %s62
    %p66 = pneg %p60
    %p67 = scmp.eq.s32.totalorder %s9, 3
    %p68 = por %p66, %p67
    %p69 = scmp.ne.s32.totalorder %s61, %s64
    %p70 = scmp.eq.s32.totalorder %s9, 0
    %p71 = por %p69, %p70
    %p72 = scmp.ne.s32.totalorder %s61, %s64
    %p73 = scmp.eq.s32.totalorder %s14, 3
    %p74 = por %p72, %p73
    %p75 = scmp.ne.s32.totalorder %s64, %s65
    %p76 = scmp.eq.s32.totalorder %s14, 0
    %p77 = por %p75, %p76
    %p78 = scmp.ne.s32.totalorder %s64, %s65
    %p79 = scmp.eq.s32.totalorder %s15, 3
    %p80 = por %p78, %p79
    %p82 = scmp.ne.s32.totalorder %s65, %s81
    %p83 = scmp.eq.s32.totalorder %s15, 0
    %p84 = por %p82, %p83
    %s85 = ssub.s32 %s16, %s28
    %p86 = scmp.eq.s32.totalorder %s85, 0
    %s88 = sadd.s32 %s87, 1
    %s89 = scalar_select %p86, %s87, %s88
    %p92 = pneg %p86
    %p93 = scmp.eq.s32.totalorder %s9, 3
    %p94 = por %p92, %p93
    %p95 = scmp.ne.s32.totalorder %s87, %s90
    %p96 = scmp.eq.s32.totalorder %s9, 0
    %p97 = por %p95, %p96
    %p98 = scmp.ne.s32.totalorder %s87, %s90
    %p99 = scmp.eq.s32.totalorder %s14, 3
    %p100 = por %p98, %p99
    %p101 = scmp.ne.s32.totalorder %s90, %s91
    %p102 = scmp.eq.s32.totalorder %s14, 0
    %p103 = por %p101, %p102
    %p104 = scmp.ne.s32.totalorder %s90, %s91
    %p105 = scmp.eq.s32.totalorder %s15, 3
    %p106 = por %p104, %p105
    %p108 = scmp.ne.s32.totalorder %s91, %s107
    %p109 = scmp.eq.s32.totalorder %s15, 0
    %p110 = por %p108, %p109
    %s111 = ssub.s32 %s16, %s28
    %s112 = ssub.s32 %s17, %s24
    %s113 = sor.u32 %s111, %s112
    %p114 = scmp.eq.s32.totalorder %s113, 0
    %s116 = sadd.s32 %s115, 1
    %s117 = scalar_select %p114, %s115, %s116
    %p120 = pneg %p114
    %p121 = scmp.eq.s32.totalorder %s9, 3
    %p122 = por %p120, %p121
    %p123 = scmp.ne.s32.totalorder %s115, %s118
    %p124 = scmp.eq.s32.totalorder %s9, 0
    %p125 = por %p123, %p124
    %p126 = scmp.ne.s32.totalorder %s115, %s118
    %p127 = scmp.eq.s32.totalorder %s14, 3
    %p128 = por %p126, %p127
    %p129 = scmp.ne.s32.totalorder %s118, %s119
    %p130 = scmp.eq.s32.totalorder %s14, 0
    %p131 = por %p129, %p130
    %p132 = scmp.ne.s32.totalorder %s118, %s119
    %p133 = scmp.eq.s32.totalorder %s15, 3
    %p134 = por %p132, %p133
    %p136 = scmp.ne.s32.totalorder %s119, %s135
    %p137 = scmp.eq.s32.totalorder %s15, 0
    %p138 = por %p136, %p137
    %p139 = scmp.le.s32.totalorder 1, %s9
    %p140 = scmp.lt.s32.totalorder %s9, 5
    %p141 = pnand %p139, %p140
    %p142 = pneg %p141
    // Predicated region
    $region9: #{resnet_block_forward.25} parent=5 // pred_check
      _
    $region10: #{resnet_block_forward.25} parent=5 // pred_check_branch
      %144 = sbr.rel (%p141) target = $region12
    $region11: #{resnet_block_forward.25} parent=5 // pred_region
      %s145 = ssub.s32 %s9, 1
    $region12: #{resnet_block_forward.25} parent=5 // pred_fallthru
      _
    %p146 = scmp.lt.s32.totalorder %s9, 4
    // Predicated region
    $region13: #{resnet_block_forward.25} parent=5 // pred_check
      %p147 = pneg %p146
    $region14: #{resnet_block_forward.25} parent=5 // pred_check_branch
      %149 = sbr.rel (%p147) target = $region16
    $region15: #{resnet_block_forward.25} parent=5 // pred_region
      // Predicated region
      $region17: #{resnet_block_forward.25} parent=15 // pred_check
        %p150 = pneg %p43
      $region18: #{resnet_block_forward.25} parent=15 // pred_check_branch
        %152 = sbr.rel (%p150) target = $region20
      $region19: #{resnet_block_forward.25} parent=15 // pred_region
        %s153 = smul.u32 8, %s17
        %p154 = scmp.lt.s32.totalorder %s16, 1
        %s155 = scalar_select %p154, %s16, 1
        %p156 = scmp.lt.s32.totalorder %s153, 15
        %s157 = scalar_select %p156, %s153, 15
        %s158 = smul.addr %s157, 2
        %s159 = smul.addr %s155, 32
        %s160 = sadd.s32 %s158, %s159
        %s161 = smul.addr %s160, 8
        %s162 = scalar_lea.vmem %s0, %s161
        %s163 = smul.u32 8, %s17
      $region20: #{resnet_block_forward.25} parent=15 // pred_fallthru
        _
      // Predicated region
      $region21: #{resnet_block_forward.25} parent=15 // pred_check
        %p164 = pneg %p71
      $region22: #{resnet_block_forward.25} parent=15 // pred_check_branch
        %166 = sbr.rel (%p164) target = $region24
      $region23: #{resnet_block_forward.25} parent=15 // pred_region
        %s167 = smul.u32 8, %s17
        %p168 = scmp.lt.s32.totalorder %s16, 1
        %s169 = scalar_select %p168, %s16, 1
        %p170 = scmp.lt.s32.totalorder %s167, 15
        %s171 = scalar_select %p170, %s167, 15
        %s172 = smul.addr %s171, 2
        %s173 = smul.addr %s169, 32
        %s174 = sadd.s32 %s172, %s173
        %s175 = smul.addr %s174, 8
        %s176 = scalar_lea.vmem %s1, %s175
        %s177 = smul.u32 8, %s17
      $region24: #{resnet_block_forward.25} parent=15 // pred_fallthru
        _
      // Predicated region
      $region25: #{resnet_block_forward.25} parent=15 // pred_check
        %p178 = pneg %p97
      $region26: #{resnet_block_forward.25} parent=15 // pred_check_branch
        %180 = sbr.rel (%p178) target = $region28
      $region27: #{resnet_block_forward.25} parent=15 // pred_region
        %p181 = scmp.lt.s32.totalorder %s16, 1
        %s182 = scalar_select %p181, %s16, 1
        %s183 = scalar_lea.vmem %s2, %s182
      $region28: #{resnet_block_forward.25} parent=15 // pred_fallthru
        _
    $region16: #{resnet_block_forward.25} parent=5 // pred_fallthru
      _
    %p184 = scmp.le.s32.totalorder 1, %s9
    %p185 = scmp.lt.s32.totalorder %s9, 5
    %p186 = pnand %p184, %p185
    %p187 = pneg %p186
    // Predicated region
    $region29: #{resnet_block_forward.25} parent=5 // pred_check
      _
    $region30: #{resnet_block_forward.25} parent=5 // pred_check_branch
      %189 = sbr.rel (%p186) target = $region32
    $region31: #{resnet_block_forward.25} parent=5 // pred_region
      %s190 = ssub.s32 %s9, 1
      %s191 = smul.u32 8, %s19
      %p192 = scmp.lt.s32.totalorder %s18, 1
      %s193 = scalar_select %p192, %s18, 1
      %p194 = scmp.lt.s32.totalorder %s191, 15
      %s195 = scalar_select %p194, %s191, 15
      %s196 = smul.addr %s195, 2
      %s197 = smul.addr %s193, 32
      %s198 = sadd.s32 %s196, %s197
      %s199 = smul.addr %s198, 8
      %s200 = scalar_lea.vmem %s0, %s199
      %p201 = pneg %p49
      %p202 = pneg %p46
      %s203 = smul.u32 8, %s19
      %p204 = scmp.lt.s32.totalorder %s18, 1
      %s205 = scalar_select %p204, %s18, 1
      %p206 = scmp.lt.s32.totalorder %s203, 15
      %s207 = scalar_select %p206, %s203, 15
      %s208 = smul.addr %s207, 2
      %s209 = smul.addr %s205, 32
      %s210 = sadd.s32 %s208, %s209
      %s211 = smul.addr %s210, 8
      %s212 = scalar_lea.vmem %s1, %s211
      %p213 = pneg %p77
      %p214 = pneg %p74
      %p215 = scmp.lt.s32.totalorder %s18, 1
      %s216 = scalar_select %p215, %s18, 1
      %s217 = scalar_lea.vmem %s2, %s216
      %p218 = pneg %p103
      %p219 = pneg %p100
      %p220 = pneg %p131
      %p221 = pneg %p128
      %s222 = smul.u32 8, %s19
      %p223 = scmp.lt.s32.totalorder %s18, 1
      %s224 = scalar_select %p223, %s18, 1
      %p225 = scmp.lt.s32.totalorder %s222, 15
      %s226 = scalar_select %p225, %s222, 15
      %s227 = smul.addr %s226, 2
      %s228 = smul.addr %s224, 32
      %s229 = sadd.s32 %s227, %s228
      %s230 = smul.addr %s229, 8
      %s231 = scalar_lea.vmem %s3, %s230
      %s232 = smul.u32 8, %s19
      %p233 = scmp.lt.s32.totalorder %s18, 1
      %s234 = scalar_select %p233, %s18, 1
      %p235 = scmp.lt.s32.totalorder %s232, 15
      %s236 = scalar_select %p235, %s232, 15
      %s237 = smul.addr %s236, 2
      %s238 = smul.addr %s234, 32
      %s239 = sadd.s32 %s237, %s238
      %s240 = smul.addr %s239, 8
      %s241 = scalar_lea.vmem %s0, %s240
      %s242 = smul.u32 8, %s19
      %s243 = smul.u32 8, %s19
      %p244 = scmp.lt.s32.totalorder %s18, 1
      %s245 = scalar_select %p244, %s18, 1
      %p246 = scmp.lt.s32.totalorder %s243, 15
      %s247 = scalar_select %p246, %s243, 15
      %s248 = smul.addr %s247, 2
      %s249 = smul.addr %s245, 32
      %s250 = sadd.s32 %s248, %s249
      %s251 = smul.addr %s250, 8
      %s252 = scalar_lea.vmem %s1, %s251
      %s253 = smul.u32 8, %s19
      %p254 = scmp.lt.s32.totalorder %s18, 1
      %s255 = scalar_select %p254, %s18, 1
      %s256 = scalar_lea.vmem %s2, %s255
      %s257 = smul.u32 8, %s19
      %p258 = scmp.lt.s32.totalorder %s18, 1
      %s259 = scalar_select %p258, %s18, 1
      %p260 = scmp.lt.s32.totalorder %s257, 15
      %s261 = scalar_select %p260, %s257, 15
      %s262 = smul.addr %s261, 2
      %s263 = smul.addr %s259, 32
      %s264 = sadd.s32 %s262, %s263
      %s265 = smul.addr %s264, 8
      %s266 = scalar_lea.vmem %s3, %s265
      %s267 = smul.u32 8, %s19
      %v268 = vld [vmem:[%s241] sm:$0xff]
      %v269 = vld [vmem:[%s241 + $0x8] sm:$0xff]
      %v270 = vld [vmem:[%s241 + $0x10] sm:$0xff]
      %v271 = vld [vmem:[%s241 + $0x18] sm:$0xff]
      %v272 = vld [vmem:[%s241 + $0x20] sm:$0xff]
      %v273 = vld [vmem:[%s241 + $0x28] sm:$0xff]
      %v274 = vld [vmem:[%s241 + $0x30] sm:$0xff]
      %v275 = vld [vmem:[%s241 + $0x38] sm:$0xff]
      %v276 = vld [vmem:[%s241 + $0x40] sm:$0xff]
      %v277 = vld [vmem:[%s241 + $0x48] sm:$0xff]
      %v278 = vld [vmem:[%s241 + $0x50] sm:$0xff]
      %v279 = vld [vmem:[%s241 + $0x58] sm:$0xff]
      %v280 = vld [vmem:[%s241 + $0x60] sm:$0xff]
      %v281 = vld [vmem:[%s241 + $0x68] sm:$0xff]
      %v282 = vld [vmem:[%s241 + $0x70] sm:$0xff]
      %v283 = vld [vmem:[%s241 + $0x78] sm:$0xff]
      %v284 = vld [vmem:[%s252] sm:$0xff]
      %v285 = vld [vmem:[%s252 + $0x8] sm:$0xff]
      %v286 = vld [vmem:[%s252 + $0x10] sm:$0xff]
      %v287 = vld [vmem:[%s252 + $0x18] sm:$0xff]
      %v288 = vld [vmem:[%s252 + $0x20] sm:$0xff]
      %v289 = vld [vmem:[%s252 + $0x28] sm:$0xff]
      %v290 = vld [vmem:[%s252 + $0x30] sm:$0xff]
      %v291 = vld [vmem:[%s252 + $0x38] sm:$0xff]
      %v292 = vld [vmem:[%s252 + $0x40] sm:$0xff]
      %v293 = vld [vmem:[%s252 + $0x48] sm:$0xff]
      %v294 = vld [vmem:[%s252 + $0x50] sm:$0xff]
      %v295 = vld [vmem:[%s252 + $0x58] sm:$0xff]
      %v296 = vld [vmem:[%s252 + $0x60] sm:$0xff]
      %v297 = vld [vmem:[%s252 + $0x68] sm:$0xff]
      %v298 = vld [vmem:[%s252 + $0x70] sm:$0xff]
      %v299 = vld [vmem:[%s252 + $0x78] sm:$0xff]
      %v300 = vadd.f32 %v268, %v284
      %v301 = vadd.f32 %v269, %v285
      %v302 = vadd.f32 %v270, %v286
      %v303 = vadd.f32 %v271, %v287
      %v304 = vadd.f32 %v272, %v288
      %v305 = vadd.f32 %v273, %v289
      %v306 = vadd.f32 %v274, %v290
      %v307 = vadd.f32 %v275, %v291
      %v308 = vadd.f32 %v276, %v292
      %v309 = vadd.f32 %v277, %v293
      %v310 = vadd.f32 %v278, %v294
      %v311 = vadd.f32 %v279, %v295
      %v312 = vadd.f32 %v280, %v296
      %v313 = vadd.f32 %v281, %v297
      %v314 = vadd.f32 %v282, %v298
      %v315 = vadd.f32 %v283, %v299
      %v316 = vld [vmem:[%s256] sm:$0x1]
      %v318 = vperm.slane %v316, 0
      %v320 = vmul.f32 %v300, %v318
      %v321 = vmul.f32 %v301, %v318
      %v322 = vmul.f32 %v302, %v318
      %v323 = vmul.f32 %v303, %v318
      %v324 = vmul.f32 %v304, %v318
      %v325 = vmul.f32 %v305, %v318
      %v326 = vmul.f32 %v306, %v318
      %v327 = vmul.f32 %v307, %v318
      %v328 = vmul.f32 %v308, %v318
      %v329 = vmul.f32 %v309, %v318
      %v330 = vmul.f32 %v310, %v318
      %v331 = vmul.f32 %v311, %v318
      %v332 = vmul.f32 %v312, %v318
      %v333 = vmul.f32 %v313, %v318
      %v334 = vmul.f32 %v314, %v318
      %v335 = vmul.f32 %v315, %v318
      %vm336 = vcmask 64512
      %337 = vst.msk [vmem:[%s266] sm:$0xff] %vm336, %v320
      %338 = vst.msk [vmem:[%s266 + $0x8] sm:$0xff] %vm336, %v321
      %339 = vst.msk [vmem:[%s266 + $0x10] sm:$0xff] %vm336, %v322
      %340 = vst.msk [vmem:[%s266 + $0x18] sm:$0xff] %vm336, %v323
      %341 = vst.msk [vmem:[%s266 + $0x20] sm:$0xff] %vm336, %v324
      %342 = vst.msk [vmem:[%s266 + $0x28] sm:$0xff] %vm336, %v325
      %343 = vst.msk [vmem:[%s266 + $0x30] sm:$0xff] %vm336, %v326
      %344 = vst.msk [vmem:[%s266 + $0x38] sm:$0xff] %vm336, %v327
      %345 = vst.msk [vmem:[%s266 + $0x40] sm:$0xff] %vm336, %v328
      %346 = vst.msk [vmem:[%s266 + $0x48] sm:$0xff] %vm336, %v329
      %347 = vst.msk [vmem:[%s266 + $0x50] sm:$0xff] %vm336, %v330
      %348 = vst.msk [vmem:[%s266 + $0x58] sm:$0xff] %vm336, %v331
      %349 = vst.msk [vmem:[%s266 + $0x60] sm:$0xff] %vm336, %v332
      %350 = vst.msk [vmem:[%s266 + $0x68] sm:$0xff] %vm336, %v333
      %351 = vst.msk [vmem:[%s266 + $0x70] sm:$0xff] %vm336, %v334
      %352 = vst.msk [vmem:[%s266 + $0x78] sm:$0xff] %vm336, %v335
      %s353 = smul.u32 8, %s19
      %p354 = scmp.lt.s32.totalorder %s18, 1
      %s355 = scalar_select %p354, %s18, 1
      %p356 = scmp.lt.s32.totalorder %s353, 15
      %s357 = scalar_select %p356, %s353, 15
      %s358 = smul.addr %s357, 2
      %s359 = smul.addr %s355, 32
      %s360 = sadd.s32 %s358, %s359
      %s361 = smul.addr %s360, 8
      %s362 = scalar_lea.vmem %s3, %s361
      // Predicated region
      $region33: #{resnet_block_forward.25} parent=31 // pred_check
        %p363 = pneg %p128
      $region34: #{resnet_block_forward.25} parent=31 // pred_check_branch
        %365 = sbr.rel (%p363) target = $region36
      $region35: #{resnet_block_forward.25} parent=31 // pred_region
        %s366 = smul.u32 8, %s19
      $region36: #{resnet_block_forward.25} parent=31 // pred_fallthru
        _
    $region32: #{resnet_block_forward.25} parent=5 // pred_fallthru
      _
    %p367 = scmp.le.s32.totalorder 2, %s9
    // Predicated region
    $region37: #{resnet_block_forward.25} parent=5 // pred_check
      %p368 = pneg %p367
    $region38: #{resnet_block_forward.25} parent=5 // pred_check_branch
      %370 = sbr.rel (%p368) target = $region40
    $region39: #{resnet_block_forward.25} parent=5 // pred_region
      %s371 = ssub.s32 %s9, 2
      // Predicated region
      $region41: #{resnet_block_forward.25} parent=39 // pred_check
        %p372 = pneg %p134
      $region42: #{resnet_block_forward.25} parent=39 // pred_check_branch
        %374 = sbr.rel (%p372) target = $region44
      $region43: #{resnet_block_forward.25} parent=39 // pred_region
        %s375 = smul.u32 8, %s21
        %p376 = scmp.lt.s32.totalorder %s20, 1
        %s377 = scalar_select %p376, %s20, 1
        %p378 = scmp.lt.s32.totalorder %s375, 15
        %s379 = scalar_select %p378, %s375, 15
        %s380 = smul.addr %s379, 2
        %s381 = smul.addr %s377, 32
        %s382 = sadd.s32 %s380, %s381
        %s383 = smul.addr %s382, 8
        %s384 = scalar_lea.vmem %s3, %s383
      $region44: #{resnet_block_forward.25} parent=39 // pred_fallthru
        _
    $region40: #{resnet_block_forward.25} parent=5 // pred_fallthru
      _
  $region6: #{resnet_block_forward.25} parent=0 // loop_footer
    %s13 = sadd.s32 1, %s9
  $region7: #{resnet_block_forward.25} parent=0 // loop_footer_branch
    %8 = sbr.rel target = $region3
  $region8: #{resnet_block_forward.25} parent=0 // loop_exit
    _

</llo_original>
